<compile_context>
chip_gen: v6e
topology: v6e:2x2x1
jax: 0.10.0
libtpu: 0.0.40
codegen_flags: <defaults>
</compile_context>

<pallas_src>
import functools

import jax
import jax.numpy as jnp
from jax import lax
from jax.experimental import pallas as pl
from jax.experimental.pallas import tpu as pltpu


def _cdiv(a, b):
    return (a + b - 1) // b


def _round_up(x, m):
    return _cdiv(x, m) * m


def _num_tensorcores():
    """TensorCores sharing the 'parallel' grid axis (2 on v7x megacore, else 1)."""
    try:
        info = pltpu.get_tpu_info()
        for attr in ("num_cores", "num_tensorcores", "tensorcores_per_chip", "cores_per_chip"):
            n = getattr(info, attr, None)
            if n:
                n = int(n)
                if n > 0:
                    return n
    except Exception:
        pass
    try:
        return max(1, int(getattr(jax.devices()[0], "num_cores", 1)))
    except Exception:
        return 1


def _choose_tiling(n_pts, sub, num_tc, tm=None, tm_cap=8192):
    """Pick (tm, grid, n_pad, n_sub, sub): big tiles, balanced across TensorCores."""
    sub = max(8, int(sub))
    n_ceil = _round_up(max(int(n_pts), 1), sub)
    if tm is not None:                                   # caller-forced tile (sweeps)
        tm = max(sub, _round_up(min(int(tm), n_ceil), sub))
        n_pad = _round_up(n_pts, tm)
        return tm, n_pad // tm, n_pad, tm // sub, sub
    tm = min(n_ceil, tm_cap)                             # one big tile, capped
    grid = _cdiv(n_ceil, tm)
    if num_tc > 1 and n_pts > num_tc * sub:
        grid = _round_up(grid, num_tc)                   # equal share per TensorCore (v7x)
    tm = max(sub, _round_up(_cdiv(n_pts, grid), sub))
    n_pad = grid * tm
    return tm, grid, n_pad, tm // sub, sub


def rendering_mlp_kernel(x_ref, w_ref, b_ref, o_ref, *,
                         sub_rows, n_sub, d_hidden, d_out, n_lin, k_pad):
    """Fused MLP over one row tile, processed in `n_sub` sub-blocks of `sub_rows` rows.

    x_ref: (tm, k_pad) merged input [points|view|normals|features|0-pad], compute dtype.
    w_ref: (n_lin, k_pad, d_hidden) packed weights, compute dtype (zero-padded rows/cols).
    b_ref: (>=n_lin rows padded to 8, d_hidden) packed biases, f32 (rgb bias col-padded).
    """
    cdt = w_ref.dtype

    # Resident params: loaded once per grid step (a few KiB); no f32 casting, no unaligned slices.
    w0 = w_ref[0]                                           # (k_pad, d_hidden)
    w_rest = []
    for l in range(1, n_lin):
        wl = w_ref[l]
        if k_pad != d_hidden:
            # Free view only when d_hidden is a multiple of 16 (bf16 sublane packing).
            wl = wl[:d_hidden]
        w_rest.append(wl)

    # Hoisted, loop-invariant bias broadcasts (the unrolled loop would re-emit them per sub-block).
    b_all = b_ref[...]
    b_bc = [jnp.broadcast_to(b_all[l:l + 1, :], (sub_rows, d_hidden)) for l in range(n_lin)]

    def sub_block(s, carry):
        off = pl.multiple_of(s * sub_rows, sub_rows)
        x = x_ref[pl.ds(off, sub_rows), :]                  # (sub_rows, k_pad), bf16
        # Layer 0: single K=k_pad MXU matmul (geo + feature inputs merged in the wrapper).
        h = jnp.dot(x, w0, preferred_element_type=jnp.float32) + b_bc[0]
        h = jnp.maximum(h, 0.0)                             # ReLU (f32, VPU)
        # Hidden layers + rgb layer: bf16 MXU operands, f32 accumulate / bias / activation.
        for l in range(1, n_lin):
            h = jnp.dot(h.astype(cdt), w_rest[l - 1],
                        preferred_element_type=jnp.float32) + b_bc[l]
            if l < n_lin - 1:
                h = jnp.maximum(h, 0.0)
        rgb = jax.nn.sigmoid(h[:, :d_out])                  # slice BEFORE sigmoid: EUP work / ~10
        o_ref[pl.ds(off, sub_rows), :] = rgb.astype(o_ref.dtype)
        return carry

    lax.fori_loop(0, n_sub, sub_block, 0,
                  unroll=(True if n_sub <= 8 else 8))


def rendering_network_forward(points, normals, view_dirs, feature_vectors,
                              weights, biases, *, tm=None, sub=256,
                              compute_dtype=jnp.bfloat16):
    """mode='idr' forward. Returns (rgb, feature_output).

    weights: per-layer effective weights, shape [in, out], f32 (weight-norm already folded).
    biases : per-layer biases, shape [1, out], f32.
    """
    n_pts = points.shape[0]
    d_feature = feature_vectors.shape[1]
    d_hidden = weights[0].shape[1]
    d_out = weights[-1].shape[1]
    d_in0 = weights[0].shape[0]                 # 3+3+3+d_feature for mode='idr'
    n_lin = len(weights)

    # K padding: bf16 sublane alignment + MXU-friendly single-matmul layer 0.
    k_pad = _round_up(max(d_in0, d_hidden), 16)

    num_tc = _num_tensorcores()
    tm, grid, n_pad, n_sub, sub = _choose_tiling(n_pts, sub, num_tc, tm)

    # ---- one lane-packed input stream: [points | view_dirs | normals | features | 0-pad] ----
    x = jnp.concatenate([points, view_dirs, normals, feature_vectors], axis=-1)
    x = x.astype(compute_dtype)
    x = jnp.pad(x, ((0, n_pad - n_pts), (0, k_pad - d_in0)))

    # ---- resident packed params: weights (compute dtype, 3-D) and biases (f32, 2-D) ----
    w_pack = jnp.stack(
        [jnp.pad(w, ((0, k_pad - w.shape[0]), (0, d_hidden - w.shape[1]))).astype(compute_dtype)
         for w in weights], axis=0)                                   # (n_lin, k_pad, d_hidden)
    b_pack = jnp.concatenate(
        [jnp.pad(b, ((0, 0), (0, d_hidden - b.shape[1]))) for b in biases],
        axis=0).astype(jnp.float32)                                   # (n_lin, d_hidden)
    b_pack = jnp.pad(b_pack, ((0, (-n_lin) % 8), (0, 0)))

    kernel = functools.partial(
        rendering_mlp_kernel,
        sub_rows=sub, n_sub=n_sub, d_hidden=d_hidden, d_out=d_out,
        n_lin=n_lin, k_pad=k_pad)

    # Advisory cost: the kernel is HBM-stream / per-step-overhead bound, not MXU bound.
    flops = 2 * n_pts * sum(int(w.shape[0]) * int(w.shape[1]) for w in weights)
    bytes_accessed = (int(x.size) * x.dtype.itemsize
                      + int(w_pack.size) * w_pack.dtype.itemsize
                      + int(b_pack.size) * 4
                      + n_pad * d_out * 4)
    cost = pl.CostEstimate(flops=flops, transcendentals=n_pts * d_out,
                           bytes_accessed=bytes_accessed)

    # Raise scoped VMEM only if the chosen tile needs it (out block lane-pads to 128 in VMEM).
    vmem_est = (2 * tm * k_pad * 2 + 2 * tm * 128 * 4
                + int(w_pack.size) * 2 + int(b_pack.size) * 4 + (1 << 20))
    vmem_limit = None
    if vmem_est > 16 * 2**20:
        vmem_limit = min(_round_up(2 * vmem_est, 2**20), 48 * 2**20)

    rgb = pl.pallas_call(
        kernel,
        out_shape=jax.ShapeDtypeStruct((n_pad, d_out), jnp.float32),
        grid_spec=pltpu.PrefetchScalarGridSpec(
            num_scalar_prefetch=0,
            grid=(grid,),
            in_specs=[
                pl.BlockSpec((tm, k_pad), lambda i: (i, 0)),        # merged input stream
                pl.BlockSpec(w_pack.shape, lambda i: (0, 0, 0)),    # packed weights (resident)
                pl.BlockSpec(b_pack.shape, lambda i: (0, 0)),       # packed biases (resident)
            ],
            out_specs=pl.BlockSpec((tm, d_out), lambda i: (i, 0)),
        ),
        compiler_params=pltpu.CompilerParams(
            dimension_semantics=("parallel",),
            vmem_limit_bytes=vmem_limit),
        cost_estimate=cost,
    )(x, w_pack, b_pack)

    rgb = rgb[:n_pts]
    # TODO(synk): feature_level tap (intermediate activation output) not wired up; dcolor_dw needs
    #             torch.autograd.grad w.r.t. the expanded rgb weight matrix (no in-kernel analog).
    feature_output = None
    return rgb, feature_output


def weight_norm_effective(v, g):
    """nn.utils.weight_norm(dim=0) effective weight: w[o,i] = g[o] * v[o,i]/||v[o,:]||."""
    norm = jnp.sqrt(jnp.sum(v * v, axis=1, keepdims=True))
    return g[:, None] * v / norm


def make_params(key, dims):
    """Deterministic weight-norm parameters. Returns weights [in,out] f32, biases [1,out] f32."""
    weights, biases = [], []
    for l in range(len(dims) - 1):
        d_in, d_out = dims[l], dims[l + 1]
        key, kv, kg, kb = jax.random.split(key, 4)
        v = jax.random.normal(kv, (d_out, d_in), dtype=jnp.float32) * 0.2
        g = 1.0 + 0.1 * jax.random.normal(kg, (d_out,), dtype=jnp.float32)
        b = 0.05 * jax.random.normal(kb, (d_out,), dtype=jnp.float32)
        w_eff = weight_norm_effective(v, g)              # [out, in] (PyTorch convention)
        weights.append(jnp.asarray(w_eff.T))             # kernel uses [in, out]
        biases.append(jnp.asarray(b)[None, :])           # [1, out]
    return weights, biases


def reference_forward(points, normals, view_dirs, feature_vectors, weights, biases,
                      compute_dtype=jnp.bfloat16):
    """Plain-JAX reference mirroring the kernel numerics (bf16 matmul operands, f32 accumulate)."""
    x = jnp.concatenate([points, view_dirs, normals, feature_vectors], axis=-1)
    h = x
    n_lin = len(weights)
    for l in range(n_lin):
        w = weights[l].astype(compute_dtype)
        h = jnp.dot(h.astype(compute_dtype), w,
                    preferred_element_type=jnp.float32) + biases[l]
        if l < n_lin - 1:
            h = jnp.maximum(h, 0.0)
    return jax.nn.sigmoid(h)


if __name__ == "__main__":
    # Module config: d_feature=16, mode='idr', d_in=9, d_out=3, d_hidden=32, n_layers=4,
    # weight_norm=True, multires_view=0, squeeze_out=True, feature_level=None.
    d_feature, d_in, d_out, d_hidden, n_layers = 16, 9, 3, 32, 4
    dims = [d_in + d_feature] + [d_hidden] * n_layers + [d_out]   # [25,32,32,32,32,3]

    key = jax.random.PRNGKey(0)
    key, kp, kn, kv, kf = jax.random.split(key, 5)

    N = 1000                       # deliberately NOT a multiple of the row tile
    points = jax.random.normal(kp, (N, 3), dtype=jnp.float32)
    normals = jax.random.normal(kn, (N, 3), dtype=jnp.float32)
    view_dirs = jax.random.normal(kv, (N, 3), dtype=jnp.float32)
    view_dirs = view_dirs / jnp.linalg.norm(view_dirs, axis=-1, keepdims=True)
    feature_vectors = jax.random.normal(kf, (N, d_feature), dtype=jnp.float32)

    # bf16 inputs halve the dominant HBM read stream; all accumulation and post-matmul
    # math stays f32 inside the kernel (v5e-safe).
    points, normals, view_dirs, feature_vectors = (
        a.astype(jnp.bfloat16) for a in (points, normals, view_dirs, feature_vectors))

    weights, biases = make_params(key, dims)

    rgb, feat = rendering_network_forward(points, normals, view_dirs,
                                          feature_vectors, weights, biases,
                                          tm=None, sub=256)
    rgb = jax.block_until_ready(rgb)

    ref = reference_forward(points, normals, view_dirs, feature_vectors, weights, biases)
    assert rgb.shape == (N, d_out)
    assert feat is None
    assert jnp.allclose(rgb, ref, atol=5e-3, rtol=5e-3), "mismatch vs JAX reference"

    print("KERNEL_OK")
</pallas_src>

<mosaic_0001>
module attributes {stable_mosaic.version = 11 : i64} {
  func.func @rendering_mlp_kernel(%arg0: i32, %arg1: memref<1024x32xbf16, #tpu.memory_space<vmem>>, %arg2: memref<5x32x32xbf16, #tpu.memory_space<vmem>>, %arg3: memref<8x32xf32, #tpu.memory_space<vmem>>, %arg4: memref<1024x3xf32, #tpu.memory_space<vmem>>) attributes {dimension_semantics = [#tpu.dimension_semantics<parallel>], iteration_bounds = array<i64: 1>, scalar_prefetch = 0 : i64, scratch_operands = 0 : i64, tpu.core_type = #tpu.core_type<tc>, window_params = [{transform_indices = @transform_0, window_bounds = array<i64: 1024, 32>}, {pipeline_mode = #tpu.pipeline_mode<synchronous>, transform_indices = @transform_1, window_bounds = array<i64: 5, 32, 32>}, {pipeline_mode = #tpu.pipeline_mode<synchronous>, transform_indices = @transform_2, window_bounds = array<i64: 8, 32>}, {transform_indices = @transform_3, window_bounds = array<i64: 1024, 3>}]} {
    %c0 = arith.constant 0 : index
    %c0_0 = arith.constant 0 : index
    %c0_1 = arith.constant 0 : index
    %0 = vector.load %arg2[%c0, %c0_0, %c0_1] : memref<5x32x32xbf16, #tpu.memory_space<vmem>>, vector<1x32x32xbf16>
    %1 = vector.shape_cast %0 : vector<1x32x32xbf16> to vector<32x32xbf16>
    %c1 = arith.constant 1 : index
    %c0_2 = arith.constant 0 : index
    %c0_3 = arith.constant 0 : index
    %2 = vector.load %arg2[%c1, %c0_2, %c0_3] : memref<5x32x32xbf16, #tpu.memory_space<vmem>>, vector<1x32x32xbf16>
    %3 = vector.shape_cast %2 : vector<1x32x32xbf16> to vector<32x32xbf16>
    %c2 = arith.constant 2 : index
    %c0_4 = arith.constant 0 : index
    %c0_5 = arith.constant 0 : index
    %4 = vector.load %arg2[%c2, %c0_4, %c0_5] : memref<5x32x32xbf16, #tpu.memory_space<vmem>>, vector<1x32x32xbf16>
    %5 = vector.shape_cast %4 : vector<1x32x32xbf16> to vector<32x32xbf16>
    %c3 = arith.constant 3 : index
    %c0_6 = arith.constant 0 : index
    %c0_7 = arith.constant 0 : index
    %6 = vector.load %arg2[%c3, %c0_6, %c0_7] : memref<5x32x32xbf16, #tpu.memory_space<vmem>>, vector<1x32x32xbf16>
    %7 = vector.shape_cast %6 : vector<1x32x32xbf16> to vector<32x32xbf16>
    %c4 = arith.constant 4 : index
    %c0_8 = arith.constant 0 : index
    %c0_9 = arith.constant 0 : index
    %8 = vector.load %arg2[%c4, %c0_8, %c0_9] : memref<5x32x32xbf16, #tpu.memory_space<vmem>>, vector<1x32x32xbf16>
    %9 = vector.shape_cast %8 : vector<1x32x32xbf16> to vector<32x32xbf16>
    %c0_10 = arith.constant 0 : index
    %c0_11 = arith.constant 0 : index
    %10 = vector.load %arg3[%c0_10, %c0_11] : memref<8x32xf32, #tpu.memory_space<vmem>>, vector<8x32xf32>
    %11 = vector.extract_strided_slice %10 {offsets = [0, 0], sizes = [1, 32], strides = [1, 1]} : vector<8x32xf32> to vector<1x32xf32>
    %12 = vector.shape_cast %11 : vector<1x32xf32> to vector<1x32xf32>
    %13 = vector.broadcast %12 : vector<1x32xf32> to vector<256x32xf32>
    %14 = vector.extract_strided_slice %10 {offsets = [1, 0], sizes = [1, 32], strides = [1, 1]} : vector<8x32xf32> to vector<1x32xf32>
    %15 = vector.shape_cast %14 : vector<1x32xf32> to vector<1x32xf32>
    %16 = vector.broadcast %15 : vector<1x32xf32> to vector<256x32xf32>
    %17 = vector.extract_strided_slice %10 {offsets = [2, 0], sizes = [1, 32], strides = [1, 1]} : vector<8x32xf32> to vector<1x32xf32>
    %18 = vector.shape_cast %17 : vector<1x32xf32> to vector<1x32xf32>
    %19 = vector.broadcast %18 : vector<1x32xf32> to vector<256x32xf32>
    %20 = vector.extract_strided_slice %10 {offsets = [3, 0], sizes = [1, 32], strides = [1, 1]} : vector<8x32xf32> to vector<1x32xf32>
    %21 = vector.shape_cast %20 : vector<1x32xf32> to vector<1x32xf32>
    %22 = vector.broadcast %21 : vector<1x32xf32> to vector<256x32xf32>
    %23 = vector.extract_strided_slice %10 {offsets = [4, 0], sizes = [1, 32], strides = [1, 1]} : vector<8x32xf32> to vector<1x32xf32>
    %24 = vector.shape_cast %23 : vector<1x32xf32> to vector<1x32xf32>
    %25 = vector.broadcast %24 : vector<1x32xf32> to vector<256x32xf32>
    %c0_i32 = arith.constant 0 : i32
    %c256_i32 = arith.constant 256 : i32
    %26 = arith.muli %c0_i32, %c256_i32 : i32
    %27 = tpu.assume_multiple %26, 256 : i32
    %28 = arith.index_cast %27 : i32 to index
    %c0_12 = arith.constant 0 : index
    %29 = vector.load %arg1[%28, %c0_12] : memref<1024x32xbf16, #tpu.memory_space<vmem>>, vector<256x32xbf16>
    %cst = arith.constant dense<0.000000e+00> : vector<256x32xf32>
    %30 = tpu.matmul %29, %1, %cst {dimension_numbers = #tpu.dot_dimension_numbers<[1], [0], [0], [1], [0, 0, 1, 1], [], []>} : vector<256x32xbf16>, vector<32x32xbf16>, vector<256x32xf32> -> vector<256x32xf32>
    %31 = arith.addf %30, %13 : vector<256x32xf32>
    %cst_13 = arith.constant 0.000000e+00 : f32
    %32 = vector.broadcast %cst_13 : f32 to vector<256x32xf32>
    %33 = arith.maximumf %31, %32 : vector<256x32xf32>
    %34 = arith.truncf %33 : vector<256x32xf32> to vector<256x32xbf16>
    %cst_14 = arith.constant dense<0.000000e+00> : vector<256x32xf32>
    %35 = tpu.matmul %34, %3, %cst_14 {dimension_numbers = #tpu.dot_dimension_numbers<[1], [0], [0], [1], [0, 0, 1, 1], [], []>} : vector<256x32xbf16>, vector<32x32xbf16>, vector<256x32xf32> -> vector<256x32xf32>
    %36 = arith.addf %35, %16 : vector<256x32xf32>
    %cst_15 = arith.constant 0.000000e+00 : f32
    %37 = vector.broadcast %cst_15 : f32 to vector<256x32xf32>
    %38 = arith.maximumf %36, %37 : vector<256x32xf32>
    %39 = arith.truncf %38 : vector<256x32xf32> to vector<256x32xbf16>
    %cst_16 = arith.constant dense<0.000000e+00> : vector<256x32xf32>
    %40 = tpu.matmul %39, %5, %cst_16 {dimension_numbers = #tpu.dot_dimension_numbers<[1], [0], [0], [1], [0, 0, 1, 1], [], []>} : vector<256x32xbf16>, vector<32x32xbf16>, vector<256x32xf32> -> vector<256x32xf32>
    %41 = arith.addf %40, %19 : vector<256x32xf32>
    %cst_17 = arith.constant 0.000000e+00 : f32
    %42 = vector.broadcast %cst_17 : f32 to vector<256x32xf32>
    %43 = arith.maximumf %41, %42 : vector<256x32xf32>
    %44 = arith.truncf %43 : vector<256x32xf32> to vector<256x32xbf16>
    %cst_18 = arith.constant dense<0.000000e+00> : vector<256x32xf32>
    %45 = tpu.matmul %44, %7, %cst_18 {dimension_numbers = #tpu.dot_dimension_numbers<[1], [0], [0], [1], [0, 0, 1, 1], [], []>} : vector<256x32xbf16>, vector<32x32xbf16>, vector<256x32xf32> -> vector<256x32xf32>
    %46 = arith.addf %45, %22 : vector<256x32xf32>
    %cst_19 = arith.constant 0.000000e+00 : f32
    %47 = vector.broadcast %cst_19 : f32 to vector<256x32xf32>
    %48 = arith.maximumf %46, %47 : vector<256x32xf32>
    %49 = arith.truncf %48 : vector<256x32xf32> to vector<256x32xbf16>
    %cst_20 = arith.constant dense<0.000000e+00> : vector<256x32xf32>
    %50 = tpu.matmul %49, %9, %cst_20 {dimension_numbers = #tpu.dot_dimension_numbers<[1], [0], [0], [1], [0, 0, 1, 1], [], []>} : vector<256x32xbf16>, vector<32x32xbf16>, vector<256x32xf32> -> vector<256x32xf32>
    %51 = arith.addf %50, %25 : vector<256x32xf32>
    %52 = vector.extract_strided_slice %51 {offsets = [0, 0], sizes = [256, 3], strides = [1, 1]} : vector<256x32xf32> to vector<256x3xf32>
    %53 = arith.negf %52 : vector<256x3xf32>
    %54 = math.exp %53 : vector<256x3xf32>
    %cst_21 = arith.constant 1.000000e+00 : f32
    %55 = vector.broadcast %cst_21 : f32 to vector<256x3xf32>
    %56 = arith.addf %55, %54 : vector<256x3xf32>
    %57 = arith.divf %55, %56 : vector<256x3xf32>
    %58 = arith.index_cast %27 : i32 to index
    %c0_22 = arith.constant 0 : index
    %59 = vector.load %arg4[%58, %c0_22] : memref<1024x3xf32, #tpu.memory_space<vmem>>, vector<256x3xf32>
    tpu.vector_store %arg4[%58, %c0_22], %57 {strides = array<i32>} : memref<1024x3xf32, #tpu.memory_space<vmem>>, vector<256x3xf32>,
    %c1_i32 = arith.constant 1 : i32
    %c256_i32_23 = arith.constant 256 : i32
    %60 = arith.muli %c1_i32, %c256_i32_23 : i32
    %61 = tpu.assume_multiple %60, 256 : i32
    %62 = arith.index_cast %61 : i32 to index
    %c0_24 = arith.constant 0 : index
    %63 = vector.load %arg1[%62, %c0_24] : memref<1024x32xbf16, #tpu.memory_space<vmem>>, vector<256x32xbf16>
    %cst_25 = arith.constant dense<0.000000e+00> : vector<256x32xf32>
    %64 = tpu.matmul %63, %1, %cst_25 {dimension_numbers = #tpu.dot_dimension_numbers<[1], [0], [0], [1], [0, 0, 1, 1], [], []>} : vector<256x32xbf16>, vector<32x32xbf16>, vector<256x32xf32> -> vector<256x32xf32>
    %65 = arith.addf %64, %13 : vector<256x32xf32>
    %cst_26 = arith.constant 0.000000e+00 : f32
    %66 = vector.broadcast %cst_26 : f32 to vector<256x32xf32>
    %67 = arith.maximumf %65, %66 : vector<256x32xf32>
    %68 = arith.truncf %67 : vector<256x32xf32> to vector<256x32xbf16>
    %cst_27 = arith.constant dense<0.000000e+00> : vector<256x32xf32>
    %69 = tpu.matmul %68, %3, %cst_27 {dimension_numbers = #tpu.dot_dimension_numbers<[1], [0], [0], [1], [0, 0, 1, 1], [], []>} : vector<256x32xbf16>, vector<32x32xbf16>, vector<256x32xf32> -> vector<256x32xf32>
    %70 = arith.addf %69, %16 : vector<256x32xf32>
    %cst_28 = arith.constant 0.000000e+00 : f32
    %71 = vector.broadcast %cst_28 : f32 to vector<256x32xf32>
    %72 = arith.maximumf %70, %71 : vector<256x32xf32>
    %73 = arith.truncf %72 : vector<256x32xf32> to vector<256x32xbf16>
    %cst_29 = arith.constant dense<0.000000e+00> : vector<256x32xf32>
    %74 = tpu.matmul %73, %5, %cst_29 {dimension_numbers = #tpu.dot_dimension_numbers<[1], [0], [0], [1], [0, 0, 1, 1], [], []>} : vector<256x32xbf16>, vector<32x32xbf16>, vector<256x32xf32> -> vector<256x32xf32>
    %75 = arith.addf %74, %19 : vector<256x32xf32>
    %cst_30 = arith.constant 0.000000e+00 : f32
    %76 = vector.broadcast %cst_30 : f32 to vector<256x32xf32>
    %77 = arith.maximumf %75, %76 : vector<256x32xf32>
    %78 = arith.truncf %77 : vector<256x32xf32> to vector<256x32xbf16>
    %cst_31 = arith.constant dense<0.000000e+00> : vector<256x32xf32>
    %79 = tpu.matmul %78, %7, %cst_31 {dimension_numbers = #tpu.dot_dimension_numbers<[1], [0], [0], [1], [0, 0, 1, 1], [], []>} : vector<256x32xbf16>, vector<32x32xbf16>, vector<256x32xf32> -> vector<256x32xf32>
    %80 = arith.addf %79, %22 : vector<256x32xf32>
    %cst_32 = arith.constant 0.000000e+00 : f32
    %81 = vector.broadcast %cst_32 : f32 to vector<256x32xf32>
    %82 = arith.maximumf %80, %81 : vector<256x32xf32>
    %83 = arith.truncf %82 : vector<256x32xf32> to vector<256x32xbf16>
    %cst_33 = arith.constant dense<0.000000e+00> : vector<256x32xf32>
    %84 = tpu.matmul %83, %9, %cst_33 {dimension_numbers = #tpu.dot_dimension_numbers<[1], [0], [0], [1], [0, 0, 1, 1], [], []>} : vector<256x32xbf16>, vector<32x32xbf16>, vector<256x32xf32> -> vector<256x32xf32>
    %85 = arith.addf %84, %25 : vector<256x32xf32>
    %86 = vector.extract_strided_slice %85 {offsets = [0, 0], sizes = [256, 3], strides = [1, 1]} : vector<256x32xf32> to vector<256x3xf32>
    %87 = arith.negf %86 : vector<256x3xf32>
    %88 = math.exp %87 : vector<256x3xf32>
    %cst_34 = arith.constant 1.000000e+00 : f32
    %89 = vector.broadcast %cst_34 : f32 to vector<256x3xf32>
    %90 = arith.addf %89, %88 : vector<256x3xf32>
    %91 = arith.divf %89, %90 : vector<256x3xf32>
    %92 = arith.index_cast %61 : i32 to index
    %c0_35 = arith.constant 0 : index
    %93 = vector.load %arg4[%92, %c0_35] : memref<1024x3xf32, #tpu.memory_space<vmem>>, vector<256x3xf32>
    tpu.vector_store %arg4[%92, %c0_35], %91 {strides = array<i32>} : memref<1024x3xf32, #tpu.memory_space<vmem>>, vector<256x3xf32>,
    %c2_i32 = arith.constant 2 : i32
    %c256_i32_36 = arith.constant 256 : i32
    %94 = arith.muli %c2_i32, %c256_i32_36 : i32
    %95 = tpu.assume_multiple %94, 256 : i32
    %96 = arith.index_cast %95 : i32 to index
    %c0_37 = arith.constant 0 : index
    %97 = vector.load %arg1[%96, %c0_37] : memref<1024x32xbf16, #tpu.memory_space<vmem>>, vector<256x32xbf16>
    %cst_38 = arith.constant dense<0.000000e+00> : vector<256x32xf32>
    %98 = tpu.matmul %97, %1, %cst_38 {dimension_numbers = #tpu.dot_dimension_numbers<[1], [0], [0], [1], [0, 0, 1, 1], [], []>} : vector<256x32xbf16>, vector<32x32xbf16>, vector<256x32xf32> -> vector<256x32xf32>
    %99 = arith.addf %98, %13 : vector<256x32xf32>
    %cst_39 = arith.constant 0.000000e+00 : f32
    %100 = vector.broadcast %cst_39 : f32 to vector<256x32xf32>
    %101 = arith.maximumf %99, %100 : vector<256x32xf32>
    %102 = arith.truncf %101 : vector<256x32xf32> to vector<256x32xbf16>
    %cst_40 = arith.constant dense<0.000000e+00> : vector<256x32xf32>
    %103 = tpu.matmul %102, %3, %cst_40 {dimension_numbers = #tpu.dot_dimension_numbers<[1], [0], [0], [1], [0, 0, 1, 1], [], []>} : vector<256x32xbf16>, vector<32x32xbf16>, vector<256x32xf32> -> vector<256x32xf32>
    %104 = arith.addf %103, %16 : vector<256x32xf32>
    %cst_41 = arith.constant 0.000000e+00 : f32
    %105 = vector.broadcast %cst_41 : f32 to vector<256x32xf32>
    %106 = arith.maximumf %104, %105 : vector<256x32xf32>
    %107 = arith.truncf %106 : vector<256x32xf32> to vector<256x32xbf16>
    %cst_42 = arith.constant dense<0.000000e+00> : vector<256x32xf32>
    %108 = tpu.matmul %107, %5, %cst_42 {dimension_numbers = #tpu.dot_dimension_numbers<[1], [0], [0], [1], [0, 0, 1, 1], [], []>} : vector<256x32xbf16>, vector<32x32xbf16>, vector<256x32xf32> -> vector<256x32xf32>
    %109 = arith.addf %108, %19 : vector<256x32xf32>
    %cst_43 = arith.constant 0.000000e+00 : f32
    %110 = vector.broadcast %cst_43 : f32 to vector<256x32xf32>
    %111 = arith.maximumf %109, %110 : vector<256x32xf32>
    %112 = arith.truncf %111 : vector<256x32xf32> to vector<256x32xbf16>
    %cst_44 = arith.constant dense<0.000000e+00> : vector<256x32xf32>
    %113 = tpu.matmul %112, %7, %cst_44 {dimension_numbers = #tpu.dot_dimension_numbers<[1], [0], [0], [1], [0, 0, 1, 1], [], []>} : vector<256x32xbf16>, vector<32x32xbf16>, vector<256x32xf32> -> vector<256x32xf32>
    %114 = arith.addf %113, %22 : vector<256x32xf32>
    %cst_45 = arith.constant 0.000000e+00 : f32
    %115 = vector.broadcast %cst_45 : f32 to vector<256x32xf32>
    %116 = arith.maximumf %114, %115 : vector<256x32xf32>
    %117 = arith.truncf %116 : vector<256x32xf32> to vector<256x32xbf16>
    %cst_46 = arith.constant dense<0.000000e+00> : vector<256x32xf32>
    %118 = tpu.matmul %117, %9, %cst_46 {dimension_numbers = #tpu.dot_dimension_numbers<[1], [0], [0], [1], [0, 0, 1, 1], [], []>} : vector<256x32xbf16>, vector<32x32xbf16>, vector<256x32xf32> -> vector<256x32xf32>
    %119 = arith.addf %118, %25 : vector<256x32xf32>
    %120 = vector.extract_strided_slice %119 {offsets = [0, 0], sizes = [256, 3], strides = [1, 1]} : vector<256x32xf32> to vector<256x3xf32>
    %121 = arith.negf %120 : vector<256x3xf32>
    %122 = math.exp %121 : vector<256x3xf32>
    %cst_47 = arith.constant 1.000000e+00 : f32
    %123 = vector.broadcast %cst_47 : f32 to vector<256x3xf32>
    %124 = arith.addf %123, %122 : vector<256x3xf32>
    %125 = arith.divf %123, %124 : vector<256x3xf32>
    %126 = arith.index_cast %95 : i32 to index
    %c0_48 = arith.constant 0 : index
    %127 = vector.load %arg4[%126, %c0_48] : memref<1024x3xf32, #tpu.memory_space<vmem>>, vector<256x3xf32>
    tpu.vector_store %arg4[%126, %c0_48], %125 {strides = array<i32>} : memref<1024x3xf32, #tpu.memory_space<vmem>>, vector<256x3xf32>,
    %c3_i32 = arith.constant 3 : i32
    %c256_i32_49 = arith.constant 256 : i32
    %128 = arith.muli %c3_i32, %c256_i32_49 : i32
    %129 = tpu.assume_multiple %128, 256 : i32
    %130 = arith.index_cast %129 : i32 to index
    %c0_50 = arith.constant 0 : index
    %131 = vector.load %arg1[%130, %c0_50] : memref<1024x32xbf16, #tpu.memory_space<vmem>>, vector<256x32xbf16>
    %cst_51 = arith.constant dense<0.000000e+00> : vector<256x32xf32>
    %132 = tpu.matmul %131, %1, %cst_51 {dimension_numbers = #tpu.dot_dimension_numbers<[1], [0], [0], [1], [0, 0, 1, 1], [], []>} : vector<256x32xbf16>, vector<32x32xbf16>, vector<256x32xf32> -> vector<256x32xf32>
    %133 = arith.addf %132, %13 : vector<256x32xf32>
    %cst_52 = arith.constant 0.000000e+00 : f32
    %134 = vector.broadcast %cst_52 : f32 to vector<256x32xf32>
    %135 = arith.maximumf %133, %134 : vector<256x32xf32>
    %136 = arith.truncf %135 : vector<256x32xf32> to vector<256x32xbf16>
    %cst_53 = arith.constant dense<0.000000e+00> : vector<256x32xf32>
    %137 = tpu.matmul %136, %3, %cst_53 {dimension_numbers = #tpu.dot_dimension_numbers<[1], [0], [0], [1], [0, 0, 1, 1], [], []>} : vector<256x32xbf16>, vector<32x32xbf16>, vector<256x32xf32> -> vector<256x32xf32>
    %138 = arith.addf %137, %16 : vector<256x32xf32>
    %cst_54 = arith.constant 0.000000e+00 : f32
    %139 = vector.broadcast %cst_54 : f32 to vector<256x32xf32>
    %140 = arith.maximumf %138, %139 : vector<256x32xf32>
    %141 = arith.truncf %140 : vector<256x32xf32> to vector<256x32xbf16>
    %cst_55 = arith.constant dense<0.000000e+00> : vector<256x32xf32>
    %142 = tpu.matmul %141, %5, %cst_55 {dimension_numbers = #tpu.dot_dimension_numbers<[1], [0], [0], [1], [0, 0, 1, 1], [], []>} : vector<256x32xbf16>, vector<32x32xbf16>, vector<256x32xf32> -> vector<256x32xf32>
    %143 = arith.addf %142, %19 : vector<256x32xf32>
    %cst_56 = arith.constant 0.000000e+00 : f32
    %144 = vector.broadcast %cst_56 : f32 to vector<256x32xf32>
    %145 = arith.maximumf %143, %144 : vector<256x32xf32>
    %146 = arith.truncf %145 : vector<256x32xf32> to vector<256x32xbf16>
    %cst_57 = arith.constant dense<0.000000e+00> : vector<256x32xf32>
    %147 = tpu.matmul %146, %7, %cst_57 {dimension_numbers = #tpu.dot_dimension_numbers<[1], [0], [0], [1], [0, 0, 1, 1], [], []>} : vector<256x32xbf16>, vector<32x32xbf16>, vector<256x32xf32> -> vector<256x32xf32>
    %148 = arith.addf %147, %22 : vector<256x32xf32>
    %cst_58 = arith.constant 0.000000e+00 : f32
    %149 = vector.broadcast %cst_58 : f32 to vector<256x32xf32>
    %150 = arith.maximumf %148, %149 : vector<256x32xf32>
    %151 = arith.truncf %150 : vector<256x32xf32> to vector<256x32xbf16>
    %cst_59 = arith.constant dense<0.000000e+00> : vector<256x32xf32>
    %152 = tpu.matmul %151, %9, %cst_59 {dimension_numbers = #tpu.dot_dimension_numbers<[1], [0], [0], [1], [0, 0, 1, 1], [], []>} : vector<256x32xbf16>, vector<32x32xbf16>, vector<256x32xf32> -> vector<256x32xf32>
    %153 = arith.addf %152, %25 : vector<256x32xf32>
    %154 = vector.extract_strided_slice %153 {offsets = [0, 0], sizes = [256, 3], strides = [1, 1]} : vector<256x32xf32> to vector<256x3xf32>
    %155 = arith.negf %154 : vector<256x3xf32>
    %156 = math.exp %155 : vector<256x3xf32>
    %cst_60 = arith.constant 1.000000e+00 : f32
    %157 = vector.broadcast %cst_60 : f32 to vector<256x3xf32>
    %158 = arith.addf %157, %156 : vector<256x3xf32>
    %159 = arith.divf %157, %158 : vector<256x3xf32>
    %160 = arith.index_cast %129 : i32 to index
    %c0_61 = arith.constant 0 : index
    %161 = vector.load %arg4[%160, %c0_61] : memref<1024x3xf32, #tpu.memory_space<vmem>>, vector<256x3xf32>
    tpu.vector_store %arg4[%160, %c0_61], %159 {strides = array<i32>} : memref<1024x3xf32, #tpu.memory_space<vmem>>, vector<256x3xf32>,
    %c4_i32 = arith.constant 4 : i32
    return
  }
  func.func @transform_0(%arg0: i32) -> (i32, i32) {
    %c0_i32 = arith.constant 0 : i32
    %c0_i32_0 = arith.constant 0 : i32
    return %arg0, %c0_i32 : i32, i32
  }
  func.func @transform_1(%arg0: i32) -> (i32, i32, i32) {
    %c0_i32 = arith.constant 0 : i32
    %c0_i32_0 = arith.constant 0 : i32
    %c0_i32_1 = arith.constant 0 : i32
    %c0_i32_2 = arith.constant 0 : i32
    return %c0_i32, %c0_i32_0, %c0_i32_1 : i32, i32, i32
  }
  func.func @transform_2(%arg0: i32) -> (i32, i32) {
    %c0_i32 = arith.constant 0 : i32
    %c0_i32_0 = arith.constant 0 : i32
    %c0_i32_1 = arith.constant 0 : i32
    return %c0_i32, %c0_i32_0 : i32, i32
  }
  func.func @transform_3(%arg0: i32) -> (i32, i32) {
    %c0_i32 = arith.constant 0 : i32
    %c0_i32_0 = arith.constant 0 : i32
    return %arg0, %c0_i32 : i32, i32
  }
}

</mosaic_0001>

<llo_original>
// kernel: tpu_custom_call.1
$region0: #{tpu_custom_call.1}
  #allocation0 [shape = 'u32[]', space=smem, size = 0x4, offset = 0x4, fixed_abs, tag = 'smem constant byte address 0x4 - core index']
  #allocation1 [shape = 'u32[144,128]{1,0:T(1,128)}', space=vmem, size = 0x12000, scoped, tag = 'internal scratch']
  %s0 = inlined_call_operand.vmem [shape: bf16[1024,32], index: 0, kind: input, shape index: {}]
  %s1 = inlined_call_operand.vmem [shape: bf16[5,32,32], index: 1, kind: input, shape index: {}]
  %s2 = inlined_call_operand.vmem [shape: f32[8,32], index: 2, kind: input, shape index: {}]
  %s3 = inlined_call_operand.vmem [shape: f32[1024,3], index: 3, kind: output, shape index: {}]
  %s4 = sld [smem:[#allocation0]]
  $region22: #{tpu_custom_call.1} parent=0
    _
  %s6 = ssub.s32 1, %s4
  %s7 = scalar_select 0, %s6, %s4
  // Predicated region
  $region2: #{tpu_custom_call.1} parent=0 // pred_check
    _
  $region3: #{tpu_custom_call.1} parent=0 // pred_check_branch
    %9 = sbr.rel (0) target = $region5
  $region4: #{tpu_custom_call.1} parent=0 // pred_region
    _
  $region5: #{tpu_custom_call.1} parent=0 // pred_fallthru
    _
  // Predicated region
  $region6: #{tpu_custom_call.1} parent=0 // pred_check
    _
  $region7: #{tpu_custom_call.1} parent=0 // pred_check_branch
    %11 = sbr.rel (0) target = $region9
  $region8: #{tpu_custom_call.1} parent=0 // pred_region
    _
  $region9: #{tpu_custom_call.1} parent=0 // pred_fallthru
    _
  // Predicated region
  $region10: #{tpu_custom_call.1} parent=0 // pred_check
    _
  $region11: #{tpu_custom_call.1} parent=0 // pred_check_branch
    %13 = sbr.rel (0) target = $region13
  $region12: #{tpu_custom_call.1} parent=0 // pred_region
    _
  $region13: #{tpu_custom_call.1} parent=0 // pred_fallthru
    _
  %v15 = vld [vmem:[%s1] sm:$0xf]
  %v16 = vld [vmem:[%s1 + $0x4] sm:$0xf]
  %v17 = vld [vmem:[%s1 + $0x8] sm:$0xf]
  %v18 = vld [vmem:[%s1 + $0xc] sm:$0xf]
  %s19 = scalar_lea.vmem %s1, 16
  %v20 = vld [vmem:[%s19] sm:$0xf]
  %v21 = vld [vmem:[%s19 + $0x4] sm:$0xf]
  %v22 = vld [vmem:[%s19 + $0x8] sm:$0xf]
  %v23 = vld [vmem:[%s19 + $0xc] sm:$0xf]
  %s24 = scalar_lea.vmem %s1, 32
  %v25 = vld [vmem:[%s24] sm:$0xf]
  %v26 = vld [vmem:[%s24 + $0x4] sm:$0xf]
  %v27 = vld [vmem:[%s24 + $0x8] sm:$0xf]
  %v28 = vld [vmem:[%s24 + $0xc] sm:$0xf]
  %s29 = scalar_lea.vmem %s1, 48
  %v30 = vld [vmem:[%s29] sm:$0xf]
  %v31 = vld [vmem:[%s29 + $0x4] sm:$0xf]
  %v32 = vld [vmem:[%s29 + $0x8] sm:$0xf]
  %v33 = vld [vmem:[%s29 + $0xc] sm:$0xf]
  %s34 = scalar_lea.vmem %s1, 64
  %v35 = vld [vmem:[%s34] sm:$0xf]
  %v36 = vld [vmem:[%s34 + $0x4] sm:$0xf]
  %v37 = vld [vmem:[%s34 + $0x8] sm:$0xf]
  %v38 = vld [vmem:[%s34 + $0xc] sm:$0xf]
  %v39 = vld [vmem:[%s2] sm:$0xff]
  %v40 = vlaneseq
  %v41 = vshrl.u32 %v40, 7
  %v42 = vsub.s32 0, %v41
  %v43 = vrot.slane %v39, %v42
  %v44 = vlaneseq
  %v45 = vshrl.u32 %v44, 7
  %v46 = vsub.s32 1, %v45
  %v47 = vrot.slane %v39, %v46
  %v48 = vlaneseq
  %v49 = vshrl.u32 %v48, 7
  %v50 = vsub.s32 2, %v49
  %v51 = vrot.slane %v39, %v50
  %v52 = vlaneseq
  %v53 = vshrl.u32 %v52, 7
  %v54 = vsub.s32 3, %v53
  %v55 = vrot.slane %v39, %v54
  %v56 = vlaneseq
  %v57 = vshrl.u32 %v56, 7
  %v58 = vsub.s32 4, %v57
  %v59 = vrot.slane %v39, %v58
  %v60 = vld [vmem:[%s0] sm:$0xf]
  %v61 = vld [vmem:[%s0 + $0x4] sm:$0xf]
  %v62 = vld [vmem:[%s0 + $0x8] sm:$0xf]
  %v63 = vld [vmem:[%s0 + $0xc] sm:$0xf]
  %v64 = vld [vmem:[%s0 + $0x10] sm:$0xf]
  %v65 = vld [vmem:[%s0 + $0x14] sm:$0xf]
  %v66 = vld [vmem:[%s0 + $0x18] sm:$0xf]
  %v67 = vld [vmem:[%s0 + $0x1c] sm:$0xf]
  %v68 = vld [vmem:[%s0 + $0x20] sm:$0xf]
  %v69 = vld [vmem:[%s0 + $0x24] sm:$0xf]
  %v70 = vld [vmem:[%s0 + $0x28] sm:$0xf]
  %v71 = vld [vmem:[%s0 + $0x2c] sm:$0xf]
  %v72 = vld [vmem:[%s0 + $0x30] sm:$0xf]
  %v73 = vld [vmem:[%s0 + $0x34] sm:$0xf]
  %v74 = vld [vmem:[%s0 + $0x38] sm:$0xf]
  %v75 = vld [vmem:[%s0 + $0x3c] sm:$0xf]
  %v76 = vld [vmem:[%s0 + $0x40] sm:$0xf]
  %v77 = vld [vmem:[%s0 + $0x44] sm:$0xf]
  %v78 = vld [vmem:[%s0 + $0x48] sm:$0xf]
  %v79 = vld [vmem:[%s0 + $0x4c] sm:$0xf]
  %v80 = vld [vmem:[%s0 + $0x50] sm:$0xf]
  %v81 = vld [vmem:[%s0 + $0x54] sm:$0xf]
  %v82 = vld [vmem:[%s0 + $0x58] sm:$0xf]
  %v83 = vld [vmem:[%s0 + $0x5c] sm:$0xf]
  %v84 = vld [vmem:[%s0 + $0x60] sm:$0xf]
  %v85 = vld [vmem:[%s0 + $0x64] sm:$0xf]
  %v86 = vld [vmem:[%s0 + $0x68] sm:$0xf]
  %v87 = vld [vmem:[%s0 + $0x6c] sm:$0xf]
  %v88 = vld [vmem:[%s0 + $0x70] sm:$0xf]
  %v89 = vld [vmem:[%s0 + $0x74] sm:$0xf]
  %v90 = vld [vmem:[%s0 + $0x78] sm:$0xf]
  %v91 = vld [vmem:[%s0 + $0x7c] sm:$0xf]
  %v124 = vunpack.c.l.b16 %v60
  %v125 = vunpack.c.l.b16 %v61
  %v126 = vunpack.c.l.b16 %v62
  %v127 = vunpack.c.l.b16 %v63
  %v128 = vunpack.c.l.b16 %v64
  %v129 = vunpack.c.l.b16 %v65
  %v130 = vunpack.c.l.b16 %v66
  %v131 = vunpack.c.l.b16 %v67
  %v132 = vunpack.c.l.b16 %v68
  %v133 = vunpack.c.l.b16 %v69
  %v134 = vunpack.c.l.b16 %v70
  %v135 = vunpack.c.l.b16 %v71
  %v136 = vunpack.c.l.b16 %v72
  %v137 = vunpack.c.l.b16 %v73
  %v138 = vunpack.c.l.b16 %v74
  %v139 = vunpack.c.l.b16 %v75
  %v140 = vunpack.c.l.b16 %v76
  %v141 = vunpack.c.l.b16 %v77
  %v142 = vunpack.c.l.b16 %v78
  %v143 = vunpack.c.l.b16 %v79
  %v144 = vunpack.c.l.b16 %v80
  %v145 = vunpack.c.l.b16 %v81
  %v146 = vunpack.c.l.b16 %v82
  %v147 = vunpack.c.l.b16 %v83
  %v148 = vunpack.c.l.b16 %v84
  %v149 = vunpack.c.l.b16 %v85
  %v150 = vunpack.c.l.b16 %v86
  %v151 = vunpack.c.l.b16 %v87
  %v152 = vunpack.c.l.b16 %v88
  %v153 = vunpack.c.l.b16 %v89
  %v154 = vunpack.c.l.b16 %v90
  %v155 = vunpack.c.l.b16 %v91
  %v156 = vpack.c.b16 %v125, %v124
  %v157 = vpack.c.b16 %v127, %v126
  %v158 = vpack.c.b16 %v129, %v128
  %v159 = vpack.c.b16 %v131, %v130
  %v160 = vpack.c.b16 %v133, %v132
  %v161 = vpack.c.b16 %v135, %v134
  %v162 = vpack.c.b16 %v137, %v136
  %v163 = vpack.c.b16 %v139, %v138
  %v164 = vpack.c.b16 %v141, %v140
  %v165 = vpack.c.b16 %v143, %v142
  %v166 = vpack.c.b16 %v145, %v144
  %v167 = vpack.c.b16 %v147, %v146
  %v168 = vpack.c.b16 %v149, %v148
  %v169 = vpack.c.b16 %v151, %v150
  %v170 = vpack.c.b16 %v153, %v152
  %v171 = vpack.c.b16 %v155, %v154
  %v176 = vunpack.c.l.b16 %v15
  %v177 = vunpack.c.l.b16 %v16
  %v178 = vunpack.c.l.b16 %v17
  %v179 = vunpack.c.l.b16 %v18
  %v180 = vpack.c.b16 %v177, %v176
  %v181 = vpack.c.b16 %v179, %v178
  %vm184 = vcmask 261120
  %v186 = vsel %vm184, %v156, 0
  %v189 = vsel %vm184, %v157, 0
  %v192 = vsel %vm184, %v158, 0
  %v195 = vsel %vm184, %v159, 0
  %v198 = vsel %vm184, %v160, 0
  %v201 = vsel %vm184, %v161, 0
  %v204 = vsel %vm184, %v162, 0
  %v207 = vsel %vm184, %v163, 0
  %v210 = vsel %vm184, %v164, 0
  %v213 = vsel %vm184, %v165, 0
  %v216 = vsel %vm184, %v166, 0
  %v219 = vsel %vm184, %v167, 0
  %v222 = vsel %vm184, %v168, 0
  %v225 = vsel %vm184, %v169, 0
  %v228 = vsel %vm184, %v170, 0
  %v231 = vsel %vm184, %v171, 0
  %233 = vmatprep.subr.bf16.mxu0 0
  %234 = vmatpush1.bf16.msra.mxu0 0
  %235 = vmatprep.subr.bf16.mxu0 0
  %236 = vmatpush1.bf16.msra.mxu0 0
  %237 = vmatprep.subr.bf16.mxu0 0
  %238 = vmatpush1.bf16.msra.mxu0 0
  %239 = vmatprep.subr.bf16.mxu0 0
  %240 = vmatpush1.bf16.msra.mxu0 0
  %241 = vmatprep.subr.bf16.mxu0 0
  %242 = vmatpush1.bf16.msra.mxu0 0
  %243 = vmatprep.subr.bf16.mxu0 0
  %244 = vmatpush1.bf16.msra.mxu0 0
  %245 = vmatprep.subr.bf16.mxu0 0
  %246 = vmatpush1.bf16.msra.mxu0 %v181
  %247 = vmatprep.subr.bf16.mxu0 0
  %248 = vmatpush1.bf16.msra.mxu0 %v180
  %249 = vmatprep.subr.bf16.mxu0 0
  %250 = vmatpush2.bf16.msra.mxu0 0
  %251 = vmatprep.subr.bf16.mxu0 0
  %252 = vmatpush2.bf16.msra.mxu0 0
  %253 = vmatprep.subr.bf16.mxu0 0
  %254 = vmatpush2.bf16.msra.mxu0 0
  %255 = vmatprep.subr.bf16.mxu0 0
  %256 = vmatpush2.bf16.msra.mxu0 0
  %257 = vmatprep.subr.bf16.mxu0 0
  %258 = vmatpush2.bf16.msra.mxu0 0
  %259 = vmatprep.subr.bf16.mxu0 0
  %260 = vmatpush2.bf16.msra.mxu0 0
  %261 = vmatprep.subr.bf16.mxu0 0
  %262 = vmatpush2.bf16.msra.mxu0 0
  %263 = vmatprep.subr.bf16.mxu0 0
  %264 = vmatpush2.bf16.msra.mxu0 0
  %265 = vmatprep.mubr.bf16.mxu0 0
  %266 = vmatmul.mubr.bf16.gmra.mxu0 %v186
  %v267 = vpop.f32.mrf.mxu0
  %v268 = vadd.f32 %v43, %v267
  %v269 = vpop.f32.mrf.mxu0
  %v270 = vpop.f32.mrf.mxu0
  %v271 = vadd.f32 %v43, %v270
  %v272 = vpop.f32.mrf.mxu0
  %273 = vmatprep.mubr.bf16.mxu0 0
  %274 = vmatmul.mubr.bf16.gmra.mxu0 %v189
  %v275 = vpop.f32.mrf.mxu0
  %v276 = vadd.f32 %v43, %v275
  %v277 = vpop.f32.mrf.mxu0
  %v278 = vpop.f32.mrf.mxu0
  %v279 = vadd.f32 %v43, %v278
  %v280 = vpop.f32.mrf.mxu0
  %281 = vmatprep.mubr.bf16.mxu0 0
  %282 = vmatmul.mubr.bf16.gmra.mxu0 %v192
  %v283 = vpop.f32.mrf.mxu0
  %v284 = vadd.f32 %v43, %v283
  %v285 = vpop.f32.mrf.mxu0
  %v286 = vpop.f32.mrf.mxu0
  %v287 = vadd.f32 %v43, %v286
  %v288 = vpop.f32.mrf.mxu0
  %289 = vmatprep.mubr.bf16.mxu0 0
  %290 = vmatmul.mubr.bf16.gmra.mxu0 %v195
  %v291 = vpop.f32.mrf.mxu0
  %v292 = vadd.f32 %v43, %v291
  %v293 = vpop.f32.mrf.mxu0
  %v294 = vpop.f32.mrf.mxu0
  %v295 = vadd.f32 %v43, %v294
  %v296 = vpop.f32.mrf.mxu0
  %297 = vmatprep.mubr.bf16.mxu0 0
  %298 = vmatmul.mubr.bf16.gmra.mxu0 %v198
  %v299 = vpop.f32.mrf.mxu0
  %v300 = vadd.f32 %v43, %v299
  %v301 = vpop.f32.mrf.mxu0
  %v302 = vpop.f32.mrf.mxu0
  %v303 = vadd.f32 %v43, %v302
  %v304 = vpop.f32.mrf.mxu0
  %305 = vmatprep.mubr.bf16.mxu0 0
  %306 = vmatmul.mubr.bf16.gmra.mxu0 %v201
  %v307 = vpop.f32.mrf.mxu0
  %v308 = vadd.f32 %v43, %v307
  %v309 = vpop.f32.mrf.mxu0
  %v310 = vpop.f32.mrf.mxu0
  %v311 = vadd.f32 %v43, %v310
  %v312 = vpop.f32.mrf.mxu0
  %313 = vmatprep.mubr.bf16.mxu0 0
  %314 = vmatmul.mubr.bf16.gmra.mxu0 %v204
  %v315 = vpop.f32.mrf.mxu0
  %v316 = vadd.f32 %v43, %v315
  %v317 = vpop.f32.mrf.mxu0
  %v318 = vpop.f32.mrf.mxu0
  %v319 = vadd.f32 %v43, %v318
  %v320 = vpop.f32.mrf.mxu0
  %321 = vmatprep.mubr.bf16.mxu0 0
  %322 = vmatmul.mubr.bf16.gmra.mxu0 %v207
  %v323 = vpop.f32.mrf.mxu0
  %v324 = vadd.f32 %v43, %v323
  %v325 = vpop.f32.mrf.mxu0
  %v326 = vpop.f32.mrf.mxu0
  %v327 = vadd.f32 %v43, %v326
  %v328 = vpop.f32.mrf.mxu0
  %329 = vmatprep.mubr.bf16.mxu0 0
  %330 = vmatmul.mubr.bf16.gmra.mxu0 %v210
  %v331 = vpop.f32.mrf.mxu0
  %v332 = vadd.f32 %v43, %v331
  %v333 = vpop.f32.mrf.mxu0
  %v334 = vpop.f32.mrf.mxu0
  %v335 = vadd.f32 %v43, %v334
  %v336 = vpop.f32.mrf.mxu0
  %337 = vmatprep.mubr.bf16.mxu0 0
  %338 = vmatmul.mubr.bf16.gmra.mxu0 %v213
  %v339 = vpop.f32.mrf.mxu0
  %v340 = vadd.f32 %v43, %v339
  %v341 = vpop.f32.mrf.mxu0
  %v342 = vpop.f32.mrf.mxu0
  %v343 = vadd.f32 %v43, %v342
  %v344 = vpop.f32.mrf.mxu0
  %345 = vmatprep.mubr.bf16.mxu0 0
  %346 = vmatmul.mubr.bf16.gmra.mxu0 %v216
  %v347 = vpop.f32.mrf.mxu0
  %v348 = vadd.f32 %v43, %v347
  %v349 = vpop.f32.mrf.mxu0
  %v350 = vpop.f32.mrf.mxu0
  %v351 = vadd.f32 %v43, %v350
  %v352 = vpop.f32.mrf.mxu0
  %353 = vmatprep.mubr.bf16.mxu0 0
  %354 = vmatmul.mubr.bf16.gmra.mxu0 %v219
  %v355 = vpop.f32.mrf.mxu0
  %v356 = vadd.f32 %v43, %v355
  %v357 = vpop.f32.mrf.mxu0
  %v358 = vpop.f32.mrf.mxu0
  %v359 = vadd.f32 %v43, %v358
  %v360 = vpop.f32.mrf.mxu0
  %361 = vmatprep.mubr.bf16.mxu0 0
  %362 = vmatmul.mubr.bf16.gmra.mxu0 %v222
  %v363 = vpop.f32.mrf.mxu0
  %v364 = vadd.f32 %v43, %v363
  %v365 = vpop.f32.mrf.mxu0
  %v366 = vpop.f32.mrf.mxu0
  %v367 = vadd.f32 %v43, %v366
  %v368 = vpop.f32.mrf.mxu0
  %369 = vmatprep.mubr.bf16.mxu0 0
  %370 = vmatmul.mubr.bf16.gmra.mxu0 %v225
  %v371 = vpop.f32.mrf.mxu0
  %v372 = vadd.f32 %v43, %v371
  %v373 = vpop.f32.mrf.mxu0
  %v374 = vpop.f32.mrf.mxu0
  %v375 = vadd.f32 %v43, %v374
  %v376 = vpop.f32.mrf.mxu0
  %377 = vmatprep.mubr.bf16.mxu0 0
  %378 = vmatmul.mubr.bf16.gmra.mxu0 %v228
  %v379 = vpop.f32.mrf.mxu0
  %v380 = vadd.f32 %v43, %v379
  %v381 = vpop.f32.mrf.mxu0
  %v382 = vpop.f32.mrf.mxu0
  %v383 = vadd.f32 %v43, %v382
  %v384 = vpop.f32.mrf.mxu0
  %385 = vmatprep.mubr.bf16.mxu0 0
  %386 = vmatmul.mubr.bf16.gmra.mxu0 %v231
  %v387 = vpop.f32.mrf.mxu0
  %v388 = vadd.f32 %v43, %v387
  %v389 = vpop.f32.mrf.mxu0
  %v390 = vpop.f32.mrf.mxu0
  %v391 = vadd.f32 %v43, %v390
  %v392 = vpop.f32.mrf.mxu0
  %393 = vdwg.mxu0
  %v394 = vmax.f32 %v268, 0.0
  %v395 = vmax.f32 %v271, 0.0
  %v396 = vmax.f32 %v276, 0.0
  %v397 = vmax.f32 %v279, 0.0
  %v398 = vmax.f32 %v284, 0.0
  %v399 = vmax.f32 %v287, 0.0
  %v400 = vmax.f32 %v292, 0.0
  %v401 = vmax.f32 %v295, 0.0
  %v402 = vmax.f32 %v300, 0.0
  %v403 = vmax.f32 %v303, 0.0
  %v404 = vmax.f32 %v308, 0.0
  %v405 = vmax.f32 %v311, 0.0
  %v406 = vmax.f32 %v316, 0.0
  %v407 = vmax.f32 %v319, 0.0
  %v408 = vmax.f32 %v324, 0.0
  %v409 = vmax.f32 %v327, 0.0
  %v410 = vmax.f32 %v332, 0.0
  %v411 = vmax.f32 %v335, 0.0
  %v412 = vmax.f32 %v340, 0.0
  %v413 = vmax.f32 %v343, 0.0
  %v414 = vmax.f32 %v348, 0.0
  %v415 = vmax.f32 %v351, 0.0
  %v416 = vmax.f32 %v356, 0.0
  %v417 = vmax.f32 %v359, 0.0
  %v418 = vmax.f32 %v364, 0.0
  %v419 = vmax.f32 %v367, 0.0
  %v420 = vmax.f32 %v372, 0.0
  %v421 = vmax.f32 %v375, 0.0
  %v422 = vmax.f32 %v380, 0.0
  %v423 = vmax.f32 %v383, 0.0
  %v424 = vmax.f32 %v388, 0.0
  %v425 = vmax.f32 %v391, 0.0
  %v426 = vpack.c.bf16 %v395, %v394
  %v427 = vpack.c.bf16 %v397, %v396
  %v428 = vpack.c.bf16 %v399, %v398
  %v429 = vpack.c.bf16 %v401, %v400
  %v430 = vpack.c.bf16 %v403, %v402
  %v431 = vpack.c.bf16 %v405, %v404
  %v432 = vpack.c.bf16 %v407, %v406
  %v433 = vpack.c.bf16 %v409, %v408
  %v434 = vpack.c.bf16 %v411, %v410
  %v435 = vpack.c.bf16 %v413, %v412
  %v436 = vpack.c.bf16 %v415, %v414
  %v437 = vpack.c.bf16 %v417, %v416
  %v438 = vpack.c.bf16 %v419, %v418
  %v439 = vpack.c.bf16 %v421, %v420
  %v440 = vpack.c.bf16 %v423, %v422
  %v441 = vpack.c.bf16 %v425, %v424
  %v446 = vunpack.c.l.b16 %v20
  %v447 = vunpack.c.l.b16 %v21
  %v448 = vunpack.c.l.b16 %v22
  %v449 = vunpack.c.l.b16 %v23
  %v450 = vpack.c.b16 %v447, %v446
  %v451 = vpack.c.b16 %v449, %v448
  %v455 = vsel %vm184, %v426, 0
  %v458 = vsel %vm184, %v427, 0
  %v461 = vsel %vm184, %v428, 0
  %v464 = vsel %vm184, %v429, 0
  %v467 = vsel %vm184, %v430, 0
  %v470 = vsel %vm184, %v431, 0
  %v473 = vsel %vm184, %v432, 0
  %v476 = vsel %vm184, %v433, 0
  %v479 = vsel %vm184, %v434, 0
  %v482 = vsel %vm184, %v435, 0
  %v485 = vsel %vm184, %v436, 0
  %v488 = vsel %vm184, %v437, 0
  %v491 = vsel %vm184, %v438, 0
  %v494 = vsel %vm184, %v439, 0
  %v497 = vsel %vm184, %v440, 0
  %v500 = vsel %vm184, %v441, 0
  %502 = vmatprep.subr.bf16.mxu0 0
  %503 = vmatpush1.bf16.msra.mxu0 0
  %504 = vmatprep.subr.bf16.mxu0 0
  %505 = vmatpush1.bf16.msra.mxu0 0
  %506 = vmatprep.subr.bf16.mxu0 0
  %507 = vmatpush1.bf16.msra.mxu0 0
  %508 = vmatprep.subr.bf16.mxu0 0
  %509 = vmatpush1.bf16.msra.mxu0 0
  %510 = vmatprep.subr.bf16.mxu0 0
  %511 = vmatpush1.bf16.msra.mxu0 0
  %512 = vmatprep.subr.bf16.mxu0 0
  %513 = vmatpush1.bf16.msra.mxu0 0
  %514 = vmatprep.subr.bf16.mxu0 0
  %515 = vmatpush1.bf16.msra.mxu0 %v451
  %516 = vmatprep.subr.bf16.mxu0 0
  %517 = vmatpush1.bf16.msra.mxu0 %v450
  %518 = vmatprep.subr.bf16.mxu0 0
  %519 = vmatpush2.bf16.msra.mxu0 0
  %520 = vmatprep.subr.bf16.mxu0 0
  %521 = vmatpush2.bf16.msra.mxu0 0
  %522 = vmatprep.subr.bf16.mxu0 0
  %523 = vmatpush2.bf16.msra.mxu0 0
  %524 = vmatprep.subr.bf16.mxu0 0
  %525 = vmatpush2.bf16.msra.mxu0 0
  %526 = vmatprep.subr.bf16.mxu0 0
  %527 = vmatpush2.bf16.msra.mxu0 0
  %528 = vmatprep.subr.bf16.mxu0 0
  %529 = vmatpush2.bf16.msra.mxu0 0
  %530 = vmatprep.subr.bf16.mxu0 0
  %531 = vmatpush2.bf16.msra.mxu0 0
  %532 = vmatprep.subr.bf16.mxu0 0
  %533 = vmatpush2.bf16.msra.mxu0 0
  %534 = vmatprep.mubr.bf16.mxu0 0
  %535 = vmatmul.mubr.bf16.gmra.mxu0 %v455
  %v536 = vpop.f32.mrf.mxu0
  %v537 = vadd.f32 %v47, %v536
  %v538 = vpop.f32.mrf.mxu0
  %v539 = vpop.f32.mrf.mxu0
  %v540 = vadd.f32 %v47, %v539
  %v541 = vpop.f32.mrf.mxu0
  %542 = vmatprep.mubr.bf16.mxu0 0
  %543 = vmatmul.mubr.bf16.gmra.mxu0 %v458
  %v544 = vpop.f32.mrf.mxu0
  %v545 = vadd.f32 %v47, %v544
  %v546 = vpop.f32.mrf.mxu0
  %v547 = vpop.f32.mrf.mxu0
  %v548 = vadd.f32 %v47, %v547
  %v549 = vpop.f32.mrf.mxu0
  %550 = vmatprep.mubr.bf16.mxu0 0
  %551 = vmatmul.mubr.bf16.gmra.mxu0 %v461
  %v552 = vpop.f32.mrf.mxu0
  %v553 = vadd.f32 %v47, %v552
  %v554 = vpop.f32.mrf.mxu0
  %v555 = vpop.f32.mrf.mxu0
  %v556 = vadd.f32 %v47, %v555
  %v557 = vpop.f32.mrf.mxu0
  %558 = vmatprep.mubr.bf16.mxu0 0
  %559 = vmatmul.mubr.bf16.gmra.mxu0 %v464
  %v560 = vpop.f32.mrf.mxu0
  %v561 = vadd.f32 %v47, %v560
  %v562 = vpop.f32.mrf.mxu0
  %v563 = vpop.f32.mrf.mxu0
  %v564 = vadd.f32 %v47, %v563
  %v565 = vpop.f32.mrf.mxu0
  %566 = vmatprep.mubr.bf16.mxu0 0
  %567 = vmatmul.mubr.bf16.gmra.mxu0 %v467
  %v568 = vpop.f32.mrf.mxu0
  %v569 = vadd.f32 %v47, %v568
  %v570 = vpop.f32.mrf.mxu0
  %v571 = vpop.f32.mrf.mxu0
  %v572 = vadd.f32 %v47, %v571
  %v573 = vpop.f32.mrf.mxu0
  %574 = vmatprep.mubr.bf16.mxu0 0
  %575 = vmatmul.mubr.bf16.gmra.mxu0 %v470
  %v576 = vpop.f32.mrf.mxu0
  %v577 = vadd.f32 %v47, %v576
  %v578 = vpop.f32.mrf.mxu0
  %v579 = vpop.f32.mrf.mxu0
  %v580 = vadd.f32 %v47, %v579
  %v581 = vpop.f32.mrf.mxu0
  %582 = vmatprep.mubr.bf16.mxu0 0
  %583 = vmatmul.mubr.bf16.gmra.mxu0 %v473
  %v584 = vpop.f32.mrf.mxu0
  %v585 = vadd.f32 %v47, %v584
  %v586 = vpop.f32.mrf.mxu0
  %v587 = vpop.f32.mrf.mxu0
  %v588 = vadd.f32 %v47, %v587
  %v589 = vpop.f32.mrf.mxu0
  %590 = vmatprep.mubr.bf16.mxu0 0
  %591 = vmatmul.mubr.bf16.gmra.mxu0 %v476
  %v592 = vpop.f32.mrf.mxu0
  %v593 = vadd.f32 %v47, %v592
  %v594 = vpop.f32.mrf.mxu0
  %v595 = vpop.f32.mrf.mxu0
  %v596 = vadd.f32 %v47, %v595
  %v597 = vpop.f32.mrf.mxu0
  %598 = vmatprep.mubr.bf16.mxu0 0
  %599 = vmatmul.mubr.bf16.gmra.mxu0 %v479
  %v600 = vpop.f32.mrf.mxu0
  %v601 = vadd.f32 %v47, %v600
  %v602 = vpop.f32.mrf.mxu0
  %v603 = vpop.f32.mrf.mxu0
  %v604 = vadd.f32 %v47, %v603
  %v605 = vpop.f32.mrf.mxu0
  %606 = vmatprep.mubr.bf16.mxu0 0
  %607 = vmatmul.mubr.bf16.gmra.mxu0 %v482
  %v608 = vpop.f32.mrf.mxu0
  %v609 = vadd.f32 %v47, %v608
  %v610 = vpop.f32.mrf.mxu0
  %v611 = vpop.f32.mrf.mxu0
  %v612 = vadd.f32 %v47, %v611
  %v613 = vpop.f32.mrf.mxu0
  %614 = vmatprep.mubr.bf16.mxu0 0
  %615 = vmatmul.mubr.bf16.gmra.mxu0 %v485
  %v616 = vpop.f32.mrf.mxu0
  %v617 = vadd.f32 %v47, %v616
  %v618 = vpop.f32.mrf.mxu0
  %v619 = vpop.f32.mrf.mxu0
  %v620 = vadd.f32 %v47, %v619
  %v621 = vpop.f32.mrf.mxu0
  %622 = vmatprep.mubr.bf16.mxu0 0
  %623 = vmatmul.mubr.bf16.gmra.mxu0 %v488
  %v624 = vpop.f32.mrf.mxu0
  %v625 = vadd.f32 %v47, %v624
  %v626 = vpop.f32.mrf.mxu0
  %v627 = vpop.f32.mrf.mxu0
  %v628 = vadd.f32 %v47, %v627
  %v629 = vpop.f32.mrf.mxu0
  %630 = vmatprep.mubr.bf16.mxu0 0
  %631 = vmatmul.mubr.bf16.gmra.mxu0 %v491
  %v632 = vpop.f32.mrf.mxu0
  %v633 = vadd.f32 %v47, %v632
  %v634 = vpop.f32.mrf.mxu0
  %v635 = vpop.f32.mrf.mxu0
  %v636 = vadd.f32 %v47, %v635
  %v637 = vpop.f32.mrf.mxu0
  %638 = vmatprep.mubr.bf16.mxu0 0
  %639 = vmatmul.mubr.bf16.gmra.mxu0 %v494
  %v640 = vpop.f32.mrf.mxu0
  %v641 = vadd.f32 %v47, %v640
  %v642 = vpop.f32.mrf.mxu0
  %v643 = vpop.f32.mrf.mxu0
  %v644 = vadd.f32 %v47, %v643
  %v645 = vpop.f32.mrf.mxu0
  %646 = vmatprep.mubr.bf16.mxu0 0
  %647 = vmatmul.mubr.bf16.gmra.mxu0 %v497
  %v648 = vpop.f32.mrf.mxu0
  %v649 = vadd.f32 %v47, %v648
  %v650 = vpop.f32.mrf.mxu0
  %v651 = vpop.f32.mrf.mxu0
  %v652 = vadd.f32 %v47, %v651
  %v653 = vpop.f32.mrf.mxu0
  %654 = vmatprep.mubr.bf16.mxu0 0
  %655 = vmatmul.mubr.bf16.gmra.mxu0 %v500
  %v656 = vpop.f32.mrf.mxu0
  %v657 = vadd.f32 %v47, %v656
  %v658 = vpop.f32.mrf.mxu0
  %v659 = vpop.f32.mrf.mxu0
  %v660 = vadd.f32 %v47, %v659
  %v661 = vpop.f32.mrf.mxu0
  %662 = vdwg.mxu0
  %v663 = vmax.f32 %v537, 0.0
  %v664 = vmax.f32 %v540, 0.0
  %v665 = vmax.f32 %v545, 0.0
  %v666 = vmax.f32 %v548, 0.0
  %v667 = vmax.f32 %v553, 0.0
  %v668 = vmax.f32 %v556, 0.0
  %v669 = vmax.f32 %v561, 0.0
  %v670 = vmax.f32 %v564, 0.0
  %v671 = vmax.f32 %v569, 0.0
  %v672 = vmax.f32 %v572, 0.0
  %v673 = vmax.f32 %v577, 0.0
  %v674 = vmax.f32 %v580, 0.0
  %v675 = vmax.f32 %v585, 0.0
  %v676 = vmax.f32 %v588, 0.0
  %v677 = vmax.f32 %v593, 0.0
  %v678 = vmax.f32 %v596, 0.0
  %v679 = vmax.f32 %v601, 0.0
  %v680 = vmax.f32 %v604, 0.0
  %v681 = vmax.f32 %v609, 0.0
  %v682 = vmax.f32 %v612, 0.0
  %v683 = vmax.f32 %v617, 0.0
  %v684 = vmax.f32 %v620, 0.0
  %v685 = vmax.f32 %v625, 0.0
  %v686 = vmax.f32 %v628, 0.0
  %v687 = vmax.f32 %v633, 0.0
  %v688 = vmax.f32 %v636, 0.0
  %v689 = vmax.f32 %v641, 0.0
  %v690 = vmax.f32 %v644, 0.0
  %v691 = vmax.f32 %v649, 0.0
  %v692 = vmax.f32 %v652, 0.0
  %v693 = vmax.f32 %v657, 0.0
  %v694 = vmax.f32 %v660, 0.0
  %v695 = vpack.c.bf16 %v664, %v663
  %v696 = vpack.c.bf16 %v666, %v665
  %v697 = vpack.c.bf16 %v668, %v667
  %v698 = vpack.c.bf16 %v670, %v669
  %v699 = vpack.c.bf16 %v672, %v671
  %v700 = vpack.c.bf16 %v674, %v673
  %v701 = vpack.c.bf16 %v676, %v675
  %v702 = vpack.c.bf16 %v678, %v677
  %v703 = vpack.c.bf16 %v680, %v679
  %v704 = vpack.c.bf16 %v682, %v681
  %v705 = vpack.c.bf16 %v684, %v683
  %v706 = vpack.c.bf16 %v686, %v685
  %v707 = vpack.c.bf16 %v688, %v687
  %v708 = vpack.c.bf16 %v690, %v689
  %v709 = vpack.c.bf16 %v692, %v691
  %v710 = vpack.c.bf16 %v694, %v693
  %v715 = vunpack.c.l.b16 %v25
  %v716 = vunpack.c.l.b16 %v26
  %v717 = vunpack.c.l.b16 %v27
  %v718 = vunpack.c.l.b16 %v28
  %v719 = vpack.c.b16 %v716, %v715
  %v720 = vpack.c.b16 %v718, %v717
  %v724 = vsel %vm184, %v695, 0
  %v727 = vsel %vm184, %v696, 0
  %v730 = vsel %vm184, %v697, 0
  %v733 = vsel %vm184, %v698, 0
  %v736 = vsel %vm184, %v699, 0
  %v739 = vsel %vm184, %v700, 0
  %v742 = vsel %vm184, %v701, 0
  %v745 = vsel %vm184, %v702, 0
  %v748 = vsel %vm184, %v703, 0
  %v751 = vsel %vm184, %v704, 0
  %v754 = vsel %vm184, %v705, 0
  %v757 = vsel %vm184, %v706, 0
  %v760 = vsel %vm184, %v707, 0
  %v763 = vsel %vm184, %v708, 0
  %v766 = vsel %vm184, %v709, 0
  %v769 = vsel %vm184, %v710, 0
  %771 = vmatprep.subr.bf16.mxu0 0
  %772 = vmatpush1.bf16.msra.mxu0 0
  %773 = vmatprep.subr.bf16.mxu0 0
  %774 = vmatpush1.bf16.msra.mxu0 0
  %775 = vmatprep.subr.bf16.mxu0 0
  %776 = vmatpush1.bf16.msra.mxu0 0
  %777 = vmatprep.subr.bf16.mxu0 0
  %778 = vmatpush1.bf16.msra.mxu0 0
  %779 = vmatprep.subr.bf16.mxu0 0
  %780 = vmatpush1.bf16.msra.mxu0 0
  %781 = vmatprep.subr.bf16.mxu0 0
  %782 = vmatpush1.bf16.msra.mxu0 0
  %783 = vmatprep.subr.bf16.mxu0 0
  %784 = vmatpush1.bf16.msra.mxu0 %v720
  %785 = vmatprep.subr.bf16.mxu0 0
  %786 = vmatpush1.bf16.msra.mxu0 %v719
  %787 = vmatprep.subr.bf16.mxu0 0
  %788 = vmatpush2.bf16.msra.mxu0 0
  %789 = vmatprep.subr.bf16.mxu0 0
  %790 = vmatpush2.bf16.msra.mxu0 0
  %791 = vmatprep.subr.bf16.mxu0 0
  %792 = vmatpush2.bf16.msra.mxu0 0
  %793 = vmatprep.subr.bf16.mxu0 0
  %794 = vmatpush2.bf16.msra.mxu0 0
  %795 = vmatprep.subr.bf16.mxu0 0
  %796 = vmatpush2.bf16.msra.mxu0 0
  %797 = vmatprep.subr.bf16.mxu0 0
  %798 = vmatpush2.bf16.msra.mxu0 0
  %799 = vmatprep.subr.bf16.mxu0 0
  %800 = vmatpush2.bf16.msra.mxu0 0
  %801 = vmatprep.subr.bf16.mxu0 0
  %802 = vmatpush2.bf16.msra.mxu0 0
  %803 = vmatprep.mubr.bf16.mxu0 0
  %804 = vmatmul.mubr.bf16.gmra.mxu0 %v724
  %v805 = vpop.f32.mrf.mxu0
  %v806 = vadd.f32 %v51, %v805
  %v807 = vpop.f32.mrf.mxu0
  %v808 = vpop.f32.mrf.mxu0
  %v809 = vadd.f32 %v51, %v808
  %v810 = vpop.f32.mrf.mxu0
  %811 = vmatprep.mubr.bf16.mxu0 0
  %812 = vmatmul.mubr.bf16.gmra.mxu0 %v727
  %v813 = vpop.f32.mrf.mxu0
  %v814 = vadd.f32 %v51, %v813
  %v815 = vpop.f32.mrf.mxu0
  %v816 = vpop.f32.mrf.mxu0
  %v817 = vadd.f32 %v51, %v816
  %v818 = vpop.f32.mrf.mxu0
  %819 = vmatprep.mubr.bf16.mxu0 0
  %820 = vmatmul.mubr.bf16.gmra.mxu0 %v730
  %v821 = vpop.f32.mrf.mxu0
  %v822 = vadd.f32 %v51, %v821
  %v823 = vpop.f32.mrf.mxu0
  %v824 = vpop.f32.mrf.mxu0
  %v825 = vadd.f32 %v51, %v824
  %v826 = vpop.f32.mrf.mxu0
  %827 = vmatprep.mubr.bf16.mxu0 0
  %828 = vmatmul.mubr.bf16.gmra.mxu0 %v733
  %v829 = vpop.f32.mrf.mxu0
  %v830 = vadd.f32 %v51, %v829
  %v831 = vpop.f32.mrf.mxu0
  %v832 = vpop.f32.mrf.mxu0
  %v833 = vadd.f32 %v51, %v832
  %v834 = vpop.f32.mrf.mxu0
  %835 = vmatprep.mubr.bf16.mxu0 0
  %836 = vmatmul.mubr.bf16.gmra.mxu0 %v736
  %v837 = vpop.f32.mrf.mxu0
  %v838 = vadd.f32 %v51, %v837
  %v839 = vpop.f32.mrf.mxu0
  %v840 = vpop.f32.mrf.mxu0
  %v841 = vadd.f32 %v51, %v840
  %v842 = vpop.f32.mrf.mxu0
  %843 = vmatprep.mubr.bf16.mxu0 0
  %844 = vmatmul.mubr.bf16.gmra.mxu0 %v739
  %v845 = vpop.f32.mrf.mxu0
  %v846 = vadd.f32 %v51, %v845
  %v847 = vpop.f32.mrf.mxu0
  %v848 = vpop.f32.mrf.mxu0
  %v849 = vadd.f32 %v51, %v848
  %v850 = vpop.f32.mrf.mxu0
  %851 = vmatprep.mubr.bf16.mxu0 0
  %852 = vmatmul.mubr.bf16.gmra.mxu0 %v742
  %v853 = vpop.f32.mrf.mxu0
  %v854 = vadd.f32 %v51, %v853
  %v855 = vpop.f32.mrf.mxu0
  %v856 = vpop.f32.mrf.mxu0
  %v857 = vadd.f32 %v51, %v856
  %v858 = vpop.f32.mrf.mxu0
  %859 = vmatprep.mubr.bf16.mxu0 0
  %860 = vmatmul.mubr.bf16.gmra.mxu0 %v745
  %v861 = vpop.f32.mrf.mxu0
  %v862 = vadd.f32 %v51, %v861
  %v863 = vpop.f32.mrf.mxu0
  %v864 = vpop.f32.mrf.mxu0
  %v865 = vadd.f32 %v51, %v864
  %v866 = vpop.f32.mrf.mxu0
  %867 = vmatprep.mubr.bf16.mxu0 0
  %868 = vmatmul.mubr.bf16.gmra.mxu0 %v748
  %v869 = vpop.f32.mrf.mxu0
  %v870 = vadd.f32 %v51, %v869
  %v871 = vpop.f32.mrf.mxu0
  %v872 = vpop.f32.mrf.mxu0
  %v873 = vadd.f32 %v51, %v872
  %v874 = vpop.f32.mrf.mxu0
  %875 = vmatprep.mubr.bf16.mxu0 0
  %876 = vmatmul.mubr.bf16.gmra.mxu0 %v751
  %v877 = vpop.f32.mrf.mxu0
  %v878 = vadd.f32 %v51, %v877
  %v879 = vpop.f32.mrf.mxu0
  %v880 = vpop.f32.mrf.mxu0
  %v881 = vadd.f32 %v51, %v880
  %v882 = vpop.f32.mrf.mxu0
  %883 = vmatprep.mubr.bf16.mxu0 0
  %884 = vmatmul.mubr.bf16.gmra.mxu0 %v754
  %v885 = vpop.f32.mrf.mxu0
  %v886 = vadd.f32 %v51, %v885
  %v887 = vpop.f32.mrf.mxu0
  %v888 = vpop.f32.mrf.mxu0
  %v889 = vadd.f32 %v51, %v888
  %v890 = vpop.f32.mrf.mxu0
  %891 = vmatprep.mubr.bf16.mxu0 0
  %892 = vmatmul.mubr.bf16.gmra.mxu0 %v757
  %v893 = vpop.f32.mrf.mxu0
  %v894 = vadd.f32 %v51, %v893
  %v895 = vpop.f32.mrf.mxu0
  %v896 = vpop.f32.mrf.mxu0
  %v897 = vadd.f32 %v51, %v896
  %v898 = vpop.f32.mrf.mxu0
  %899 = vmatprep.mubr.bf16.mxu0 0
  %900 = vmatmul.mubr.bf16.gmra.mxu0 %v760
  %v901 = vpop.f32.mrf.mxu0
  %v902 = vadd.f32 %v51, %v901
  %v903 = vpop.f32.mrf.mxu0
  %v904 = vpop.f32.mrf.mxu0
  %v905 = vadd.f32 %v51, %v904
  %v906 = vpop.f32.mrf.mxu0
  %907 = vmatprep.mubr.bf16.mxu0 0
  %908 = vmatmul.mubr.bf16.gmra.mxu0 %v763
  %v909 = vpop.f32.mrf.mxu0
  %v910 = vadd.f32 %v51, %v909
  %v911 = vpop.f32.mrf.mxu0
  %v912 = vpop.f32.mrf.mxu0
  %v913 = vadd.f32 %v51, %v912
  %v914 = vpop.f32.mrf.mxu0
  %915 = vmatprep.mubr.bf16.mxu0 0
  %916 = vmatmul.mubr.bf16.gmra.mxu0 %v766
  %v917 = vpop.f32.mrf.mxu0
  %v918 = vadd.f32 %v51, %v917
  %v919 = vpop.f32.mrf.mxu0
  %v920 = vpop.f32.mrf.mxu0
  %v921 = vadd.f32 %v51, %v920
  %v922 = vpop.f32.mrf.mxu0
  %923 = vmatprep.mubr.bf16.mxu0 0
  %924 = vmatmul.mubr.bf16.gmra.mxu0 %v769
  %v925 = vpop.f32.mrf.mxu0
  %v926 = vadd.f32 %v51, %v925
  %v927 = vpop.f32.mrf.mxu0
  %v928 = vpop.f32.mrf.mxu0
  %v929 = vadd.f32 %v51, %v928
  %v930 = vpop.f32.mrf.mxu0
  %931 = vdwg.mxu0
  %v932 = vmax.f32 %v806, 0.0
  %v933 = vmax.f32 %v809, 0.0
  %v934 = vmax.f32 %v814, 0.0
  %v935 = vmax.f32 %v817, 0.0
  %v936 = vmax.f32 %v822, 0.0
  %v937 = vmax.f32 %v825, 0.0
  %v938 = vmax.f32 %v830, 0.0
  %v939 = vmax.f32 %v833, 0.0
  %v940 = vmax.f32 %v838, 0.0
  %v941 = vmax.f32 %v841, 0.0
  %v942 = vmax.f32 %v846, 0.0
  %v943 = vmax.f32 %v849, 0.0
  %v944 = vmax.f32 %v854, 0.0
  %v945 = vmax.f32 %v857, 0.0
  %v946 = vmax.f32 %v862, 0.0
  %v947 = vmax.f32 %v865, 0.0
  %v948 = vmax.f32 %v870, 0.0
  %v949 = vmax.f32 %v873, 0.0
  %v950 = vmax.f32 %v878, 0.0
  %v951 = vmax.f32 %v881, 0.0
  %v952 = vmax.f32 %v886, 0.0
  %v953 = vmax.f32 %v889, 0.0
  %v954 = vmax.f32 %v894, 0.0
  %v955 = vmax.f32 %v897, 0.0
  %v956 = vmax.f32 %v902, 0.0
  %v957 = vmax.f32 %v905, 0.0
  %v958 = vmax.f32 %v910, 0.0
  %v959 = vmax.f32 %v913, 0.0
  %v960 = vmax.f32 %v918, 0.0
  %v961 = vmax.f32 %v921, 0.0
  %v962 = vmax.f32 %v926, 0.0
  %v963 = vmax.f32 %v929, 0.0
  %v964 = vpack.c.bf16 %v933, %v932
  %v965 = vpack.c.bf16 %v935, %v934
  %v966 = vpack.c.bf16 %v937, %v936
  %v967 = vpack.c.bf16 %v939, %v938
  %v968 = vpack.c.bf16 %v941, %v940
  %v969 = vpack.c.bf16 %v943, %v942
  %v970 = vpack.c.bf16 %v945, %v944
  %v971 = vpack.c.bf16 %v947, %v946
  %v972 = vpack.c.bf16 %v949, %v948
  %v973 = vpack.c.bf16 %v951, %v950
  %v974 = vpack.c.bf16 %v953, %v952
  %v975 = vpack.c.bf16 %v955, %v954
  %v976 = vpack.c.bf16 %v957, %v956
  %v977 = vpack.c.bf16 %v959, %v958
  %v978 = vpack.c.bf16 %v961, %v960
  %v979 = vpack.c.bf16 %v963, %v962
  %v984 = vunpack.c.l.b16 %v30
  %v985 = vunpack.c.l.b16 %v31
  %v986 = vunpack.c.l.b16 %v32
  %v987 = vunpack.c.l.b16 %v33
  %v988 = vpack.c.b16 %v985, %v984
  %v989 = vpack.c.b16 %v987, %v986
  %v993 = vsel %vm184, %v964, 0
  %v996 = vsel %vm184, %v965, 0
  %v999 = vsel %vm184, %v966, 0
  %v1002 = vsel %vm184, %v967, 0
  %v1005 = vsel %vm184, %v968, 0
  %v1008 = vsel %vm184, %v969, 0
  %v1011 = vsel %vm184, %v970, 0
  %v1014 = vsel %vm184, %v971, 0
  %v1017 = vsel %vm184, %v972, 0
  %v1020 = vsel %vm184, %v973, 0
  %v1023 = vsel %vm184, %v974, 0
  %v1026 = vsel %vm184, %v975, 0
  %v1029 = vsel %vm184, %v976, 0
  %v1032 = vsel %vm184, %v977, 0
  %v1035 = vsel %vm184, %v978, 0
  %v1038 = vsel %vm184, %v979, 0
  %1040 = vmatprep.subr.bf16.mxu0 0
  %1041 = vmatpush1.bf16.msra.mxu0 0
  %1042 = vmatprep.subr.bf16.mxu0 0
  %1043 = vmatpush1.bf16.msra.mxu0 0
  %1044 = vmatprep.subr.bf16.mxu0 0
  %1045 = vmatpush1.bf16.msra.mxu0 0
  %1046 = vmatprep.subr.bf16.mxu0 0
  %1047 = vmatpush1.bf16.msra.mxu0 0
  %1048 = vmatprep.subr.bf16.mxu0 0
  %1049 = vmatpush1.bf16.msra.mxu0 0
  %1050 = vmatprep.subr.bf16.mxu0 0
  %1051 = vmatpush1.bf16.msra.mxu0 0
  %1052 = vmatprep.subr.bf16.mxu0 0
  %1053 = vmatpush1.bf16.msra.mxu0 %v989
  %1054 = vmatprep.subr.bf16.mxu0 0
  %1055 = vmatpush1.bf16.msra.mxu0 %v988
  %1056 = vmatprep.subr.bf16.mxu0 0
  %1057 = vmatpush2.bf16.msra.mxu0 0
  %1058 = vmatprep.subr.bf16.mxu0 0
  %1059 = vmatpush2.bf16.msra.mxu0 0
  %1060 = vmatprep.subr.bf16.mxu0 0
  %1061 = vmatpush2.bf16.msra.mxu0 0
  %1062 = vmatprep.subr.bf16.mxu0 0
  %1063 = vmatpush2.bf16.msra.mxu0 0
  %1064 = vmatprep.subr.bf16.mxu0 0
  %1065 = vmatpush2.bf16.msra.mxu0 0
  %1066 = vmatprep.subr.bf16.mxu0 0
  %1067 = vmatpush2.bf16.msra.mxu0 0
  %1068 = vmatprep.subr.bf16.mxu0 0
  %1069 = vmatpush2.bf16.msra.mxu0 0
  %1070 = vmatprep.subr.bf16.mxu0 0
  %1071 = vmatpush2.bf16.msra.mxu0 0
  %1072 = vmatprep.mubr.bf16.mxu0 0
  %1073 = vmatmul.mubr.bf16.gmra.mxu0 %v993
  %v1074 = vpop.f32.mrf.mxu0
  %v1075 = vadd.f32 %v55, %v1074
  %v1076 = vpop.f32.mrf.mxu0
  %v1077 = vpop.f32.mrf.mxu0
  %v1078 = vadd.f32 %v55, %v1077
  %v1079 = vpop.f32.mrf.mxu0
  %1080 = vmatprep.mubr.bf16.mxu0 0
  %1081 = vmatmul.mubr.bf16.gmra.mxu0 %v996
  %v1082 = vpop.f32.mrf.mxu0
  %v1083 = vadd.f32 %v55, %v1082
  %v1084 = vpop.f32.mrf.mxu0
  %v1085 = vpop.f32.mrf.mxu0
  %v1086 = vadd.f32 %v55, %v1085
  %v1087 = vpop.f32.mrf.mxu0
  %1088 = vmatprep.mubr.bf16.mxu0 0
  %1089 = vmatmul.mubr.bf16.gmra.mxu0 %v999
  %v1090 = vpop.f32.mrf.mxu0
  %v1091 = vadd.f32 %v55, %v1090
  %v1092 = vpop.f32.mrf.mxu0
  %v1093 = vpop.f32.mrf.mxu0
  %v1094 = vadd.f32 %v55, %v1093
  %v1095 = vpop.f32.mrf.mxu0
  %1096 = vmatprep.mubr.bf16.mxu0 0
  %1097 = vmatmul.mubr.bf16.gmra.mxu0 %v1002
  %v1098 = vpop.f32.mrf.mxu0
  %v1099 = vadd.f32 %v55, %v1098
  %v1100 = vpop.f32.mrf.mxu0
  %v1101 = vpop.f32.mrf.mxu0
  %v1102 = vadd.f32 %v55, %v1101
  %v1103 = vpop.f32.mrf.mxu0
  %1104 = vmatprep.mubr.bf16.mxu0 0
  %1105 = vmatmul.mubr.bf16.gmra.mxu0 %v1005
  %v1106 = vpop.f32.mrf.mxu0
  %v1107 = vadd.f32 %v55, %v1106
  %v1108 = vpop.f32.mrf.mxu0
  %v1109 = vpop.f32.mrf.mxu0
  %v1110 = vadd.f32 %v55, %v1109
  %v1111 = vpop.f32.mrf.mxu0
  %1112 = vmatprep.mubr.bf16.mxu0 0
  %1113 = vmatmul.mubr.bf16.gmra.mxu0 %v1008
  %v1114 = vpop.f32.mrf.mxu0
  %v1115 = vadd.f32 %v55, %v1114
  %v1116 = vpop.f32.mrf.mxu0
  %v1117 = vpop.f32.mrf.mxu0
  %v1118 = vadd.f32 %v55, %v1117
  %v1119 = vpop.f32.mrf.mxu0
  %1120 = vmatprep.mubr.bf16.mxu0 0
  %1121 = vmatmul.mubr.bf16.gmra.mxu0 %v1011
  %v1122 = vpop.f32.mrf.mxu0
  %v1123 = vadd.f32 %v55, %v1122
  %v1124 = vpop.f32.mrf.mxu0
  %v1125 = vpop.f32.mrf.mxu0
  %v1126 = vadd.f32 %v55, %v1125
  %v1127 = vpop.f32.mrf.mxu0
  %1128 = vmatprep.mubr.bf16.mxu0 0
  %1129 = vmatmul.mubr.bf16.gmra.mxu0 %v1014
  %v1130 = vpop.f32.mrf.mxu0
  %v1131 = vadd.f32 %v55, %v1130
  %v1132 = vpop.f32.mrf.mxu0
  %v1133 = vpop.f32.mrf.mxu0
  %v1134 = vadd.f32 %v55, %v1133
  %v1135 = vpop.f32.mrf.mxu0
  %1136 = vmatprep.mubr.bf16.mxu0 0
  %1137 = vmatmul.mubr.bf16.gmra.mxu0 %v1017
  %v1138 = vpop.f32.mrf.mxu0
  %v1139 = vadd.f32 %v55, %v1138
  %v1140 = vpop.f32.mrf.mxu0
  %v1141 = vpop.f32.mrf.mxu0
  %v1142 = vadd.f32 %v55, %v1141
  %v1143 = vpop.f32.mrf.mxu0
  %1144 = vmatprep.mubr.bf16.mxu0 0
  %1145 = vmatmul.mubr.bf16.gmra.mxu0 %v1020
  %v1146 = vpop.f32.mrf.mxu0
  %v1147 = vadd.f32 %v55, %v1146
  %v1148 = vpop.f32.mrf.mxu0
  %v1149 = vpop.f32.mrf.mxu0
  %v1150 = vadd.f32 %v55, %v1149
  %v1151 = vpop.f32.mrf.mxu0
  %1152 = vmatprep.mubr.bf16.mxu0 0
  %1153 = vmatmul.mubr.bf16.gmra.mxu0 %v1023
  %v1154 = vpop.f32.mrf.mxu0
  %v1155 = vadd.f32 %v55, %v1154
  %v1156 = vpop.f32.mrf.mxu0
  %v1157 = vpop.f32.mrf.mxu0
  %v1158 = vadd.f32 %v55, %v1157
  %v1159 = vpop.f32.mrf.mxu0
  %1160 = vmatprep.mubr.bf16.mxu0 0
  %1161 = vmatmul.mubr.bf16.gmra.mxu0 %v1026
  %v1162 = vpop.f32.mrf.mxu0
  %v1163 = vadd.f32 %v55, %v1162
  %v1164 = vpop.f32.mrf.mxu0
  %v1165 = vpop.f32.mrf.mxu0
  %v1166 = vadd.f32 %v55, %v1165
  %v1167 = vpop.f32.mrf.mxu0
  %1168 = vmatprep.mubr.bf16.mxu0 0
  %1169 = vmatmul.mubr.bf16.gmra.mxu0 %v1029
  %v1170 = vpop.f32.mrf.mxu0
  %v1171 = vadd.f32 %v55, %v1170
  %v1172 = vpop.f32.mrf.mxu0
  %v1173 = vpop.f32.mrf.mxu0
  %v1174 = vadd.f32 %v55, %v1173
  %v1175 = vpop.f32.mrf.mxu0
  %1176 = vmatprep.mubr.bf16.mxu0 0
  %1177 = vmatmul.mubr.bf16.gmra.mxu0 %v1032
  %v1178 = vpop.f32.mrf.mxu0
  %v1179 = vadd.f32 %v55, %v1178
  %v1180 = vpop.f32.mrf.mxu0
  %v1181 = vpop.f32.mrf.mxu0
  %v1182 = vadd.f32 %v55, %v1181
  %v1183 = vpop.f32.mrf.mxu0
  %1184 = vmatprep.mubr.bf16.mxu0 0
  %1185 = vmatmul.mubr.bf16.gmra.mxu0 %v1035
  %v1186 = vpop.f32.mrf.mxu0
  %v1187 = vadd.f32 %v55, %v1186
  %v1188 = vpop.f32.mrf.mxu0
  %v1189 = vpop.f32.mrf.mxu0
  %v1190 = vadd.f32 %v55, %v1189
  %v1191 = vpop.f32.mrf.mxu0
  %1192 = vmatprep.mubr.bf16.mxu0 0
  %1193 = vmatmul.mubr.bf16.gmra.mxu0 %v1038
  %v1194 = vpop.f32.mrf.mxu0
  %v1195 = vadd.f32 %v55, %v1194
  %v1196 = vpop.f32.mrf.mxu0
  %v1197 = vpop.f32.mrf.mxu0
  %v1198 = vadd.f32 %v55, %v1197
  %v1199 = vpop.f32.mrf.mxu0
  %1200 = vdwg.mxu0
  %v1201 = vmax.f32 %v1075, 0.0
  %v1202 = vmax.f32 %v1078, 0.0
  %v1203 = vmax.f32 %v1083, 0.0
  %v1204 = vmax.f32 %v1086, 0.0
  %v1205 = vmax.f32 %v1091, 0.0
  %v1206 = vmax.f32 %v1094, 0.0
  %v1207 = vmax.f32 %v1099, 0.0
  %v1208 = vmax.f32 %v1102, 0.0
  %v1209 = vmax.f32 %v1107, 0.0
  %v1210 = vmax.f32 %v1110, 0.0
  %v1211 = vmax.f32 %v1115, 0.0
  %v1212 = vmax.f32 %v1118, 0.0
  %v1213 = vmax.f32 %v1123, 0.0
  %v1214 = vmax.f32 %v1126, 0.0
  %v1215 = vmax.f32 %v1131, 0.0
  %v1216 = vmax.f32 %v1134, 0.0
  %v1217 = vmax.f32 %v1139, 0.0
  %v1218 = vmax.f32 %v1142, 0.0
  %v1219 = vmax.f32 %v1147, 0.0
  %v1220 = vmax.f32 %v1150, 0.0
  %v1221 = vmax.f32 %v1155, 0.0
  %v1222 = vmax.f32 %v1158, 0.0
  %v1223 = vmax.f32 %v1163, 0.0
  %v1224 = vmax.f32 %v1166, 0.0
  %v1225 = vmax.f32 %v1171, 0.0
  %v1226 = vmax.f32 %v1174, 0.0
  %v1227 = vmax.f32 %v1179, 0.0
  %v1228 = vmax.f32 %v1182, 0.0
  %v1229 = vmax.f32 %v1187, 0.0
  %v1230 = vmax.f32 %v1190, 0.0
  %v1231 = vmax.f32 %v1195, 0.0
  %v1232 = vmax.f32 %v1198, 0.0
  %v1233 = vpack.c.bf16 %v1202, %v1201
  %v1234 = vpack.c.bf16 %v1204, %v1203
  %v1235 = vpack.c.bf16 %v1206, %v1205
  %v1236 = vpack.c.bf16 %v1208, %v1207
  %v1237 = vpack.c.bf16 %v1210, %v1209
  %v1238 = vpack.c.bf16 %v1212, %v1211
  %v1239 = vpack.c.bf16 %v1214, %v1213
  %v1240 = vpack.c.bf16 %v1216, %v1215
  %v1241 = vpack.c.bf16 %v1218, %v1217
  %v1242 = vpack.c.bf16 %v1220, %v1219
  %v1243 = vpack.c.bf16 %v1222, %v1221
  %v1244 = vpack.c.bf16 %v1224, %v1223
  %v1245 = vpack.c.bf16 %v1226, %v1225
  %v1246 = vpack.c.bf16 %v1228, %v1227
  %v1247 = vpack.c.bf16 %v1230, %v1229
  %v1248 = vpack.c.bf16 %v1232, %v1231
  %v1253 = vunpack.c.l.b16 %v35
  %v1254 = vunpack.c.l.b16 %v36
  %v1255 = vunpack.c.l.b16 %v37
  %v1256 = vunpack.c.l.b16 %v38
  %v1257 = vpack.c.b16 %v1254, %v1253
  %v1258 = vpack.c.b16 %v1256, %v1255
  %v1262 = vsel %vm184, %v1233, 0
  %v1265 = vsel %vm184, %v1234, 0
  %v1268 = vsel %vm184, %v1235, 0
  %v1271 = vsel %vm184, %v1236, 0
  %v1274 = vsel %vm184, %v1237, 0
  %v1277 = vsel %vm184, %v1238, 0
  %v1280 = vsel %vm184, %v1239, 0
  %v1283 = vsel %vm184, %v1240, 0
  %v1286 = vsel %vm184, %v1241, 0
  %v1289 = vsel %vm184, %v1242, 0
  %v1292 = vsel %vm184, %v1243, 0
  %v1295 = vsel %vm184, %v1244, 0
  %v1298 = vsel %vm184, %v1245, 0
  %v1301 = vsel %vm184, %v1246, 0
  %v1304 = vsel %vm184, %v1247, 0
  %v1307 = vsel %vm184, %v1248, 0
  %1309 = vmatprep.subr.bf16.mxu0 0
  %1310 = vmatpush1.bf16.msra.mxu0 0
  %1311 = vmatprep.subr.bf16.mxu0 0
  %1312 = vmatpush1.bf16.msra.mxu0 0
  %1313 = vmatprep.subr.bf16.mxu0 0
  %1314 = vmatpush1.bf16.msra.mxu0 0
  %1315 = vmatprep.subr.bf16.mxu0 0
  %1316 = vmatpush1.bf16.msra.mxu0 0
  %1317 = vmatprep.subr.bf16.mxu0 0
  %1318 = vmatpush1.bf16.msra.mxu0 0
  %1319 = vmatprep.subr.bf16.mxu0 0
  %1320 = vmatpush1.bf16.msra.mxu0 0
  %1321 = vmatprep.subr.bf16.mxu0 0
  %1322 = vmatpush1.bf16.msra.mxu0 %v1258
  %1323 = vmatprep.subr.bf16.mxu0 0
  %1324 = vmatpush1.bf16.msra.mxu0 %v1257
  %1325 = vmatprep.subr.bf16.mxu0 0
  %1326 = vmatpush2.bf16.msra.mxu0 0
  %1327 = vmatprep.subr.bf16.mxu0 0
  %1328 = vmatpush2.bf16.msra.mxu0 0
  %1329 = vmatprep.subr.bf16.mxu0 0
  %1330 = vmatpush2.bf16.msra.mxu0 0
  %1331 = vmatprep.subr.bf16.mxu0 0
  %1332 = vmatpush2.bf16.msra.mxu0 0
  %1333 = vmatprep.subr.bf16.mxu0 0
  %1334 = vmatpush2.bf16.msra.mxu0 0
  %1335 = vmatprep.subr.bf16.mxu0 0
  %1336 = vmatpush2.bf16.msra.mxu0 0
  %1337 = vmatprep.subr.bf16.mxu0 0
  %1338 = vmatpush2.bf16.msra.mxu0 0
  %1339 = vmatprep.subr.bf16.mxu0 0
  %1340 = vmatpush2.bf16.msra.mxu0 0
  %1341 = vmatprep.mubr.bf16.mxu0 0
  %1342 = vmatmul.mubr.bf16.gmra.mxu0 %v1262
  %v1343 = vpop.f32.mrf.mxu0
  %v1344 = vadd.f32 %v59, %v1343
  %v1345 = vpop.f32.mrf.mxu0
  %v1346 = vpop.f32.mrf.mxu0
  %v1347 = vadd.f32 %v59, %v1346
  %v1348 = vpop.f32.mrf.mxu0
  %1349 = vmatprep.mubr.bf16.mxu0 0
  %1350 = vmatmul.mubr.bf16.gmra.mxu0 %v1265
  %v1351 = vpop.f32.mrf.mxu0
  %v1352 = vadd.f32 %v59, %v1351
  %v1353 = vpop.f32.mrf.mxu0
  %v1354 = vpop.f32.mrf.mxu0
  %v1355 = vadd.f32 %v59, %v1354
  %v1356 = vpop.f32.mrf.mxu0
  %1357 = vmatprep.mubr.bf16.mxu0 0
  %1358 = vmatmul.mubr.bf16.gmra.mxu0 %v1268
  %v1359 = vpop.f32.mrf.mxu0
  %v1360 = vadd.f32 %v59, %v1359
  %v1361 = vpop.f32.mrf.mxu0
  %v1362 = vpop.f32.mrf.mxu0
  %v1363 = vadd.f32 %v59, %v1362
  %v1364 = vpop.f32.mrf.mxu0
  %1365 = vmatprep.mubr.bf16.mxu0 0
  %1366 = vmatmul.mubr.bf16.gmra.mxu0 %v1271
  %v1367 = vpop.f32.mrf.mxu0
  %v1368 = vadd.f32 %v59, %v1367
  %v1369 = vpop.f32.mrf.mxu0
  %v1370 = vpop.f32.mrf.mxu0
  %v1371 = vadd.f32 %v59, %v1370
  %v1372 = vpop.f32.mrf.mxu0
  %1373 = vmatprep.mubr.bf16.mxu0 0
  %1374 = vmatmul.mubr.bf16.gmra.mxu0 %v1274
  %v1375 = vpop.f32.mrf.mxu0
  %v1376 = vadd.f32 %v59, %v1375
  %v1377 = vpop.f32.mrf.mxu0
  %v1378 = vpop.f32.mrf.mxu0
  %v1379 = vadd.f32 %v59, %v1378
  %v1380 = vpop.f32.mrf.mxu0
  %1381 = vmatprep.mubr.bf16.mxu0 0
  %1382 = vmatmul.mubr.bf16.gmra.mxu0 %v1277
  %v1383 = vpop.f32.mrf.mxu0
  %v1384 = vadd.f32 %v59, %v1383
  %v1385 = vpop.f32.mrf.mxu0
  %v1386 = vpop.f32.mrf.mxu0
  %v1387 = vadd.f32 %v59, %v1386
  %v1388 = vpop.f32.mrf.mxu0
  %1389 = vmatprep.mubr.bf16.mxu0 0
  %1390 = vmatmul.mubr.bf16.gmra.mxu0 %v1280
  %v1391 = vpop.f32.mrf.mxu0
  %v1392 = vadd.f32 %v59, %v1391
  %v1393 = vpop.f32.mrf.mxu0
  %v1394 = vpop.f32.mrf.mxu0
  %v1395 = vadd.f32 %v59, %v1394
  %v1396 = vpop.f32.mrf.mxu0
  %1397 = vmatprep.mubr.bf16.mxu0 0
  %1398 = vmatmul.mubr.bf16.gmra.mxu0 %v1283
  %v1399 = vpop.f32.mrf.mxu0
  %v1400 = vadd.f32 %v59, %v1399
  %v1401 = vpop.f32.mrf.mxu0
  %v1402 = vpop.f32.mrf.mxu0
  %v1403 = vadd.f32 %v59, %v1402
  %v1404 = vpop.f32.mrf.mxu0
  %1405 = vmatprep.mubr.bf16.mxu0 0
  %1406 = vmatmul.mubr.bf16.gmra.mxu0 %v1286
  %v1407 = vpop.f32.mrf.mxu0
  %v1408 = vadd.f32 %v59, %v1407
  %v1409 = vpop.f32.mrf.mxu0
  %v1410 = vpop.f32.mrf.mxu0
  %v1411 = vadd.f32 %v59, %v1410
  %v1412 = vpop.f32.mrf.mxu0
  %1413 = vmatprep.mubr.bf16.mxu0 0
  %1414 = vmatmul.mubr.bf16.gmra.mxu0 %v1289
  %v1415 = vpop.f32.mrf.mxu0
  %v1416 = vadd.f32 %v59, %v1415
  %v1417 = vpop.f32.mrf.mxu0
  %v1418 = vpop.f32.mrf.mxu0
  %v1419 = vadd.f32 %v59, %v1418
  %v1420 = vpop.f32.mrf.mxu0
  %1421 = vmatprep.mubr.bf16.mxu0 0
  %1422 = vmatmul.mubr.bf16.gmra.mxu0 %v1292
  %v1423 = vpop.f32.mrf.mxu0
  %v1424 = vadd.f32 %v59, %v1423
  %v1425 = vpop.f32.mrf.mxu0
  %v1426 = vpop.f32.mrf.mxu0
  %v1427 = vadd.f32 %v59, %v1426
  %v1428 = vpop.f32.mrf.mxu0
  %1429 = vmatprep.mubr.bf16.mxu0 0
  %1430 = vmatmul.mubr.bf16.gmra.mxu0 %v1295
  %v1431 = vpop.f32.mrf.mxu0
  %v1432 = vadd.f32 %v59, %v1431
  %v1433 = vpop.f32.mrf.mxu0
  %v1434 = vpop.f32.mrf.mxu0
  %v1435 = vadd.f32 %v59, %v1434
  %v1436 = vpop.f32.mrf.mxu0
  %1437 = vmatprep.mubr.bf16.mxu0 0
  %1438 = vmatmul.mubr.bf16.gmra.mxu0 %v1298
  %v1439 = vpop.f32.mrf.mxu0
  %v1440 = vadd.f32 %v59, %v1439
  %v1441 = vpop.f32.mrf.mxu0
  %v1442 = vpop.f32.mrf.mxu0
  %v1443 = vadd.f32 %v59, %v1442
  %v1444 = vpop.f32.mrf.mxu0
  %1445 = vmatprep.mubr.bf16.mxu0 0
  %1446 = vmatmul.mubr.bf16.gmra.mxu0 %v1301
  %v1447 = vpop.f32.mrf.mxu0
  %v1448 = vadd.f32 %v59, %v1447
  %v1449 = vpop.f32.mrf.mxu0
  %v1450 = vpop.f32.mrf.mxu0
  %v1451 = vadd.f32 %v59, %v1450
  %v1452 = vpop.f32.mrf.mxu0
  %1453 = vmatprep.mubr.bf16.mxu0 0
  %1454 = vmatmul.mubr.bf16.gmra.mxu0 %v1304
  %v1455 = vpop.f32.mrf.mxu0
  %v1456 = vadd.f32 %v59, %v1455
  %v1457 = vpop.f32.mrf.mxu0
  %v1458 = vpop.f32.mrf.mxu0
  %v1459 = vadd.f32 %v59, %v1458
  %v1460 = vpop.f32.mrf.mxu0
  %1461 = vmatprep.mubr.bf16.mxu0 0
  %1462 = vmatmul.mubr.bf16.gmra.mxu0 %v1307
  %v1463 = vpop.f32.mrf.mxu0
  %v1464 = vadd.f32 %v59, %v1463
  %v1465 = vpop.f32.mrf.mxu0
  %v1466 = vpop.f32.mrf.mxu0
  %v1467 = vadd.f32 %v59, %v1466
  %v1468 = vpop.f32.mrf.mxu0
  %1469 = vdwg.mxu0
  %v1470 = vxor.u32 %v1344, 2147483648
  %v1471 = vxor.u32 %v1347, 2147483648
  %v1472 = vxor.u32 %v1352, 2147483648
  %v1473 = vxor.u32 %v1355, 2147483648
  %v1474 = vxor.u32 %v1360, 2147483648
  %v1475 = vxor.u32 %v1363, 2147483648
  %v1476 = vxor.u32 %v1368, 2147483648
  %v1477 = vxor.u32 %v1371, 2147483648
  %v1478 = vxor.u32 %v1376, 2147483648
  %v1479 = vxor.u32 %v1379, 2147483648
  %v1480 = vxor.u32 %v1384, 2147483648
  %v1481 = vxor.u32 %v1387, 2147483648
  %v1482 = vxor.u32 %v1392, 2147483648
  %v1483 = vxor.u32 %v1395, 2147483648
  %v1484 = vxor.u32 %v1400, 2147483648
  %v1485 = vxor.u32 %v1403, 2147483648
  %v1486 = vxor.u32 %v1408, 2147483648
  %v1487 = vxor.u32 %v1411, 2147483648
  %v1488 = vxor.u32 %v1416, 2147483648
  %v1489 = vxor.u32 %v1419, 2147483648
  %v1490 = vxor.u32 %v1424, 2147483648
  %v1491 = vxor.u32 %v1427, 2147483648
  %v1492 = vxor.u32 %v1432, 2147483648
  %v1493 = vxor.u32 %v1435, 2147483648
  %v1494 = vxor.u32 %v1440, 2147483648
  %v1495 = vxor.u32 %v1443, 2147483648
  %v1496 = vxor.u32 %v1448, 2147483648
  %v1497 = vxor.u32 %v1451, 2147483648
  %v1498 = vxor.u32 %v1456, 2147483648
  %v1499 = vxor.u32 %v1459, 2147483648
  %v1500 = vxor.u32 %v1464, 2147483648
  %v1501 = vxor.u32 %v1467, 2147483648
  %v1502 = vmul.f32 %v1470, 1.442695
  %v1503 = vpow.pop %v1502
  %v1504 = vmul.f32 %v1471, 1.442695
  %v1505 = vpow.pop %v1504
  %v1506 = vmul.f32 %v1472, 1.442695
  %v1507 = vpow.pop %v1506
  %v1508 = vmul.f32 %v1473, 1.442695
  %v1509 = vpow.pop %v1508
  %v1510 = vmul.f32 %v1474, 1.442695
  %v1511 = vpow.pop %v1510
  %v1512 = vmul.f32 %v1475, 1.442695
  %v1513 = vpow.pop %v1512
  %v1514 = vmul.f32 %v1476, 1.442695
  %v1515 = vpow.pop %v1514
  %v1516 = vmul.f32 %v1477, 1.442695
  %v1517 = vpow.pop %v1516
  %v1518 = vmul.f32 %v1478, 1.442695
  %v1519 = vpow.pop %v1518
  %v1520 = vmul.f32 %v1479, 1.442695
  %v1521 = vpow.pop %v1520
  %v1522 = vmul.f32 %v1480, 1.442695
  %v1523 = vpow.pop %v1522
  %v1524 = vmul.f32 %v1481, 1.442695
  %v1525 = vpow.pop %v1524
  %v1526 = vmul.f32 %v1482, 1.442695
  %v1527 = vpow.pop %v1526
  %v1528 = vmul.f32 %v1483, 1.442695
  %v1529 = vpow.pop %v1528
  %v1530 = vmul.f32 %v1484, 1.442695
  %v1531 = vpow.pop %v1530
  %v1532 = vmul.f32 %v1485, 1.442695
  %v1533 = vpow.pop %v1532
  %v1534 = vmul.f32 %v1486, 1.442695
  %v1535 = vpow.pop %v1534
  %v1536 = vmul.f32 %v1487, 1.442695
  %v1537 = vpow.pop %v1536
  %v1538 = vmul.f32 %v1488, 1.442695
  %v1539 = vpow.pop %v1538
  %v1540 = vmul.f32 %v1489, 1.442695
  %v1541 = vpow.pop %v1540
  %v1542 = vmul.f32 %v1490, 1.442695
  %v1543 = vpow.pop %v1542
  %v1544 = vmul.f32 %v1491, 1.442695
  %v1545 = vpow.pop %v1544
  %v1546 = vmul.f32 %v1492, 1.442695
  %v1547 = vpow.pop %v1546
  %v1548 = vmul.f32 %v1493, 1.442695
  %v1549 = vpow.pop %v1548
  %v1550 = vmul.f32 %v1494, 1.442695
  %v1551 = vpow.pop %v1550
  %v1552 = vmul.f32 %v1495, 1.442695
  %v1553 = vpow.pop %v1552
  %v1554 = vmul.f32 %v1496, 1.442695
  %v1555 = vpow.pop %v1554
  %v1556 = vmul.f32 %v1497, 1.442695
  %v1557 = vpow.pop %v1556
  %v1558 = vmul.f32 %v1498, 1.442695
  %v1559 = vpow.pop %v1558
  %v1560 = vmul.f32 %v1499, 1.442695
  %v1561 = vpow.pop %v1560
  %v1562 = vmul.f32 %v1500, 1.442695
  %v1563 = vpow.pop %v1562
  %v1564 = vmul.f32 %v1501, 1.442695
  %v1565 = vpow.pop %v1564
  %v1566 = vadd.f32 %v1503, 1.0
  %v1567 = vadd.f32 %v1505, 1.0
  %v1568 = vadd.f32 %v1507, 1.0
  %v1569 = vadd.f32 %v1509, 1.0
  %v1570 = vadd.f32 %v1511, 1.0
  %v1571 = vadd.f32 %v1513, 1.0
  %v1572 = vadd.f32 %v1515, 1.0
  %v1573 = vadd.f32 %v1517, 1.0
  %v1574 = vadd.f32 %v1519, 1.0
  %v1575 = vadd.f32 %v1521, 1.0
  %v1576 = vadd.f32 %v1523, 1.0
  %v1577 = vadd.f32 %v1525, 1.0
  %v1578 = vadd.f32 %v1527, 1.0
  %v1579 = vadd.f32 %v1529, 1.0
  %v1580 = vadd.f32 %v1531, 1.0
  %v1581 = vadd.f32 %v1533, 1.0
  %v1582 = vadd.f32 %v1535, 1.0
  %v1583 = vadd.f32 %v1537, 1.0
  %v1584 = vadd.f32 %v1539, 1.0
  %v1585 = vadd.f32 %v1541, 1.0
  %v1586 = vadd.f32 %v1543, 1.0
  %v1587 = vadd.f32 %v1545, 1.0
  %v1588 = vadd.f32 %v1547, 1.0
  %v1589 = vadd.f32 %v1549, 1.0
  %v1590 = vadd.f32 %v1551, 1.0
  %v1591 = vadd.f32 %v1553, 1.0
  %v1592 = vadd.f32 %v1555, 1.0
  %v1593 = vadd.f32 %v1557, 1.0
  %v1594 = vadd.f32 %v1559, 1.0
  %v1595 = vadd.f32 %v1561, 1.0
  %v1596 = vadd.f32 %v1563, 1.0
  %v1597 = vadd.f32 %v1565, 1.0
  %v1598 = vrcp.pop %v1566
  %v1599 = vmul.f32 1.0, %v1598
  %v1600 = vrcp.pop %v1567
  %v1601 = vmul.f32 1.0, %v1600
  %v1602 = vrcp.pop %v1568
  %v1603 = vmul.f32 1.0, %v1602
  %v1604 = vrcp.pop %v1569
  %v1605 = vmul.f32 1.0, %v1604
  %v1606 = vrcp.pop %v1570
  %v1607 = vmul.f32 1.0, %v1606
  %v1608 = vrcp.pop %v1571
  %v1609 = vmul.f32 1.0, %v1608
  %v1610 = vrcp.pop %v1572
  %v1611 = vmul.f32 1.0, %v1610
  %v1612 = vrcp.pop %v1573
  %v1613 = vmul.f32 1.0, %v1612
  %v1614 = vrcp.pop %v1574
  %v1615 = vmul.f32 1.0, %v1614
  %v1616 = vrcp.pop %v1575
  %v1617 = vmul.f32 1.0, %v1616
  %v1618 = vrcp.pop %v1576
  %v1619 = vmul.f32 1.0, %v1618
  %v1620 = vrcp.pop %v1577
  %v1621 = vmul.f32 1.0, %v1620
  %v1622 = vrcp.pop %v1578
  %v1623 = vmul.f32 1.0, %v1622
  %v1624 = vrcp.pop %v1579
  %v1625 = vmul.f32 1.0, %v1624
  %v1626 = vrcp.pop %v1580
  %v1627 = vmul.f32 1.0, %v1626
  %v1628 = vrcp.pop %v1581
  %v1629 = vmul.f32 1.0, %v1628
  %v1630 = vrcp.pop %v1582
  %v1631 = vmul.f32 1.0, %v1630
  %v1632 = vrcp.pop %v1583
  %v1633 = vmul.f32 1.0, %v1632
  %v1634 = vrcp.pop %v1584
  %v1635 = vmul.f32 1.0, %v1634
  %v1636 = vrcp.pop %v1585
  %v1637 = vmul.f32 1.0, %v1636
  %v1638 = vrcp.pop %v1586
  %v1639 = vmul.f32 1.0, %v1638
  %v1640 = vrcp.pop %v1587
  %v1641 = vmul.f32 1.0, %v1640
  %v1642 = vrcp.pop %v1588
  %v1643 = vmul.f32 1.0, %v1642
  %v1644 = vrcp.pop %v1589
  %v1645 = vmul.f32 1.0, %v1644
  %v1646 = vrcp.pop %v1590
  %v1647 = vmul.f32 1.0, %v1646
  %v1648 = vrcp.pop %v1591
  %v1649 = vmul.f32 1.0, %v1648
  %v1650 = vrcp.pop %v1592
  %v1651 = vmul.f32 1.0, %v1650
  %v1652 = vrcp.pop %v1593
  %v1653 = vmul.f32 1.0, %v1652
  %v1654 = vrcp.pop %v1594
  %v1655 = vmul.f32 1.0, %v1654
  %v1656 = vrcp.pop %v1595
  %v1657 = vmul.f32 1.0, %v1656
  %v1658 = vrcp.pop %v1596
  %v1659 = vmul.f32 1.0, %v1658
  %v1660 = vrcp.pop %v1597
  %v1661 = vmul.f32 1.0, %v1660
  %vm1662 = vcmask 23552
  %1663 = vst.msk [vmem:[%s3] sm:$0xff] %vm1662, %v1599
  %1664 = vst.msk [vmem:[%s3 + $0x8] sm:$0xff] %vm1662, %v1601
  %1665 = vst.msk [vmem:[%s3 + $0x10] sm:$0xff] %vm1662, %v1603
  %1666 = vst.msk [vmem:[%s3 + $0x18] sm:$0xff] %vm1662, %v1605
  %1667 = vst.msk [vmem:[%s3 + $0x20] sm:$0xff] %vm1662, %v1607
  %1668 = vst.msk [vmem:[%s3 + $0x28] sm:$0xff] %vm1662, %v1609
  %1669 = vst.msk [vmem:[%s3 + $0x30] sm:$0xff] %vm1662, %v1611
  %1670 = vst.msk [vmem:[%s3 + $0x38] sm:$0xff] %vm1662, %v1613
  %1671 = vst.msk [vmem:[%s3 + $0x40] sm:$0xff] %vm1662, %v1615
  %1672 = vst.msk [vmem:[%s3 + $0x48] sm:$0xff] %vm1662, %v1617
  %1673 = vst.msk [vmem:[%s3 + $0x50] sm:$0xff] %vm1662, %v1619
  %1674 = vst.msk [vmem:[%s3 + $0x58] sm:$0xff] %vm1662, %v1621
  %1675 = vst.msk [vmem:[%s3 + $0x60] sm:$0xff] %vm1662, %v1623
  %1676 = vst.msk [vmem:[%s3 + $0x68] sm:$0xff] %vm1662, %v1625
  %1677 = vst.msk [vmem:[%s3 + $0x70] sm:$0xff] %vm1662, %v1627
  %1678 = vst.msk [vmem:[%s3 + $0x78] sm:$0xff] %vm1662, %v1629
  %1679 = vst.msk [vmem:[%s3 + $0x80] sm:$0xff] %vm1662, %v1631
  %1680 = vst.msk [vmem:[%s3 + $0x88] sm:$0xff] %vm1662, %v1633
  %1681 = vst.msk [vmem:[%s3 + $0x90] sm:$0xff] %vm1662, %v1635
  %1682 = vst.msk [vmem:[%s3 + $0x98] sm:$0xff] %vm1662, %v1637
  %1683 = vst.msk [vmem:[%s3 + $0xa0] sm:$0xff] %vm1662, %v1639
  %1684 = vst.msk [vmem:[%s3 + $0xa8] sm:$0xff] %vm1662, %v1641
  %1685 = vst.msk [vmem:[%s3 + $0xb0] sm:$0xff] %vm1662, %v1643
  %1686 = vst.msk [vmem:[%s3 + $0xb8] sm:$0xff] %vm1662, %v1645
  %1687 = vst.msk [vmem:[%s3 + $0xc0] sm:$0xff] %vm1662, %v1647
  %1688 = vst.msk [vmem:[%s3 + $0xc8] sm:$0xff] %vm1662, %v1649
  %1689 = vst.msk [vmem:[%s3 + $0xd0] sm:$0xff] %vm1662, %v1651
  %1690 = vst.msk [vmem:[%s3 + $0xd8] sm:$0xff] %vm1662, %v1653
  %1691 = vst.msk [vmem:[%s3 + $0xe0] sm:$0xff] %vm1662, %v1655
  %1692 = vst.msk [vmem:[%s3 + $0xe8] sm:$0xff] %vm1662, %v1657
  %1693 = vst.msk [vmem:[%s3 + $0xf0] sm:$0xff] %vm1662, %v1659
  %1694 = vst.msk [vmem:[%s3 + $0xf8] sm:$0xff] %vm1662, %v1661
  %s1695 = scalar_lea.vmem %s0, 128
  %v1696 = vld [vmem:[%s1695] sm:$0xf]
  %v1697 = vld [vmem:[%s1695 + $0x4] sm:$0xf]
  %v1698 = vld [vmem:[%s1695 + $0x8] sm:$0xf]
  %v1699 = vld [vmem:[%s1695 + $0xc] sm:$0xf]
  %v1700 = vld [vmem:[%s1695 + $0x10] sm:$0xf]
  %v1701 = vld [vmem:[%s1695 + $0x14] sm:$0xf]
  %v1702 = vld [vmem:[%s1695 + $0x18] sm:$0xf]
  %v1703 = vld [vmem:[%s1695 + $0x1c] sm:$0xf]
  %v1704 = vld [vmem:[%s1695 + $0x20] sm:$0xf]
  %v1705 = vld [vmem:[%s1695 + $0x24] sm:$0xf]
  %v1706 = vld [vmem:[%s1695 + $0x28] sm:$0xf]
  %v1707 = vld [vmem:[%s1695 + $0x2c] sm:$0xf]
  %v1708 = vld [vmem:[%s1695 + $0x30] sm:$0xf]
  %v1709 = vld [vmem:[%s1695 + $0x34] sm:$0xf]
  %v1710 = vld [vmem:[%s1695 + $0x38] sm:$0xf]
  %v1711 = vld [vmem:[%s1695 + $0x3c] sm:$0xf]
  %v1712 = vld [vmem:[%s1695 + $0x40] sm:$0xf]
  %v1713 = vld [vmem:[%s1695 + $0x44] sm:$0xf]
  %v1714 = vld [vmem:[%s1695 + $0x48] sm:$0xf]
  %v1715 = vld [vmem:[%s1695 + $0x4c] sm:$0xf]
  %v1716 = vld [vmem:[%s1695 + $0x50] sm:$0xf]
  %v1717 = vld [vmem:[%s1695 + $0x54] sm:$0xf]
  %v1718 = vld [vmem:[%s1695 + $0x58] sm:$0xf]
  %v1719 = vld [vmem:[%s1695 + $0x5c] sm:$0xf]
  %v1720 = vld [vmem:[%s1695 + $0x60] sm:$0xf]
  %v1721 = vld [vmem:[%s1695 + $0x64] sm:$0xf]
  %v1722 = vld [vmem:[%s1695 + $0x68] sm:$0xf]
  %v1723 = vld [vmem:[%s1695 + $0x6c] sm:$0xf]
  %v1724 = vld [vmem:[%s1695 + $0x70] sm:$0xf]
  %v1725 = vld [vmem:[%s1695 + $0x74] sm:$0xf]
  %v1726 = vld [vmem:[%s1695 + $0x78] sm:$0xf]
  %v1727 = vld [vmem:[%s1695 + $0x7c] sm:$0xf]
  %v1760 = vunpack.c.l.b16 %v1696
  %v1761 = vunpack.c.l.b16 %v1697
  %v1762 = vunpack.c.l.b16 %v1698
  %v1763 = vunpack.c.l.b16 %v1699
  %v1764 = vunpack.c.l.b16 %v1700
  %v1765 = vunpack.c.l.b16 %v1701
  %v1766 = vunpack.c.l.b16 %v1702
  %v1767 = vunpack.c.l.b16 %v1703
  %v1768 = vunpack.c.l.b16 %v1704
  %v1769 = vunpack.c.l.b16 %v1705
  %v1770 = vunpack.c.l.b16 %v1706
  %v1771 = vunpack.c.l.b16 %v1707
  %v1772 = vunpack.c.l.b16 %v1708
  %v1773 = vunpack.c.l.b16 %v1709
  %v1774 = vunpack.c.l.b16 %v1710
  %v1775 = vunpack.c.l.b16 %v1711
  %v1776 = vunpack.c.l.b16 %v1712
  %v1777 = vunpack.c.l.b16 %v1713
  %v1778 = vunpack.c.l.b16 %v1714
  %v1779 = vunpack.c.l.b16 %v1715
  %v1780 = vunpack.c.l.b16 %v1716
  %v1781 = vunpack.c.l.b16 %v1717
  %v1782 = vunpack.c.l.b16 %v1718
  %v1783 = vunpack.c.l.b16 %v1719
  %v1784 = vunpack.c.l.b16 %v1720
  %v1785 = vunpack.c.l.b16 %v1721
  %v1786 = vunpack.c.l.b16 %v1722
  %v1787 = vunpack.c.l.b16 %v1723
  %v1788 = vunpack.c.l.b16 %v1724
  %v1789 = vunpack.c.l.b16 %v1725
  %v1790 = vunpack.c.l.b16 %v1726
  %v1791 = vunpack.c.l.b16 %v1727
  %v1792 = vpack.c.b16 %v1761, %v1760
  %v1793 = vpack.c.b16 %v1763, %v1762
  %v1794 = vpack.c.b16 %v1765, %v1764
  %v1795 = vpack.c.b16 %v1767, %v1766
  %v1796 = vpack.c.b16 %v1769, %v1768
  %v1797 = vpack.c.b16 %v1771, %v1770
  %v1798 = vpack.c.b16 %v1773, %v1772
  %v1799 = vpack.c.b16 %v1775, %v1774
  %v1800 = vpack.c.b16 %v1777, %v1776
  %v1801 = vpack.c.b16 %v1779, %v1778
  %v1802 = vpack.c.b16 %v1781, %v1780
  %v1803 = vpack.c.b16 %v1783, %v1782
  %v1804 = vpack.c.b16 %v1785, %v1784
  %v1805 = vpack.c.b16 %v1787, %v1786
  %v1806 = vpack.c.b16 %v1789, %v1788
  %v1807 = vpack.c.b16 %v1791, %v1790
  %v1809 = vsel %vm184, %v1792, 0
  %v1812 = vsel %vm184, %v1793, 0
  %v1815 = vsel %vm184, %v1794, 0
  %v1818 = vsel %vm184, %v1795, 0
  %v1821 = vsel %vm184, %v1796, 0
  %v1824 = vsel %vm184, %v1797, 0
  %v1827 = vsel %vm184, %v1798, 0
  %v1830 = vsel %vm184, %v1799, 0
  %v1833 = vsel %vm184, %v1800, 0
  %v1836 = vsel %vm184, %v1801, 0
  %v1839 = vsel %vm184, %v1802, 0
  %v1842 = vsel %vm184, %v1803, 0
  %v1845 = vsel %vm184, %v1804, 0
  %v1848 = vsel %vm184, %v1805, 0
  %v1851 = vsel %vm184, %v1806, 0
  %v1854 = vsel %vm184, %v1807, 0
  %1856 = vmatprep.subr.bf16.mxu0 0
  %1857 = vmatpush1.bf16.msra.mxu0 0
  %1858 = vmatprep.subr.bf16.mxu0 0
  %1859 = vmatpush1.bf16.msra.mxu0 0
  %1860 = vmatprep.subr.bf16.mxu0 0
  %1861 = vmatpush1.bf16.msra.mxu0 0
  %1862 = vmatprep.subr.bf16.mxu0 0
  %1863 = vmatpush1.bf16.msra.mxu0 0
  %1864 = vmatprep.subr.bf16.mxu0 0
  %1865 = vmatpush1.bf16.msra.mxu0 0
  %1866 = vmatprep.subr.bf16.mxu0 0
  %1867 = vmatpush1.bf16.msra.mxu0 0
  %1868 = vmatprep.subr.bf16.mxu0 0
  %1869 = vmatpush1.bf16.msra.mxu0 %v181
  %1870 = vmatprep.subr.bf16.mxu0 0
  %1871 = vmatpush1.bf16.msra.mxu0 %v180
  %1872 = vmatprep.subr.bf16.mxu0 0
  %1873 = vmatpush2.bf16.msra.mxu0 0
  %1874 = vmatprep.subr.bf16.mxu0 0
  %1875 = vmatpush2.bf16.msra.mxu0 0
  %1876 = vmatprep.subr.bf16.mxu0 0
  %1877 = vmatpush2.bf16.msra.mxu0 0
  %1878 = vmatprep.subr.bf16.mxu0 0
  %1879 = vmatpush2.bf16.msra.mxu0 0
  %1880 = vmatprep.subr.bf16.mxu0 0
  %1881 = vmatpush2.bf16.msra.mxu0 0
  %1882 = vmatprep.subr.bf16.mxu0 0
  %1883 = vmatpush2.bf16.msra.mxu0 0
  %1884 = vmatprep.subr.bf16.mxu0 0
  %1885 = vmatpush2.bf16.msra.mxu0 0
  %1886 = vmatprep.subr.bf16.mxu0 0
  %1887 = vmatpush2.bf16.msra.mxu0 0
  %1888 = vmatprep.mubr.bf16.mxu0 0
  %1889 = vmatmul.mubr.bf16.gmra.mxu0 %v1809
  %v1890 = vpop.f32.mrf.mxu0
  %v1891 = vadd.f32 %v43, %v1890
  %v1892 = vpop.f32.mrf.mxu0
  %v1893 = vpop.f32.mrf.mxu0
  %v1894 = vadd.f32 %v43, %v1893
  %v1895 = vpop.f32.mrf.mxu0
  %1896 = vmatprep.mubr.bf16.mxu0 0
  %1897 = vmatmul.mubr.bf16.gmra.mxu0 %v1812
  %v1898 = vpop.f32.mrf.mxu0
  %v1899 = vadd.f32 %v43, %v1898
  %v1900 = vpop.f32.mrf.mxu0
  %v1901 = vpop.f32.mrf.mxu0
  %v1902 = vadd.f32 %v43, %v1901
  %v1903 = vpop.f32.mrf.mxu0
  %1904 = vmatprep.mubr.bf16.mxu0 0
  %1905 = vmatmul.mubr.bf16.gmra.mxu0 %v1815
  %v1906 = vpop.f32.mrf.mxu0
  %v1907 = vadd.f32 %v43, %v1906
  %v1908 = vpop.f32.mrf.mxu0
  %v1909 = vpop.f32.mrf.mxu0
  %v1910 = vadd.f32 %v43, %v1909
  %v1911 = vpop.f32.mrf.mxu0
  %1912 = vmatprep.mubr.bf16.mxu0 0
  %1913 = vmatmul.mubr.bf16.gmra.mxu0 %v1818
  %v1914 = vpop.f32.mrf.mxu0
  %v1915 = vadd.f32 %v43, %v1914
  %v1916 = vpop.f32.mrf.mxu0
  %v1917 = vpop.f32.mrf.mxu0
  %v1918 = vadd.f32 %v43, %v1917
  %v1919 = vpop.f32.mrf.mxu0
  %1920 = vmatprep.mubr.bf16.mxu0 0
  %1921 = vmatmul.mubr.bf16.gmra.mxu0 %v1821
  %v1922 = vpop.f32.mrf.mxu0
  %v1923 = vadd.f32 %v43, %v1922
  %v1924 = vpop.f32.mrf.mxu0
  %v1925 = vpop.f32.mrf.mxu0
  %v1926 = vadd.f32 %v43, %v1925
  %v1927 = vpop.f32.mrf.mxu0
  %1928 = vmatprep.mubr.bf16.mxu0 0
  %1929 = vmatmul.mubr.bf16.gmra.mxu0 %v1824
  %v1930 = vpop.f32.mrf.mxu0
  %v1931 = vadd.f32 %v43, %v1930
  %v1932 = vpop.f32.mrf.mxu0
  %v1933 = vpop.f32.mrf.mxu0
  %v1934 = vadd.f32 %v43, %v1933
  %v1935 = vpop.f32.mrf.mxu0
  %1936 = vmatprep.mubr.bf16.mxu0 0
  %1937 = vmatmul.mubr.bf16.gmra.mxu0 %v1827
  %v1938 = vpop.f32.mrf.mxu0
  %v1939 = vadd.f32 %v43, %v1938
  %v1940 = vpop.f32.mrf.mxu0
  %v1941 = vpop.f32.mrf.mxu0
  %v1942 = vadd.f32 %v43, %v1941
  %v1943 = vpop.f32.mrf.mxu0
  %1944 = vmatprep.mubr.bf16.mxu0 0
  %1945 = vmatmul.mubr.bf16.gmra.mxu0 %v1830
  %v1946 = vpop.f32.mrf.mxu0
  %v1947 = vadd.f32 %v43, %v1946
  %v1948 = vpop.f32.mrf.mxu0
  %v1949 = vpop.f32.mrf.mxu0
  %v1950 = vadd.f32 %v43, %v1949
  %v1951 = vpop.f32.mrf.mxu0
  %1952 = vmatprep.mubr.bf16.mxu0 0
  %1953 = vmatmul.mubr.bf16.gmra.mxu0 %v1833
  %v1954 = vpop.f32.mrf.mxu0
  %v1955 = vadd.f32 %v43, %v1954
  %v1956 = vpop.f32.mrf.mxu0
  %v1957 = vpop.f32.mrf.mxu0
  %v1958 = vadd.f32 %v43, %v1957
  %v1959 = vpop.f32.mrf.mxu0
  %1960 = vmatprep.mubr.bf16.mxu0 0
  %1961 = vmatmul.mubr.bf16.gmra.mxu0 %v1836
  %v1962 = vpop.f32.mrf.mxu0
  %v1963 = vadd.f32 %v43, %v1962
  %v1964 = vpop.f32.mrf.mxu0
  %v1965 = vpop.f32.mrf.mxu0
  %v1966 = vadd.f32 %v43, %v1965
  %v1967 = vpop.f32.mrf.mxu0
  %1968 = vmatprep.mubr.bf16.mxu0 0
  %1969 = vmatmul.mubr.bf16.gmra.mxu0 %v1839
  %v1970 = vpop.f32.mrf.mxu0
  %v1971 = vadd.f32 %v43, %v1970
  %v1972 = vpop.f32.mrf.mxu0
  %v1973 = vpop.f32.mrf.mxu0
  %v1974 = vadd.f32 %v43, %v1973
  %v1975 = vpop.f32.mrf.mxu0
  %1976 = vmatprep.mubr.bf16.mxu0 0
  %1977 = vmatmul.mubr.bf16.gmra.mxu0 %v1842
  %v1978 = vpop.f32.mrf.mxu0
  %v1979 = vadd.f32 %v43, %v1978
  %v1980 = vpop.f32.mrf.mxu0
  %v1981 = vpop.f32.mrf.mxu0
  %v1982 = vadd.f32 %v43, %v1981
  %v1983 = vpop.f32.mrf.mxu0
  %1984 = vmatprep.mubr.bf16.mxu0 0
  %1985 = vmatmul.mubr.bf16.gmra.mxu0 %v1845
  %v1986 = vpop.f32.mrf.mxu0
  %v1987 = vadd.f32 %v43, %v1986
  %v1988 = vpop.f32.mrf.mxu0
  %v1989 = vpop.f32.mrf.mxu0
  %v1990 = vadd.f32 %v43, %v1989
  %v1991 = vpop.f32.mrf.mxu0
  %1992 = vmatprep.mubr.bf16.mxu0 0
  %1993 = vmatmul.mubr.bf16.gmra.mxu0 %v1848
  %v1994 = vpop.f32.mrf.mxu0
  %v1995 = vadd.f32 %v43, %v1994
  %v1996 = vpop.f32.mrf.mxu0
  %v1997 = vpop.f32.mrf.mxu0
  %v1998 = vadd.f32 %v43, %v1997
  %v1999 = vpop.f32.mrf.mxu0
  %2000 = vmatprep.mubr.bf16.mxu0 0
  %2001 = vmatmul.mubr.bf16.gmra.mxu0 %v1851
  %v2002 = vpop.f32.mrf.mxu0
  %v2003 = vadd.f32 %v43, %v2002
  %v2004 = vpop.f32.mrf.mxu0
  %v2005 = vpop.f32.mrf.mxu0
  %v2006 = vadd.f32 %v43, %v2005
  %v2007 = vpop.f32.mrf.mxu0
  %2008 = vmatprep.mubr.bf16.mxu0 0
  %2009 = vmatmul.mubr.bf16.gmra.mxu0 %v1854
  %v2010 = vpop.f32.mrf.mxu0
  %v2011 = vadd.f32 %v43, %v2010
  %v2012 = vpop.f32.mrf.mxu0
  %v2013 = vpop.f32.mrf.mxu0
  %v2014 = vadd.f32 %v43, %v2013
  %v2015 = vpop.f32.mrf.mxu0
  %2016 = vdwg.mxu0
  %v2017 = vmax.f32 %v1891, 0.0
  %v2018 = vmax.f32 %v1894, 0.0
  %v2019 = vmax.f32 %v1899, 0.0
  %v2020 = vmax.f32 %v1902, 0.0
  %v2021 = vmax.f32 %v1907, 0.0
  %v2022 = vmax.f32 %v1910, 0.0
  %v2023 = vmax.f32 %v1915, 0.0
  %v2024 = vmax.f32 %v1918, 0.0
  %v2025 = vmax.f32 %v1923, 0.0
  %v2026 = vmax.f32 %v1926, 0.0
  %v2027 = vmax.f32 %v1931, 0.0
  %v2028 = vmax.f32 %v1934, 0.0
  %v2029 = vmax.f32 %v1939, 0.0
  %v2030 = vmax.f32 %v1942, 0.0
  %v2031 = vmax.f32 %v1947, 0.0
  %v2032 = vmax.f32 %v1950, 0.0
  %v2033 = vmax.f32 %v1955, 0.0
  %v2034 = vmax.f32 %v1958, 0.0
  %v2035 = vmax.f32 %v1963, 0.0
  %v2036 = vmax.f32 %v1966, 0.0
  %v2037 = vmax.f32 %v1971, 0.0
  %v2038 = vmax.f32 %v1974, 0.0
  %v2039 = vmax.f32 %v1979, 0.0
  %v2040 = vmax.f32 %v1982, 0.0
  %v2041 = vmax.f32 %v1987, 0.0
  %v2042 = vmax.f32 %v1990, 0.0
  %v2043 = vmax.f32 %v1995, 0.0
  %v2044 = vmax.f32 %v1998, 0.0
  %v2045 = vmax.f32 %v2003, 0.0
  %v2046 = vmax.f32 %v2006, 0.0
  %v2047 = vmax.f32 %v2011, 0.0
  %v2048 = vmax.f32 %v2014, 0.0
  %v2049 = vpack.c.bf16 %v2018, %v2017
  %v2050 = vpack.c.bf16 %v2020, %v2019
  %v2051 = vpack.c.bf16 %v2022, %v2021
  %v2052 = vpack.c.bf16 %v2024, %v2023
  %v2053 = vpack.c.bf16 %v2026, %v2025
  %v2054 = vpack.c.bf16 %v2028, %v2027
  %v2055 = vpack.c.bf16 %v2030, %v2029
  %v2056 = vpack.c.bf16 %v2032, %v2031
  %v2057 = vpack.c.bf16 %v2034, %v2033
  %v2058 = vpack.c.bf16 %v2036, %v2035
  %v2059 = vpack.c.bf16 %v2038, %v2037
  %v2060 = vpack.c.bf16 %v2040, %v2039
  %v2061 = vpack.c.bf16 %v2042, %v2041
  %v2062 = vpack.c.bf16 %v2044, %v2043
  %v2063 = vpack.c.bf16 %v2046, %v2045
  %v2064 = vpack.c.bf16 %v2048, %v2047
  %v2066 = vsel %vm184, %v2049, 0
  %v2069 = vsel %vm184, %v2050, 0
  %v2072 = vsel %vm184, %v2051, 0
  %v2075 = vsel %vm184, %v2052, 0
  %v2078 = vsel %vm184, %v2053, 0
  %v2081 = vsel %vm184, %v2054, 0
  %v2084 = vsel %vm184, %v2055, 0
  %v2087 = vsel %vm184, %v2056, 0
  %v2090 = vsel %vm184, %v2057, 0
  %v2093 = vsel %vm184, %v2058, 0
  %v2096 = vsel %vm184, %v2059, 0
  %v2099 = vsel %vm184, %v2060, 0
  %v2102 = vsel %vm184, %v2061, 0
  %v2105 = vsel %vm184, %v2062, 0
  %v2108 = vsel %vm184, %v2063, 0
  %v2111 = vsel %vm184, %v2064, 0
  %2113 = vmatprep.subr.bf16.mxu0 0
  %2114 = vmatpush1.bf16.msra.mxu0 0
  %2115 = vmatprep.subr.bf16.mxu0 0
  %2116 = vmatpush1.bf16.msra.mxu0 0
  %2117 = vmatprep.subr.bf16.mxu0 0
  %2118 = vmatpush1.bf16.msra.mxu0 0
  %2119 = vmatprep.subr.bf16.mxu0 0
  %2120 = vmatpush1.bf16.msra.mxu0 0
  %2121 = vmatprep.subr.bf16.mxu0 0
  %2122 = vmatpush1.bf16.msra.mxu0 0
  %2123 = vmatprep.subr.bf16.mxu0 0
  %2124 = vmatpush1.bf16.msra.mxu0 0
  %2125 = vmatprep.subr.bf16.mxu0 0
  %2126 = vmatpush1.bf16.msra.mxu0 %v451
  %2127 = vmatprep.subr.bf16.mxu0 0
  %2128 = vmatpush1.bf16.msra.mxu0 %v450
  %2129 = vmatprep.subr.bf16.mxu0 0
  %2130 = vmatpush2.bf16.msra.mxu0 0
  %2131 = vmatprep.subr.bf16.mxu0 0
  %2132 = vmatpush2.bf16.msra.mxu0 0
  %2133 = vmatprep.subr.bf16.mxu0 0
  %2134 = vmatpush2.bf16.msra.mxu0 0
  %2135 = vmatprep.subr.bf16.mxu0 0
  %2136 = vmatpush2.bf16.msra.mxu0 0
  %2137 = vmatprep.subr.bf16.mxu0 0
  %2138 = vmatpush2.bf16.msra.mxu0 0
  %2139 = vmatprep.subr.bf16.mxu0 0
  %2140 = vmatpush2.bf16.msra.mxu0 0
  %2141 = vmatprep.subr.bf16.mxu0 0
  %2142 = vmatpush2.bf16.msra.mxu0 0
  %2143 = vmatprep.subr.bf16.mxu0 0
  %2144 = vmatpush2.bf16.msra.mxu0 0
  %2145 = vmatprep.mubr.bf16.mxu0 0
  %2146 = vmatmul.mubr.bf16.gmra.mxu0 %v2066
  %v2147 = vpop.f32.mrf.mxu0
  %v2148 = vadd.f32 %v47, %v2147
  %v2149 = vpop.f32.mrf.mxu0
  %v2150 = vpop.f32.mrf.mxu0
  %v2151 = vadd.f32 %v47, %v2150
  %v2152 = vpop.f32.mrf.mxu0
  %2153 = vmatprep.mubr.bf16.mxu0 0
  %2154 = vmatmul.mubr.bf16.gmra.mxu0 %v2069
  %v2155 = vpop.f32.mrf.mxu0
  %v2156 = vadd.f32 %v47, %v2155
  %v2157 = vpop.f32.mrf.mxu0
  %v2158 = vpop.f32.mrf.mxu0
  %v2159 = vadd.f32 %v47, %v2158
  %v2160 = vpop.f32.mrf.mxu0
  %2161 = vmatprep.mubr.bf16.mxu0 0
  %2162 = vmatmul.mubr.bf16.gmra.mxu0 %v2072
  %v2163 = vpop.f32.mrf.mxu0
  %v2164 = vadd.f32 %v47, %v2163
  %v2165 = vpop.f32.mrf.mxu0
  %v2166 = vpop.f32.mrf.mxu0
  %v2167 = vadd.f32 %v47, %v2166
  %v2168 = vpop.f32.mrf.mxu0
  %2169 = vmatprep.mubr.bf16.mxu0 0
  %2170 = vmatmul.mubr.bf16.gmra.mxu0 %v2075
  %v2171 = vpop.f32.mrf.mxu0
  %v2172 = vadd.f32 %v47, %v2171
  %v2173 = vpop.f32.mrf.mxu0
  %v2174 = vpop.f32.mrf.mxu0
  %v2175 = vadd.f32 %v47, %v2174
  %v2176 = vpop.f32.mrf.mxu0
  %2177 = vmatprep.mubr.bf16.mxu0 0
  %2178 = vmatmul.mubr.bf16.gmra.mxu0 %v2078
  %v2179 = vpop.f32.mrf.mxu0
  %v2180 = vadd.f32 %v47, %v2179
  %v2181 = vpop.f32.mrf.mxu0
  %v2182 = vpop.f32.mrf.mxu0
  %v2183 = vadd.f32 %v47, %v2182
  %v2184 = vpop.f32.mrf.mxu0
  %2185 = vmatprep.mubr.bf16.mxu0 0
  %2186 = vmatmul.mubr.bf16.gmra.mxu0 %v2081
  %v2187 = vpop.f32.mrf.mxu0
  %v2188 = vadd.f32 %v47, %v2187
  %v2189 = vpop.f32.mrf.mxu0
  %v2190 = vpop.f32.mrf.mxu0
  %v2191 = vadd.f32 %v47, %v2190
  %v2192 = vpop.f32.mrf.mxu0
  %2193 = vmatprep.mubr.bf16.mxu0 0
  %2194 = vmatmul.mubr.bf16.gmra.mxu0 %v2084
  %v2195 = vpop.f32.mrf.mxu0
  %v2196 = vadd.f32 %v47, %v2195
  %v2197 = vpop.f32.mrf.mxu0
  %v2198 = vpop.f32.mrf.mxu0
  %v2199 = vadd.f32 %v47, %v2198
  %v2200 = vpop.f32.mrf.mxu0
  %2201 = vmatprep.mubr.bf16.mxu0 0
  %2202 = vmatmul.mubr.bf16.gmra.mxu0 %v2087
  %v2203 = vpop.f32.mrf.mxu0
  %v2204 = vadd.f32 %v47, %v2203
  %v2205 = vpop.f32.mrf.mxu0
  %v2206 = vpop.f32.mrf.mxu0
  %v2207 = vadd.f32 %v47, %v2206
  %v2208 = vpop.f32.mrf.mxu0
  %2209 = vmatprep.mubr.bf16.mxu0 0
  %2210 = vmatmul.mubr.bf16.gmra.mxu0 %v2090
  %v2211 = vpop.f32.mrf.mxu0
  %v2212 = vadd.f32 %v47, %v2211
  %v2213 = vpop.f32.mrf.mxu0
  %v2214 = vpop.f32.mrf.mxu0
  %v2215 = vadd.f32 %v47, %v2214
  %v2216 = vpop.f32.mrf.mxu0
  %2217 = vmatprep.mubr.bf16.mxu0 0
  %2218 = vmatmul.mubr.bf16.gmra.mxu0 %v2093
  %v2219 = vpop.f32.mrf.mxu0
  %v2220 = vadd.f32 %v47, %v2219
  %v2221 = vpop.f32.mrf.mxu0
  %v2222 = vpop.f32.mrf.mxu0
  %v2223 = vadd.f32 %v47, %v2222
  %v2224 = vpop.f32.mrf.mxu0
  %2225 = vmatprep.mubr.bf16.mxu0 0
  %2226 = vmatmul.mubr.bf16.gmra.mxu0 %v2096
  %v2227 = vpop.f32.mrf.mxu0
  %v2228 = vadd.f32 %v47, %v2227
  %v2229 = vpop.f32.mrf.mxu0
  %v2230 = vpop.f32.mrf.mxu0
  %v2231 = vadd.f32 %v47, %v2230
  %v2232 = vpop.f32.mrf.mxu0
  %2233 = vmatprep.mubr.bf16.mxu0 0
  %2234 = vmatmul.mubr.bf16.gmra.mxu0 %v2099
  %v2235 = vpop.f32.mrf.mxu0
  %v2236 = vadd.f32 %v47, %v2235
  %v2237 = vpop.f32.mrf.mxu0
  %v2238 = vpop.f32.mrf.mxu0
  %v2239 = vadd.f32 %v47, %v2238
  %v2240 = vpop.f32.mrf.mxu0
  %2241 = vmatprep.mubr.bf16.mxu0 0
  %2242 = vmatmul.mubr.bf16.gmra.mxu0 %v2102
  %v2243 = vpop.f32.mrf.mxu0
  %v2244 = vadd.f32 %v47, %v2243
  %v2245 = vpop.f32.mrf.mxu0
  %v2246 = vpop.f32.mrf.mxu0
  %v2247 = vadd.f32 %v47, %v2246
  %v2248 = vpop.f32.mrf.mxu0
  %2249 = vmatprep.mubr.bf16.mxu0 0
  %2250 = vmatmul.mubr.bf16.gmra.mxu0 %v2105
  %v2251 = vpop.f32.mrf.mxu0
  %v2252 = vadd.f32 %v47, %v2251
  %v2253 = vpop.f32.mrf.mxu0
  %v2254 = vpop.f32.mrf.mxu0
  %v2255 = vadd.f32 %v47, %v2254
  %v2256 = vpop.f32.mrf.mxu0
  %2257 = vmatprep.mubr.bf16.mxu0 0
  %2258 = vmatmul.mubr.bf16.gmra.mxu0 %v2108
  %v2259 = vpop.f32.mrf.mxu0
  %v2260 = vadd.f32 %v47, %v2259
  %v2261 = vpop.f32.mrf.mxu0
  %v2262 = vpop.f32.mrf.mxu0
  %v2263 = vadd.f32 %v47, %v2262
  %v2264 = vpop.f32.mrf.mxu0
  %2265 = vmatprep.mubr.bf16.mxu0 0
  %2266 = vmatmul.mubr.bf16.gmra.mxu0 %v2111
  %v2267 = vpop.f32.mrf.mxu0
  %v2268 = vadd.f32 %v47, %v2267
  %v2269 = vpop.f32.mrf.mxu0
  %v2270 = vpop.f32.mrf.mxu0
  %v2271 = vadd.f32 %v47, %v2270
  %v2272 = vpop.f32.mrf.mxu0
  %2273 = vdwg.mxu0
  %v2274 = vmax.f32 %v2148, 0.0
  %v2275 = vmax.f32 %v2151, 0.0
  %v2276 = vmax.f32 %v2156, 0.0
  %v2277 = vmax.f32 %v2159, 0.0
  %v2278 = vmax.f32 %v2164, 0.0
  %v2279 = vmax.f32 %v2167, 0.0
  %v2280 = vmax.f32 %v2172, 0.0
  %v2281 = vmax.f32 %v2175, 0.0
  %v2282 = vmax.f32 %v2180, 0.0
  %v2283 = vmax.f32 %v2183, 0.0
  %v2284 = vmax.f32 %v2188, 0.0
  %v2285 = vmax.f32 %v2191, 0.0
  %v2286 = vmax.f32 %v2196, 0.0
  %v2287 = vmax.f32 %v2199, 0.0
  %v2288 = vmax.f32 %v2204, 0.0
  %v2289 = vmax.f32 %v2207, 0.0
  %v2290 = vmax.f32 %v2212, 0.0
  %v2291 = vmax.f32 %v2215, 0.0
  %v2292 = vmax.f32 %v2220, 0.0
  %v2293 = vmax.f32 %v2223, 0.0
  %v2294 = vmax.f32 %v2228, 0.0
  %v2295 = vmax.f32 %v2231, 0.0
  %v2296 = vmax.f32 %v2236, 0.0
  %v2297 = vmax.f32 %v2239, 0.0
  %v2298 = vmax.f32 %v2244, 0.0
  %v2299 = vmax.f32 %v2247, 0.0
  %v2300 = vmax.f32 %v2252, 0.0
  %v2301 = vmax.f32 %v2255, 0.0
  %v2302 = vmax.f32 %v2260, 0.0
  %v2303 = vmax.f32 %v2263, 0.0
  %v2304 = vmax.f32 %v2268, 0.0
  %v2305 = vmax.f32 %v2271, 0.0
  %v2306 = vpack.c.bf16 %v2275, %v2274
  %v2307 = vpack.c.bf16 %v2277, %v2276
  %v2308 = vpack.c.bf16 %v2279, %v2278
  %v2309 = vpack.c.bf16 %v2281, %v2280
  %v2310 = vpack.c.bf16 %v2283, %v2282
  %v2311 = vpack.c.bf16 %v2285, %v2284
  %v2312 = vpack.c.bf16 %v2287, %v2286
  %v2313 = vpack.c.bf16 %v2289, %v2288
  %v2314 = vpack.c.bf16 %v2291, %v2290
  %v2315 = vpack.c.bf16 %v2293, %v2292
  %v2316 = vpack.c.bf16 %v2295, %v2294
  %v2317 = vpack.c.bf16 %v2297, %v2296
  %v2318 = vpack.c.bf16 %v2299, %v2298
  %v2319 = vpack.c.bf16 %v2301, %v2300
  %v2320 = vpack.c.bf16 %v2303, %v2302
  %v2321 = vpack.c.bf16 %v2305, %v2304
  %v2323 = vsel %vm184, %v2306, 0
  %v2326 = vsel %vm184, %v2307, 0
  %v2329 = vsel %vm184, %v2308, 0
  %v2332 = vsel %vm184, %v2309, 0
  %v2335 = vsel %vm184, %v2310, 0
  %v2338 = vsel %vm184, %v2311, 0
  %v2341 = vsel %vm184, %v2312, 0
  %v2344 = vsel %vm184, %v2313, 0
  %v2347 = vsel %vm184, %v2314, 0
  %v2350 = vsel %vm184, %v2315, 0
  %v2353 = vsel %vm184, %v2316, 0
  %v2356 = vsel %vm184, %v2317, 0
  %v2359 = vsel %vm184, %v2318, 0
  %v2362 = vsel %vm184, %v2319, 0
  %v2365 = vsel %vm184, %v2320, 0
  %v2368 = vsel %vm184, %v2321, 0
  %2370 = vmatprep.subr.bf16.mxu0 0
  %2371 = vmatpush1.bf16.msra.mxu0 0
  %2372 = vmatprep.subr.bf16.mxu0 0
  %2373 = vmatpush1.bf16.msra.mxu0 0
  %2374 = vmatprep.subr.bf16.mxu0 0
  %2375 = vmatpush1.bf16.msra.mxu0 0
  %2376 = vmatprep.subr.bf16.mxu0 0
  %2377 = vmatpush1.bf16.msra.mxu0 0
  %2378 = vmatprep.subr.bf16.mxu0 0
  %2379 = vmatpush1.bf16.msra.mxu0 0
  %2380 = vmatprep.subr.bf16.mxu0 0
  %2381 = vmatpush1.bf16.msra.mxu0 0
  %2382 = vmatprep.subr.bf16.mxu0 0
  %2383 = vmatpush1.bf16.msra.mxu0 %v720
  %2384 = vmatprep.subr.bf16.mxu0 0
  %2385 = vmatpush1.bf16.msra.mxu0 %v719
  %2386 = vmatprep.subr.bf16.mxu0 0
  %2387 = vmatpush2.bf16.msra.mxu0 0
  %2388 = vmatprep.subr.bf16.mxu0 0
  %2389 = vmatpush2.bf16.msra.mxu0 0
  %2390 = vmatprep.subr.bf16.mxu0 0
  %2391 = vmatpush2.bf16.msra.mxu0 0
  %2392 = vmatprep.subr.bf16.mxu0 0
  %2393 = vmatpush2.bf16.msra.mxu0 0
  %2394 = vmatprep.subr.bf16.mxu0 0
  %2395 = vmatpush2.bf16.msra.mxu0 0
  %2396 = vmatprep.subr.bf16.mxu0 0
  %2397 = vmatpush2.bf16.msra.mxu0 0
  %2398 = vmatprep.subr.bf16.mxu0 0
  %2399 = vmatpush2.bf16.msra.mxu0 0
  %2400 = vmatprep.subr.bf16.mxu0 0
  %2401 = vmatpush2.bf16.msra.mxu0 0
  %2402 = vmatprep.mubr.bf16.mxu0 0
  %2403 = vmatmul.mubr.bf16.gmra.mxu0 %v2323
  %v2404 = vpop.f32.mrf.mxu0
  %v2405 = vadd.f32 %v51, %v2404
  %v2406 = vpop.f32.mrf.mxu0
  %v2407 = vpop.f32.mrf.mxu0
  %v2408 = vadd.f32 %v51, %v2407
  %v2409 = vpop.f32.mrf.mxu0
  %2410 = vmatprep.mubr.bf16.mxu0 0
  %2411 = vmatmul.mubr.bf16.gmra.mxu0 %v2326
  %v2412 = vpop.f32.mrf.mxu0
  %v2413 = vadd.f32 %v51, %v2412
  %v2414 = vpop.f32.mrf.mxu0
  %v2415 = vpop.f32.mrf.mxu0
  %v2416 = vadd.f32 %v51, %v2415
  %v2417 = vpop.f32.mrf.mxu0
  %2418 = vmatprep.mubr.bf16.mxu0 0
  %2419 = vmatmul.mubr.bf16.gmra.mxu0 %v2329
  %v2420 = vpop.f32.mrf.mxu0
  %v2421 = vadd.f32 %v51, %v2420
  %v2422 = vpop.f32.mrf.mxu0
  %v2423 = vpop.f32.mrf.mxu0
  %v2424 = vadd.f32 %v51, %v2423
  %v2425 = vpop.f32.mrf.mxu0
  %2426 = vmatprep.mubr.bf16.mxu0 0
  %2427 = vmatmul.mubr.bf16.gmra.mxu0 %v2332
  %v2428 = vpop.f32.mrf.mxu0
  %v2429 = vadd.f32 %v51, %v2428
  %v2430 = vpop.f32.mrf.mxu0
  %v2431 = vpop.f32.mrf.mxu0
  %v2432 = vadd.f32 %v51, %v2431
  %v2433 = vpop.f32.mrf.mxu0
  %2434 = vmatprep.mubr.bf16.mxu0 0
  %2435 = vmatmul.mubr.bf16.gmra.mxu0 %v2335
  %v2436 = vpop.f32.mrf.mxu0
  %v2437 = vadd.f32 %v51, %v2436
  %v2438 = vpop.f32.mrf.mxu0
  %v2439 = vpop.f32.mrf.mxu0
  %v2440 = vadd.f32 %v51, %v2439
  %v2441 = vpop.f32.mrf.mxu0
  %2442 = vmatprep.mubr.bf16.mxu0 0
  %2443 = vmatmul.mubr.bf16.gmra.mxu0 %v2338
  %v2444 = vpop.f32.mrf.mxu0
  %v2445 = vadd.f32 %v51, %v2444
  %v2446 = vpop.f32.mrf.mxu0
  %v2447 = vpop.f32.mrf.mxu0
  %v2448 = vadd.f32 %v51, %v2447
  %v2449 = vpop.f32.mrf.mxu0
  %2450 = vmatprep.mubr.bf16.mxu0 0
  %2451 = vmatmul.mubr.bf16.gmra.mxu0 %v2341
  %v2452 = vpop.f32.mrf.mxu0
  %v2453 = vadd.f32 %v51, %v2452
  %v2454 = vpop.f32.mrf.mxu0
  %v2455 = vpop.f32.mrf.mxu0
  %v2456 = vadd.f32 %v51, %v2455
  %v2457 = vpop.f32.mrf.mxu0
  %2458 = vmatprep.mubr.bf16.mxu0 0
  %2459 = vmatmul.mubr.bf16.gmra.mxu0 %v2344
  %v2460 = vpop.f32.mrf.mxu0
  %v2461 = vadd.f32 %v51, %v2460
  %v2462 = vpop.f32.mrf.mxu0
  %v2463 = vpop.f32.mrf.mxu0
  %v2464 = vadd.f32 %v51, %v2463
  %v2465 = vpop.f32.mrf.mxu0
  %2466 = vmatprep.mubr.bf16.mxu0 0
  %2467 = vmatmul.mubr.bf16.gmra.mxu0 %v2347
  %v2468 = vpop.f32.mrf.mxu0
  %v2469 = vadd.f32 %v51, %v2468
  %v2470 = vpop.f32.mrf.mxu0
  %v2471 = vpop.f32.mrf.mxu0
  %v2472 = vadd.f32 %v51, %v2471
  %v2473 = vpop.f32.mrf.mxu0
  %2474 = vmatprep.mubr.bf16.mxu0 0
  %2475 = vmatmul.mubr.bf16.gmra.mxu0 %v2350
  %v2476 = vpop.f32.mrf.mxu0
  %v2477 = vadd.f32 %v51, %v2476
  %v2478 = vpop.f32.mrf.mxu0
  %v2479 = vpop.f32.mrf.mxu0
  %v2480 = vadd.f32 %v51, %v2479
  %v2481 = vpop.f32.mrf.mxu0
  %2482 = vmatprep.mubr.bf16.mxu0 0
  %2483 = vmatmul.mubr.bf16.gmra.mxu0 %v2353
  %v2484 = vpop.f32.mrf.mxu0
  %v2485 = vadd.f32 %v51, %v2484
  %v2486 = vpop.f32.mrf.mxu0
  %v2487 = vpop.f32.mrf.mxu0
  %v2488 = vadd.f32 %v51, %v2487
  %v2489 = vpop.f32.mrf.mxu0
  %2490 = vmatprep.mubr.bf16.mxu0 0
  %2491 = vmatmul.mubr.bf16.gmra.mxu0 %v2356
  %v2492 = vpop.f32.mrf.mxu0
  %v2493 = vadd.f32 %v51, %v2492
  %v2494 = vpop.f32.mrf.mxu0
  %v2495 = vpop.f32.mrf.mxu0
  %v2496 = vadd.f32 %v51, %v2495
  %v2497 = vpop.f32.mrf.mxu0
  %2498 = vmatprep.mubr.bf16.mxu0 0
  %2499 = vmatmul.mubr.bf16.gmra.mxu0 %v2359
  %v2500 = vpop.f32.mrf.mxu0
  %v2501 = vadd.f32 %v51, %v2500
  %v2502 = vpop.f32.mrf.mxu0
  %v2503 = vpop.f32.mrf.mxu0
  %v2504 = vadd.f32 %v51, %v2503
  %v2505 = vpop.f32.mrf.mxu0
  %2506 = vmatprep.mubr.bf16.mxu0 0
  %2507 = vmatmul.mubr.bf16.gmra.mxu0 %v2362
  %v2508 = vpop.f32.mrf.mxu0
  %v2509 = vadd.f32 %v51, %v2508
  %v2510 = vpop.f32.mrf.mxu0
  %v2511 = vpop.f32.mrf.mxu0
  %v2512 = vadd.f32 %v51, %v2511
  %v2513 = vpop.f32.mrf.mxu0
  %2514 = vmatprep.mubr.bf16.mxu0 0
  %2515 = vmatmul.mubr.bf16.gmra.mxu0 %v2365
  %v2516 = vpop.f32.mrf.mxu0
  %v2517 = vadd.f32 %v51, %v2516
  %v2518 = vpop.f32.mrf.mxu0
  %v2519 = vpop.f32.mrf.mxu0
  %v2520 = vadd.f32 %v51, %v2519
  %v2521 = vpop.f32.mrf.mxu0
  %2522 = vmatprep.mubr.bf16.mxu0 0
  %2523 = vmatmul.mubr.bf16.gmra.mxu0 %v2368
  %v2524 = vpop.f32.mrf.mxu0
  %v2525 = vadd.f32 %v51, %v2524
  %v2526 = vpop.f32.mrf.mxu0
  %v2527 = vpop.f32.mrf.mxu0
  %v2528 = vadd.f32 %v51, %v2527
  %v2529 = vpop.f32.mrf.mxu0
  %2530 = vdwg.mxu0
  %v2531 = vmax.f32 %v2405, 0.0
  %v2532 = vmax.f32 %v2408, 0.0
  %v2533 = vmax.f32 %v2413, 0.0
  %v2534 = vmax.f32 %v2416, 0.0
  %v2535 = vmax.f32 %v2421, 0.0
  %v2536 = vmax.f32 %v2424, 0.0
  %v2537 = vmax.f32 %v2429, 0.0
  %v2538 = vmax.f32 %v2432, 0.0
  %v2539 = vmax.f32 %v2437, 0.0
  %v2540 = vmax.f32 %v2440, 0.0
  %v2541 = vmax.f32 %v2445, 0.0
  %v2542 = vmax.f32 %v2448, 0.0
  %v2543 = vmax.f32 %v2453, 0.0
  %v2544 = vmax.f32 %v2456, 0.0
  %v2545 = vmax.f32 %v2461, 0.0
  %v2546 = vmax.f32 %v2464, 0.0
  %v2547 = vmax.f32 %v2469, 0.0
  %v2548 = vmax.f32 %v2472, 0.0
  %v2549 = vmax.f32 %v2477, 0.0
  %v2550 = vmax.f32 %v2480, 0.0
  %v2551 = vmax.f32 %v2485, 0.0
  %v2552 = vmax.f32 %v2488, 0.0
  %v2553 = vmax.f32 %v2493, 0.0
  %v2554 = vmax.f32 %v2496, 0.0
  %v2555 = vmax.f32 %v2501, 0.0
  %v2556 = vmax.f32 %v2504, 0.0
  %v2557 = vmax.f32 %v2509, 0.0
  %v2558 = vmax.f32 %v2512, 0.0
  %v2559 = vmax.f32 %v2517, 0.0
  %v2560 = vmax.f32 %v2520, 0.0
  %v2561 = vmax.f32 %v2525, 0.0
  %v2562 = vmax.f32 %v2528, 0.0
  %v2563 = vpack.c.bf16 %v2532, %v2531
  %v2564 = vpack.c.bf16 %v2534, %v2533
  %v2565 = vpack.c.bf16 %v2536, %v2535
  %v2566 = vpack.c.bf16 %v2538, %v2537
  %v2567 = vpack.c.bf16 %v2540, %v2539
  %v2568 = vpack.c.bf16 %v2542, %v2541
  %v2569 = vpack.c.bf16 %v2544, %v2543
  %v2570 = vpack.c.bf16 %v2546, %v2545
  %v2571 = vpack.c.bf16 %v2548, %v2547
  %v2572 = vpack.c.bf16 %v2550, %v2549
  %v2573 = vpack.c.bf16 %v2552, %v2551
  %v2574 = vpack.c.bf16 %v2554, %v2553
  %v2575 = vpack.c.bf16 %v2556, %v2555
  %v2576 = vpack.c.bf16 %v2558, %v2557
  %v2577 = vpack.c.bf16 %v2560, %v2559
  %v2578 = vpack.c.bf16 %v2562, %v2561
  %v2580 = vsel %vm184, %v2563, 0
  %v2583 = vsel %vm184, %v2564, 0
  %v2586 = vsel %vm184, %v2565, 0
  %v2589 = vsel %vm184, %v2566, 0
  %v2592 = vsel %vm184, %v2567, 0
  %v2595 = vsel %vm184, %v2568, 0
  %v2598 = vsel %vm184, %v2569, 0
  %v2601 = vsel %vm184, %v2570, 0
  %v2604 = vsel %vm184, %v2571, 0
  %v2607 = vsel %vm184, %v2572, 0
  %v2610 = vsel %vm184, %v2573, 0
  %v2613 = vsel %vm184, %v2574, 0
  %v2616 = vsel %vm184, %v2575, 0
  %v2619 = vsel %vm184, %v2576, 0
  %v2622 = vsel %vm184, %v2577, 0
  %v2625 = vsel %vm184, %v2578, 0
  %2627 = vmatprep.subr.bf16.mxu0 0
  %2628 = vmatpush1.bf16.msra.mxu0 0
  %2629 = vmatprep.subr.bf16.mxu0 0
  %2630 = vmatpush1.bf16.msra.mxu0 0
  %2631 = vmatprep.subr.bf16.mxu0 0
  %2632 = vmatpush1.bf16.msra.mxu0 0
  %2633 = vmatprep.subr.bf16.mxu0 0
  %2634 = vmatpush1.bf16.msra.mxu0 0
  %2635 = vmatprep.subr.bf16.mxu0 0
  %2636 = vmatpush1.bf16.msra.mxu0 0
  %2637 = vmatprep.subr.bf16.mxu0 0
  %2638 = vmatpush1.bf16.msra.mxu0 0
  %2639 = vmatprep.subr.bf16.mxu0 0
  %2640 = vmatpush1.bf16.msra.mxu0 %v989
  %2641 = vmatprep.subr.bf16.mxu0 0
  %2642 = vmatpush1.bf16.msra.mxu0 %v988
  %2643 = vmatprep.subr.bf16.mxu0 0
  %2644 = vmatpush2.bf16.msra.mxu0 0
  %2645 = vmatprep.subr.bf16.mxu0 0
  %2646 = vmatpush2.bf16.msra.mxu0 0
  %2647 = vmatprep.subr.bf16.mxu0 0
  %2648 = vmatpush2.bf16.msra.mxu0 0
  %2649 = vmatprep.subr.bf16.mxu0 0
  %2650 = vmatpush2.bf16.msra.mxu0 0
  %2651 = vmatprep.subr.bf16.mxu0 0
  %2652 = vmatpush2.bf16.msra.mxu0 0
  %2653 = vmatprep.subr.bf16.mxu0 0
  %2654 = vmatpush2.bf16.msra.mxu0 0
  %2655 = vmatprep.subr.bf16.mxu0 0
  %2656 = vmatpush2.bf16.msra.mxu0 0
  %2657 = vmatprep.subr.bf16.mxu0 0
  %2658 = vmatpush2.bf16.msra.mxu0 0
  %2659 = vmatprep.mubr.bf16.mxu0 0
  %2660 = vmatmul.mubr.bf16.gmra.mxu0 %v2580
  %v2661 = vpop.f32.mrf.mxu0
  %v2662 = vadd.f32 %v55, %v2661
  %v2663 = vpop.f32.mrf.mxu0
  %v2664 = vpop.f32.mrf.mxu0
  %v2665 = vadd.f32 %v55, %v2664
  %v2666 = vpop.f32.mrf.mxu0
  %2667 = vmatprep.mubr.bf16.mxu0 0
  %2668 = vmatmul.mubr.bf16.gmra.mxu0 %v2583
  %v2669 = vpop.f32.mrf.mxu0
  %v2670 = vadd.f32 %v55, %v2669
  %v2671 = vpop.f32.mrf.mxu0
  %v2672 = vpop.f32.mrf.mxu0
  %v2673 = vadd.f32 %v55, %v2672
  %v2674 = vpop.f32.mrf.mxu0
  %2675 = vmatprep.mubr.bf16.mxu0 0
  %2676 = vmatmul.mubr.bf16.gmra.mxu0 %v2586
  %v2677 = vpop.f32.mrf.mxu0
  %v2678 = vadd.f32 %v55, %v2677
  %v2679 = vpop.f32.mrf.mxu0
  %v2680 = vpop.f32.mrf.mxu0
  %v2681 = vadd.f32 %v55, %v2680
  %v2682 = vpop.f32.mrf.mxu0
  %2683 = vmatprep.mubr.bf16.mxu0 0
  %2684 = vmatmul.mubr.bf16.gmra.mxu0 %v2589
  %v2685 = vpop.f32.mrf.mxu0
  %v2686 = vadd.f32 %v55, %v2685
  %v2687 = vpop.f32.mrf.mxu0
  %v2688 = vpop.f32.mrf.mxu0
  %v2689 = vadd.f32 %v55, %v2688
  %v2690 = vpop.f32.mrf.mxu0
  %2691 = vmatprep.mubr.bf16.mxu0 0
  %2692 = vmatmul.mubr.bf16.gmra.mxu0 %v2592
  %v2693 = vpop.f32.mrf.mxu0
  %v2694 = vadd.f32 %v55, %v2693
  %v2695 = vpop.f32.mrf.mxu0
  %v2696 = vpop.f32.mrf.mxu0
  %v2697 = vadd.f32 %v55, %v2696
  %v2698 = vpop.f32.mrf.mxu0
  %2699 = vmatprep.mubr.bf16.mxu0 0
  %2700 = vmatmul.mubr.bf16.gmra.mxu0 %v2595
  %v2701 = vpop.f32.mrf.mxu0
  %v2702 = vadd.f32 %v55, %v2701
  %v2703 = vpop.f32.mrf.mxu0
  %v2704 = vpop.f32.mrf.mxu0
  %v2705 = vadd.f32 %v55, %v2704
  %v2706 = vpop.f32.mrf.mxu0
  %2707 = vmatprep.mubr.bf16.mxu0 0
  %2708 = vmatmul.mubr.bf16.gmra.mxu0 %v2598
  %v2709 = vpop.f32.mrf.mxu0
  %v2710 = vadd.f32 %v55, %v2709
  %v2711 = vpop.f32.mrf.mxu0
  %v2712 = vpop.f32.mrf.mxu0
  %v2713 = vadd.f32 %v55, %v2712
  %v2714 = vpop.f32.mrf.mxu0
  %2715 = vmatprep.mubr.bf16.mxu0 0
  %2716 = vmatmul.mubr.bf16.gmra.mxu0 %v2601
  %v2717 = vpop.f32.mrf.mxu0
  %v2718 = vadd.f32 %v55, %v2717
  %v2719 = vpop.f32.mrf.mxu0
  %v2720 = vpop.f32.mrf.mxu0
  %v2721 = vadd.f32 %v55, %v2720
  %v2722 = vpop.f32.mrf.mxu0
  %2723 = vmatprep.mubr.bf16.mxu0 0
  %2724 = vmatmul.mubr.bf16.gmra.mxu0 %v2604
  %v2725 = vpop.f32.mrf.mxu0
  %v2726 = vadd.f32 %v55, %v2725
  %v2727 = vpop.f32.mrf.mxu0
  %v2728 = vpop.f32.mrf.mxu0
  %v2729 = vadd.f32 %v55, %v2728
  %v2730 = vpop.f32.mrf.mxu0
  %2731 = vmatprep.mubr.bf16.mxu0 0
  %2732 = vmatmul.mubr.bf16.gmra.mxu0 %v2607
  %v2733 = vpop.f32.mrf.mxu0
  %v2734 = vadd.f32 %v55, %v2733
  %v2735 = vpop.f32.mrf.mxu0
  %v2736 = vpop.f32.mrf.mxu0
  %v2737 = vadd.f32 %v55, %v2736
  %v2738 = vpop.f32.mrf.mxu0
  %2739 = vmatprep.mubr.bf16.mxu0 0
  %2740 = vmatmul.mubr.bf16.gmra.mxu0 %v2610
  %v2741 = vpop.f32.mrf.mxu0
  %v2742 = vadd.f32 %v55, %v2741
  %v2743 = vpop.f32.mrf.mxu0
  %v2744 = vpop.f32.mrf.mxu0
  %v2745 = vadd.f32 %v55, %v2744
  %v2746 = vpop.f32.mrf.mxu0
  %2747 = vmatprep.mubr.bf16.mxu0 0
  %2748 = vmatmul.mubr.bf16.gmra.mxu0 %v2613
  %v2749 = vpop.f32.mrf.mxu0
  %v2750 = vadd.f32 %v55, %v2749
  %v2751 = vpop.f32.mrf.mxu0
  %v2752 = vpop.f32.mrf.mxu0
  %v2753 = vadd.f32 %v55, %v2752
  %v2754 = vpop.f32.mrf.mxu0
  %2755 = vmatprep.mubr.bf16.mxu0 0
  %2756 = vmatmul.mubr.bf16.gmra.mxu0 %v2616
  %v2757 = vpop.f32.mrf.mxu0
  %v2758 = vadd.f32 %v55, %v2757
  %v2759 = vpop.f32.mrf.mxu0
  %v2760 = vpop.f32.mrf.mxu0
  %v2761 = vadd.f32 %v55, %v2760
  %v2762 = vpop.f32.mrf.mxu0
  %2763 = vmatprep.mubr.bf16.mxu0 0
  %2764 = vmatmul.mubr.bf16.gmra.mxu0 %v2619
  %v2765 = vpop.f32.mrf.mxu0
  %v2766 = vadd.f32 %v55, %v2765
  %v2767 = vpop.f32.mrf.mxu0
  %v2768 = vpop.f32.mrf.mxu0
  %v2769 = vadd.f32 %v55, %v2768
  %v2770 = vpop.f32.mrf.mxu0
  %2771 = vmatprep.mubr.bf16.mxu0 0
  %2772 = vmatmul.mubr.bf16.gmra.mxu0 %v2622
  %v2773 = vpop.f32.mrf.mxu0
  %v2774 = vadd.f32 %v55, %v2773
  %v2775 = vpop.f32.mrf.mxu0
  %v2776 = vpop.f32.mrf.mxu0
  %v2777 = vadd.f32 %v55, %v2776
  %v2778 = vpop.f32.mrf.mxu0
  %2779 = vmatprep.mubr.bf16.mxu0 0
  %2780 = vmatmul.mubr.bf16.gmra.mxu0 %v2625
  %v2781 = vpop.f32.mrf.mxu0
  %v2782 = vadd.f32 %v55, %v2781
  %v2783 = vpop.f32.mrf.mxu0
  %v2784 = vpop.f32.mrf.mxu0
  %v2785 = vadd.f32 %v55, %v2784
  %v2786 = vpop.f32.mrf.mxu0
  %2787 = vdwg.mxu0
  %v2788 = vmax.f32 %v2662, 0.0
  %v2789 = vmax.f32 %v2665, 0.0
  %v2790 = vmax.f32 %v2670, 0.0
  %v2791 = vmax.f32 %v2673, 0.0
  %v2792 = vmax.f32 %v2678, 0.0
  %v2793 = vmax.f32 %v2681, 0.0
  %v2794 = vmax.f32 %v2686, 0.0
  %v2795 = vmax.f32 %v2689, 0.0
  %v2796 = vmax.f32 %v2694, 0.0
  %v2797 = vmax.f32 %v2697, 0.0
  %v2798 = vmax.f32 %v2702, 0.0
  %v2799 = vmax.f32 %v2705, 0.0
  %v2800 = vmax.f32 %v2710, 0.0
  %v2801 = vmax.f32 %v2713, 0.0
  %v2802 = vmax.f32 %v2718, 0.0
  %v2803 = vmax.f32 %v2721, 0.0
  %v2804 = vmax.f32 %v2726, 0.0
  %v2805 = vmax.f32 %v2729, 0.0
  %v2806 = vmax.f32 %v2734, 0.0
  %v2807 = vmax.f32 %v2737, 0.0
  %v2808 = vmax.f32 %v2742, 0.0
  %v2809 = vmax.f32 %v2745, 0.0
  %v2810 = vmax.f32 %v2750, 0.0
  %v2811 = vmax.f32 %v2753, 0.0
  %v2812 = vmax.f32 %v2758, 0.0
  %v2813 = vmax.f32 %v2761, 0.0
  %v2814 = vmax.f32 %v2766, 0.0
  %v2815 = vmax.f32 %v2769, 0.0
  %v2816 = vmax.f32 %v2774, 0.0
  %v2817 = vmax.f32 %v2777, 0.0
  %v2818 = vmax.f32 %v2782, 0.0
  %v2819 = vmax.f32 %v2785, 0.0
  %v2820 = vpack.c.bf16 %v2789, %v2788
  %v2821 = vpack.c.bf16 %v2791, %v2790
  %v2822 = vpack.c.bf16 %v2793, %v2792
  %v2823 = vpack.c.bf16 %v2795, %v2794
  %v2824 = vpack.c.bf16 %v2797, %v2796
  %v2825 = vpack.c.bf16 %v2799, %v2798
  %v2826 = vpack.c.bf16 %v2801, %v2800
  %v2827 = vpack.c.bf16 %v2803, %v2802
  %v2828 = vpack.c.bf16 %v2805, %v2804
  %v2829 = vpack.c.bf16 %v2807, %v2806
  %v2830 = vpack.c.bf16 %v2809, %v2808
  %v2831 = vpack.c.bf16 %v2811, %v2810
  %v2832 = vpack.c.bf16 %v2813, %v2812
  %v2833 = vpack.c.bf16 %v2815, %v2814
  %v2834 = vpack.c.bf16 %v2817, %v2816
  %v2835 = vpack.c.bf16 %v2819, %v2818
  %v2837 = vsel %vm184, %v2820, 0
  %v2840 = vsel %vm184, %v2821, 0
  %v2843 = vsel %vm184, %v2822, 0
  %v2846 = vsel %vm184, %v2823, 0
  %v2849 = vsel %vm184, %v2824, 0
  %v2852 = vsel %vm184, %v2825, 0
  %v2855 = vsel %vm184, %v2826, 0
  %v2858 = vsel %vm184, %v2827, 0
  %v2861 = vsel %vm184, %v2828, 0
  %v2864 = vsel %vm184, %v2829, 0
  %v2867 = vsel %vm184, %v2830, 0
  %v2870 = vsel %vm184, %v2831, 0
  %v2873 = vsel %vm184, %v2832, 0
  %v2876 = vsel %vm184, %v2833, 0
  %v2879 = vsel %vm184, %v2834, 0
  %v2882 = vsel %vm184, %v2835, 0
  %2884 = vmatprep.subr.bf16.mxu0 0
  %2885 = vmatpush1.bf16.msra.mxu0 0
  %2886 = vmatprep.subr.bf16.mxu0 0
  %2887 = vmatpush1.bf16.msra.mxu0 0
  %2888 = vmatprep.subr.bf16.mxu0 0
  %2889 = vmatpush1.bf16.msra.mxu0 0
  %2890 = vmatprep.subr.bf16.mxu0 0
  %2891 = vmatpush1.bf16.msra.mxu0 0
  %2892 = vmatprep.subr.bf16.mxu0 0
  %2893 = vmatpush1.bf16.msra.mxu0 0
  %2894 = vmatprep.subr.bf16.mxu0 0
  %2895 = vmatpush1.bf16.msra.mxu0 0
  %2896 = vmatprep.subr.bf16.mxu0 0
  %2897 = vmatpush1.bf16.msra.mxu0 %v1258
  %2898 = vmatprep.subr.bf16.mxu0 0
  %2899 = vmatpush1.bf16.msra.mxu0 %v1257
  %2900 = vmatprep.subr.bf16.mxu0 0
  %2901 = vmatpush2.bf16.msra.mxu0 0
  %2902 = vmatprep.subr.bf16.mxu0 0
  %2903 = vmatpush2.bf16.msra.mxu0 0
  %2904 = vmatprep.subr.bf16.mxu0 0
  %2905 = vmatpush2.bf16.msra.mxu0 0
  %2906 = vmatprep.subr.bf16.mxu0 0
  %2907 = vmatpush2.bf16.msra.mxu0 0
  %2908 = vmatprep.subr.bf16.mxu0 0
  %2909 = vmatpush2.bf16.msra.mxu0 0
  %2910 = vmatprep.subr.bf16.mxu0 0
  %2911 = vmatpush2.bf16.msra.mxu0 0
  %2912 = vmatprep.subr.bf16.mxu0 0
  %2913 = vmatpush2.bf16.msra.mxu0 0
  %2914 = vmatprep.subr.bf16.mxu0 0
  %2915 = vmatpush2.bf16.msra.mxu0 0
  %2916 = vmatprep.mubr.bf16.mxu0 0
  %2917 = vmatmul.mubr.bf16.gmra.mxu0 %v2837
  %v2918 = vpop.f32.mrf.mxu0
  %v2919 = vadd.f32 %v59, %v2918
  %v2920 = vpop.f32.mrf.mxu0
  %v2921 = vpop.f32.mrf.mxu0
  %v2922 = vadd.f32 %v59, %v2921
  %v2923 = vpop.f32.mrf.mxu0
  %2924 = vmatprep.mubr.bf16.mxu0 0
  %2925 = vmatmul.mubr.bf16.gmra.mxu0 %v2840
  %v2926 = vpop.f32.mrf.mxu0
  %v2927 = vadd.f32 %v59, %v2926
  %v2928 = vpop.f32.mrf.mxu0
  %v2929 = vpop.f32.mrf.mxu0
  %v2930 = vadd.f32 %v59, %v2929
  %v2931 = vpop.f32.mrf.mxu0
  %2932 = vmatprep.mubr.bf16.mxu0 0
  %2933 = vmatmul.mubr.bf16.gmra.mxu0 %v2843
  %v2934 = vpop.f32.mrf.mxu0
  %v2935 = vadd.f32 %v59, %v2934
  %v2936 = vpop.f32.mrf.mxu0
  %v2937 = vpop.f32.mrf.mxu0
  %v2938 = vadd.f32 %v59, %v2937
  %v2939 = vpop.f32.mrf.mxu0
  %2940 = vmatprep.mubr.bf16.mxu0 0
  %2941 = vmatmul.mubr.bf16.gmra.mxu0 %v2846
  %v2942 = vpop.f32.mrf.mxu0
  %v2943 = vadd.f32 %v59, %v2942
  %v2944 = vpop.f32.mrf.mxu0
  %v2945 = vpop.f32.mrf.mxu0
  %v2946 = vadd.f32 %v59, %v2945
  %v2947 = vpop.f32.mrf.mxu0
  %2948 = vmatprep.mubr.bf16.mxu0 0
  %2949 = vmatmul.mubr.bf16.gmra.mxu0 %v2849
  %v2950 = vpop.f32.mrf.mxu0
  %v2951 = vadd.f32 %v59, %v2950
  %v2952 = vpop.f32.mrf.mxu0
  %v2953 = vpop.f32.mrf.mxu0
  %v2954 = vadd.f32 %v59, %v2953
  %v2955 = vpop.f32.mrf.mxu0
  %2956 = vmatprep.mubr.bf16.mxu0 0
  %2957 = vmatmul.mubr.bf16.gmra.mxu0 %v2852
  %v2958 = vpop.f32.mrf.mxu0
  %v2959 = vadd.f32 %v59, %v2958
  %v2960 = vpop.f32.mrf.mxu0
  %v2961 = vpop.f32.mrf.mxu0
  %v2962 = vadd.f32 %v59, %v2961
  %v2963 = vpop.f32.mrf.mxu0
  %2964 = vmatprep.mubr.bf16.mxu0 0
  %2965 = vmatmul.mubr.bf16.gmra.mxu0 %v2855
  %v2966 = vpop.f32.mrf.mxu0
  %v2967 = vadd.f32 %v59, %v2966
  %v2968 = vpop.f32.mrf.mxu0
  %v2969 = vpop.f32.mrf.mxu0
  %v2970 = vadd.f32 %v59, %v2969
  %v2971 = vpop.f32.mrf.mxu0
  %2972 = vmatprep.mubr.bf16.mxu0 0
  %2973 = vmatmul.mubr.bf16.gmra.mxu0 %v2858
  %v2974 = vpop.f32.mrf.mxu0
  %v2975 = vadd.f32 %v59, %v2974
  %v2976 = vpop.f32.mrf.mxu0
  %v2977 = vpop.f32.mrf.mxu0
  %v2978 = vadd.f32 %v59, %v2977
  %v2979 = vpop.f32.mrf.mxu0
  %2980 = vmatprep.mubr.bf16.mxu0 0
  %2981 = vmatmul.mubr.bf16.gmra.mxu0 %v2861
  %v2982 = vpop.f32.mrf.mxu0
  %v2983 = vadd.f32 %v59, %v2982
  %v2984 = vpop.f32.mrf.mxu0
  %v2985 = vpop.f32.mrf.mxu0
  %v2986 = vadd.f32 %v59, %v2985
  %v2987 = vpop.f32.mrf.mxu0
  %2988 = vmatprep.mubr.bf16.mxu0 0
  %2989 = vmatmul.mubr.bf16.gmra.mxu0 %v2864
  %v2990 = vpop.f32.mrf.mxu0
  %v2991 = vadd.f32 %v59, %v2990
  %v2992 = vpop.f32.mrf.mxu0
  %v2993 = vpop.f32.mrf.mxu0
  %v2994 = vadd.f32 %v59, %v2993
  %v2995 = vpop.f32.mrf.mxu0
  %2996 = vmatprep.mubr.bf16.mxu0 0
  %2997 = vmatmul.mubr.bf16.gmra.mxu0 %v2867
  %v2998 = vpop.f32.mrf.mxu0
  %v2999 = vadd.f32 %v59, %v2998
  %v3000 = vpop.f32.mrf.mxu0
  %v3001 = vpop.f32.mrf.mxu0
  %v3002 = vadd.f32 %v59, %v3001
  %v3003 = vpop.f32.mrf.mxu0
  %3004 = vmatprep.mubr.bf16.mxu0 0
  %3005 = vmatmul.mubr.bf16.gmra.mxu0 %v2870
  %v3006 = vpop.f32.mrf.mxu0
  %v3007 = vadd.f32 %v59, %v3006
  %v3008 = vpop.f32.mrf.mxu0
  %v3009 = vpop.f32.mrf.mxu0
  %v3010 = vadd.f32 %v59, %v3009
  %v3011 = vpop.f32.mrf.mxu0
  %3012 = vmatprep.mubr.bf16.mxu0 0
  %3013 = vmatmul.mubr.bf16.gmra.mxu0 %v2873
  %v3014 = vpop.f32.mrf.mxu0
  %v3015 = vadd.f32 %v59, %v3014
  %v3016 = vpop.f32.mrf.mxu0
  %v3017 = vpop.f32.mrf.mxu0
  %v3018 = vadd.f32 %v59, %v3017
  %v3019 = vpop.f32.mrf.mxu0
  %3020 = vmatprep.mubr.bf16.mxu0 0
  %3021 = vmatmul.mubr.bf16.gmra.mxu0 %v2876
  %v3022 = vpop.f32.mrf.mxu0
  %v3023 = vadd.f32 %v59, %v3022
  %v3024 = vpop.f32.mrf.mxu0
  %v3025 = vpop.f32.mrf.mxu0
  %v3026 = vadd.f32 %v59, %v3025
  %v3027 = vpop.f32.mrf.mxu0
  %3028 = vmatprep.mubr.bf16.mxu0 0
  %3029 = vmatmul.mubr.bf16.gmra.mxu0 %v2879
  %v3030 = vpop.f32.mrf.mxu0
  %v3031 = vadd.f32 %v59, %v3030
  %v3032 = vpop.f32.mrf.mxu0
  %v3033 = vpop.f32.mrf.mxu0
  %v3034 = vadd.f32 %v59, %v3033
  %v3035 = vpop.f32.mrf.mxu0
  %3036 = vmatprep.mubr.bf16.mxu0 0
  %3037 = vmatmul.mubr.bf16.gmra.mxu0 %v2882
  %v3038 = vpop.f32.mrf.mxu0
  %v3039 = vadd.f32 %v59, %v3038
  %v3040 = vpop.f32.mrf.mxu0
  %v3041 = vpop.f32.mrf.mxu0
  %v3042 = vadd.f32 %v59, %v3041
  %v3043 = vpop.f32.mrf.mxu0
  %3044 = vdwg.mxu0
  %v3045 = vxor.u32 %v2919, 2147483648
  %v3046 = vxor.u32 %v2922, 2147483648
  %v3047 = vxor.u32 %v2927, 2147483648
  %v3048 = vxor.u32 %v2930, 2147483648
  %v3049 = vxor.u32 %v2935, 2147483648
  %v3050 = vxor.u32 %v2938, 2147483648
  %v3051 = vxor.u32 %v2943, 2147483648
  %v3052 = vxor.u32 %v2946, 2147483648
  %v3053 = vxor.u32 %v2951, 2147483648
  %v3054 = vxor.u32 %v2954, 2147483648
  %v3055 = vxor.u32 %v2959, 2147483648
  %v3056 = vxor.u32 %v2962, 2147483648
  %v3057 = vxor.u32 %v2967, 2147483648
  %v3058 = vxor.u32 %v2970, 2147483648
  %v3059 = vxor.u32 %v2975, 2147483648
  %v3060 = vxor.u32 %v2978, 2147483648
  %v3061 = vxor.u32 %v2983, 2147483648
  %v3062 = vxor.u32 %v2986, 2147483648
  %v3063 = vxor.u32 %v2991, 2147483648
  %v3064 = vxor.u32 %v2994, 2147483648
  %v3065 = vxor.u32 %v2999, 2147483648
  %v3066 = vxor.u32 %v3002, 2147483648
  %v3067 = vxor.u32 %v3007, 2147483648
  %v3068 = vxor.u32 %v3010, 2147483648
  %v3069 = vxor.u32 %v3015, 2147483648
  %v3070 = vxor.u32 %v3018, 2147483648
  %v3071 = vxor.u32 %v3023, 2147483648
  %v3072 = vxor.u32 %v3026, 2147483648
  %v3073 = vxor.u32 %v3031, 2147483648
  %v3074 = vxor.u32 %v3034, 2147483648
  %v3075 = vxor.u32 %v3039, 2147483648
  %v3076 = vxor.u32 %v3042, 2147483648
  %v3077 = vmul.f32 %v3045, 1.442695
  %v3078 = vpow.pop %v3077
  %v3079 = vmul.f32 %v3046, 1.442695
  %v3080 = vpow.pop %v3079
  %v3081 = vmul.f32 %v3047, 1.442695
  %v3082 = vpow.pop %v3081
  %v3083 = vmul.f32 %v3048, 1.442695
  %v3084 = vpow.pop %v3083
  %v3085 = vmul.f32 %v3049, 1.442695
  %v3086 = vpow.pop %v3085
  %v3087 = vmul.f32 %v3050, 1.442695
  %v3088 = vpow.pop %v3087
  %v3089 = vmul.f32 %v3051, 1.442695
  %v3090 = vpow.pop %v3089
  %v3091 = vmul.f32 %v3052, 1.442695
  %v3092 = vpow.pop %v3091
  %v3093 = vmul.f32 %v3053, 1.442695
  %v3094 = vpow.pop %v3093
  %v3095 = vmul.f32 %v3054, 1.442695
  %v3096 = vpow.pop %v3095
  %v3097 = vmul.f32 %v3055, 1.442695
  %v3098 = vpow.pop %v3097
  %v3099 = vmul.f32 %v3056, 1.442695
  %v3100 = vpow.pop %v3099
  %v3101 = vmul.f32 %v3057, 1.442695
  %v3102 = vpow.pop %v3101
  %v3103 = vmul.f32 %v3058, 1.442695
  %v3104 = vpow.pop %v3103
  %v3105 = vmul.f32 %v3059, 1.442695
  %v3106 = vpow.pop %v3105
  %v3107 = vmul.f32 %v3060, 1.442695
  %v3108 = vpow.pop %v3107
  %v3109 = vmul.f32 %v3061, 1.442695
  %v3110 = vpow.pop %v3109
  %v3111 = vmul.f32 %v3062, 1.442695
  %v3112 = vpow.pop %v3111
  %v3113 = vmul.f32 %v3063, 1.442695
  %v3114 = vpow.pop %v3113
  %v3115 = vmul.f32 %v3064, 1.442695
  %v3116 = vpow.pop %v3115
  %v3117 = vmul.f32 %v3065, 1.442695
  %v3118 = vpow.pop %v3117
  %v3119 = vmul.f32 %v3066, 1.442695
  %v3120 = vpow.pop %v3119
  %v3121 = vmul.f32 %v3067, 1.442695
  %v3122 = vpow.pop %v3121
  %v3123 = vmul.f32 %v3068, 1.442695
  %v3124 = vpow.pop %v3123
  %v3125 = vmul.f32 %v3069, 1.442695
  %v3126 = vpow.pop %v3125
  %v3127 = vmul.f32 %v3070, 1.442695
  %v3128 = vpow.pop %v3127
  %v3129 = vmul.f32 %v3071, 1.442695
  %v3130 = vpow.pop %v3129
  %v3131 = vmul.f32 %v3072, 1.442695
  %v3132 = vpow.pop %v3131
  %v3133 = vmul.f32 %v3073, 1.442695
  %v3134 = vpow.pop %v3133
  %v3135 = vmul.f32 %v3074, 1.442695
  %v3136 = vpow.pop %v3135
  %v3137 = vmul.f32 %v3075, 1.442695
  %v3138 = vpow.pop %v3137
  %v3139 = vmul.f32 %v3076, 1.442695
  %v3140 = vpow.pop %v3139
  %v3141 = vadd.f32 %v3078, 1.0
  %v3142 = vadd.f32 %v3080, 1.0
  %v3143 = vadd.f32 %v3082, 1.0
  %v3144 = vadd.f32 %v3084, 1.0
  %v3145 = vadd.f32 %v3086, 1.0
  %v3146 = vadd.f32 %v3088, 1.0
  %v3147 = vadd.f32 %v3090, 1.0
  %v3148 = vadd.f32 %v3092, 1.0
  %v3149 = vadd.f32 %v3094, 1.0
  %v3150 = vadd.f32 %v3096, 1.0
  %v3151 = vadd.f32 %v3098, 1.0
  %v3152 = vadd.f32 %v3100, 1.0
  %v3153 = vadd.f32 %v3102, 1.0
  %v3154 = vadd.f32 %v3104, 1.0
  %v3155 = vadd.f32 %v3106, 1.0
  %v3156 = vadd.f32 %v3108, 1.0
  %v3157 = vadd.f32 %v3110, 1.0
  %v3158 = vadd.f32 %v3112, 1.0
  %v3159 = vadd.f32 %v3114, 1.0
  %v3160 = vadd.f32 %v3116, 1.0
  %v3161 = vadd.f32 %v3118, 1.0
  %v3162 = vadd.f32 %v3120, 1.0
  %v3163 = vadd.f32 %v3122, 1.0
  %v3164 = vadd.f32 %v3124, 1.0
  %v3165 = vadd.f32 %v3126, 1.0
  %v3166 = vadd.f32 %v3128, 1.0
  %v3167 = vadd.f32 %v3130, 1.0
  %v3168 = vadd.f32 %v3132, 1.0
  %v3169 = vadd.f32 %v3134, 1.0
  %v3170 = vadd.f32 %v3136, 1.0
  %v3171 = vadd.f32 %v3138, 1.0
  %v3172 = vadd.f32 %v3140, 1.0
  %v3173 = vrcp.pop %v3141
  %v3174 = vmul.f32 1.0, %v3173
  %v3175 = vrcp.pop %v3142
  %v3176 = vmul.f32 1.0, %v3175
  %v3177 = vrcp.pop %v3143
  %v3178 = vmul.f32 1.0, %v3177
  %v3179 = vrcp.pop %v3144
  %v3180 = vmul.f32 1.0, %v3179
  %v3181 = vrcp.pop %v3145
  %v3182 = vmul.f32 1.0, %v3181
  %v3183 = vrcp.pop %v3146
  %v3184 = vmul.f32 1.0, %v3183
  %v3185 = vrcp.pop %v3147
  %v3186 = vmul.f32 1.0, %v3185
  %v3187 = vrcp.pop %v3148
  %v3188 = vmul.f32 1.0, %v3187
  %v3189 = vrcp.pop %v3149
  %v3190 = vmul.f32 1.0, %v3189
  %v3191 = vrcp.pop %v3150
  %v3192 = vmul.f32 1.0, %v3191
  %v3193 = vrcp.pop %v3151
  %v3194 = vmul.f32 1.0, %v3193
  %v3195 = vrcp.pop %v3152
  %v3196 = vmul.f32 1.0, %v3195
  %v3197 = vrcp.pop %v3153
  %v3198 = vmul.f32 1.0, %v3197
  %v3199 = vrcp.pop %v3154
  %v3200 = vmul.f32 1.0, %v3199
  %v3201 = vrcp.pop %v3155
  %v3202 = vmul.f32 1.0, %v3201
  %v3203 = vrcp.pop %v3156
  %v3204 = vmul.f32 1.0, %v3203
  %v3205 = vrcp.pop %v3157
  %v3206 = vmul.f32 1.0, %v3205
  %v3207 = vrcp.pop %v3158
  %v3208 = vmul.f32 1.0, %v3207
  %v3209 = vrcp.pop %v3159
  %v3210 = vmul.f32 1.0, %v3209
  %v3211 = vrcp.pop %v3160
  %v3212 = vmul.f32 1.0, %v3211
  %v3213 = vrcp.pop %v3161
  %v3214 = vmul.f32 1.0, %v3213
  %v3215 = vrcp.pop %v3162
  %v3216 = vmul.f32 1.0, %v3215
  %v3217 = vrcp.pop %v3163
  %v3218 = vmul.f32 1.0, %v3217
  %v3219 = vrcp.pop %v3164
  %v3220 = vmul.f32 1.0, %v3219
  %v3221 = vrcp.pop %v3165
  %v3222 = vmul.f32 1.0, %v3221
  %v3223 = vrcp.pop %v3166
  %v3224 = vmul.f32 1.0, %v3223
  %v3225 = vrcp.pop %v3167
  %v3226 = vmul.f32 1.0, %v3225
  %v3227 = vrcp.pop %v3168
  %v3228 = vmul.f32 1.0, %v3227
  %v3229 = vrcp.pop %v3169
  %v3230 = vmul.f32 1.0, %v3229
  %v3231 = vrcp.pop %v3170
  %v3232 = vmul.f32 1.0, %v3231
  %v3233 = vrcp.pop %v3171
  %v3234 = vmul.f32 1.0, %v3233
  %v3235 = vrcp.pop %v3172
  %v3236 = vmul.f32 1.0, %v3235
  %s3237 = scalar_lea.vmem %s3, 256
  %3238 = vst.msk [vmem:[%s3237] sm:$0xff] %vm1662, %v3174
  %3239 = vst.msk [vmem:[%s3237 + $0x8] sm:$0xff] %vm1662, %v3176
  %3240 = vst.msk [vmem:[%s3237 + $0x10] sm:$0xff] %vm1662, %v3178
  %3241 = vst.msk [vmem:[%s3237 + $0x18] sm:$0xff] %vm1662, %v3180
  %3242 = vst.msk [vmem:[%s3237 + $0x20] sm:$0xff] %vm1662, %v3182
  %3243 = vst.msk [vmem:[%s3237 + $0x28] sm:$0xff] %vm1662, %v3184
  %3244 = vst.msk [vmem:[%s3237 + $0x30] sm:$0xff] %vm1662, %v3186
  %3245 = vst.msk [vmem:[%s3237 + $0x38] sm:$0xff] %vm1662, %v3188
  %3246 = vst.msk [vmem:[%s3237 + $0x40] sm:$0xff] %vm1662, %v3190
  %3247 = vst.msk [vmem:[%s3237 + $0x48] sm:$0xff] %vm1662, %v3192
  %3248 = vst.msk [vmem:[%s3237 + $0x50] sm:$0xff] %vm1662, %v3194
  %3249 = vst.msk [vmem:[%s3237 + $0x58] sm:$0xff] %vm1662, %v3196
  %3250 = vst.msk [vmem:[%s3237 + $0x60] sm:$0xff] %vm1662, %v3198
  %3251 = vst.msk [vmem:[%s3237 + $0x68] sm:$0xff] %vm1662, %v3200
  %3252 = vst.msk [vmem:[%s3237 + $0x70] sm:$0xff] %vm1662, %v3202
  %3253 = vst.msk [vmem:[%s3237 + $0x78] sm:$0xff] %vm1662, %v3204
  %3254 = vst.msk [vmem:[%s3237 + $0x80] sm:$0xff] %vm1662, %v3206
  %3255 = vst.msk [vmem:[%s3237 + $0x88] sm:$0xff] %vm1662, %v3208
  %3256 = vst.msk [vmem:[%s3237 + $0x90] sm:$0xff] %vm1662, %v3210
  %3257 = vst.msk [vmem:[%s3237 + $0x98] sm:$0xff] %vm1662, %v3212
  %3258 = vst.msk [vmem:[%s3237 + $0xa0] sm:$0xff] %vm1662, %v3214
  %3259 = vst.msk [vmem:[%s3237 + $0xa8] sm:$0xff] %vm1662, %v3216
  %3260 = vst.msk [vmem:[%s3237 + $0xb0] sm:$0xff] %vm1662, %v3218
  %3261 = vst.msk [vmem:[%s3237 + $0xb8] sm:$0xff] %vm1662, %v3220
  %3262 = vst.msk [vmem:[%s3237 + $0xc0] sm:$0xff] %vm1662, %v3222
  %3263 = vst.msk [vmem:[%s3237 + $0xc8] sm:$0xff] %vm1662, %v3224
  %3264 = vst.msk [vmem:[%s3237 + $0xd0] sm:$0xff] %vm1662, %v3226
  %3265 = vst.msk [vmem:[%s3237 + $0xd8] sm:$0xff] %vm1662, %v3228
  %3266 = vst.msk [vmem:[%s3237 + $0xe0] sm:$0xff] %vm1662, %v3230
  %3267 = vst.msk [vmem:[%s3237 + $0xe8] sm:$0xff] %vm1662, %v3232
  %3268 = vst.msk [vmem:[%s3237 + $0xf0] sm:$0xff] %vm1662, %v3234
  %3269 = vst.msk [vmem:[%s3237 + $0xf8] sm:$0xff] %vm1662, %v3236
  %s3270 = scalar_lea.vmem %s0, 256
  %v3271 = vld [vmem:[%s3270] sm:$0xf]
  %v3272 = vld [vmem:[%s3270 + $0x4] sm:$0xf]
  %v3273 = vld [vmem:[%s3270 + $0x8] sm:$0xf]
  %v3274 = vld [vmem:[%s3270 + $0xc] sm:$0xf]
  %v3275 = vld [vmem:[%s3270 + $0x10] sm:$0xf]
  %v3276 = vld [vmem:[%s3270 + $0x14] sm:$0xf]
  %v3277 = vld [vmem:[%s3270 + $0x18] sm:$0xf]
  %v3278 = vld [vmem:[%s3270 + $0x1c] sm:$0xf]
  %v3279 = vld [vmem:[%s3270 + $0x20] sm:$0xf]
  %v3280 = vld [vmem:[%s3270 + $0x24] sm:$0xf]
  %v3281 = vld [vmem:[%s3270 + $0x28] sm:$0xf]
  %v3282 = vld [vmem:[%s3270 + $0x2c] sm:$0xf]
  %v3283 = vld [vmem:[%s3270 + $0x30] sm:$0xf]
  %v3284 = vld [vmem:[%s3270 + $0x34] sm:$0xf]
  %v3285 = vld [vmem:[%s3270 + $0x38] sm:$0xf]
  %v3286 = vld [vmem:[%s3270 + $0x3c] sm:$0xf]
  %v3287 = vld [vmem:[%s3270 + $0x40] sm:$0xf]
  %v3288 = vld [vmem:[%s3270 + $0x44] sm:$0xf]
  %v3289 = vld [vmem:[%s3270 + $0x48] sm:$0xf]
  %v3290 = vld [vmem:[%s3270 + $0x4c] sm:$0xf]
  %v3291 = vld [vmem:[%s3270 + $0x50] sm:$0xf]
  %v3292 = vld [vmem:[%s3270 + $0x54] sm:$0xf]
  %v3293 = vld [vmem:[%s3270 + $0x58] sm:$0xf]
  %v3294 = vld [vmem:[%s3270 + $0x5c] sm:$0xf]
  %v3295 = vld [vmem:[%s3270 + $0x60] sm:$0xf]
  %v3296 = vld [vmem:[%s3270 + $0x64] sm:$0xf]
  %v3297 = vld [vmem:[%s3270 + $0x68] sm:$0xf]
  %v3298 = vld [vmem:[%s3270 + $0x6c] sm:$0xf]
  %v3299 = vld [vmem:[%s3270 + $0x70] sm:$0xf]
  %v3300 = vld [vmem:[%s3270 + $0x74] sm:$0xf]
  %v3301 = vld [vmem:[%s3270 + $0x78] sm:$0xf]
  %v3302 = vld [vmem:[%s3270 + $0x7c] sm:$0xf]
  %v3335 = vunpack.c.l.b16 %v3271
  %v3336 = vunpack.c.l.b16 %v3272
  %v3337 = vunpack.c.l.b16 %v3273
  %v3338 = vunpack.c.l.b16 %v3274
  %v3339 = vunpack.c.l.b16 %v3275
  %v3340 = vunpack.c.l.b16 %v3276
  %v3341 = vunpack.c.l.b16 %v3277
  %v3342 = vunpack.c.l.b16 %v3278
  %v3343 = vunpack.c.l.b16 %v3279
  %v3344 = vunpack.c.l.b16 %v3280
  %v3345 = vunpack.c.l.b16 %v3281
  %v3346 = vunpack.c.l.b16 %v3282
  %v3347 = vunpack.c.l.b16 %v3283
  %v3348 = vunpack.c.l.b16 %v3284
  %v3349 = vunpack.c.l.b16 %v3285
  %v3350 = vunpack.c.l.b16 %v3286
  %v3351 = vunpack.c.l.b16 %v3287
  %v3352 = vunpack.c.l.b16 %v3288
  %v3353 = vunpack.c.l.b16 %v3289
  %v3354 = vunpack.c.l.b16 %v3290
  %v3355 = vunpack.c.l.b16 %v3291
  %v3356 = vunpack.c.l.b16 %v3292
  %v3357 = vunpack.c.l.b16 %v3293
  %v3358 = vunpack.c.l.b16 %v3294
  %v3359 = vunpack.c.l.b16 %v3295
  %v3360 = vunpack.c.l.b16 %v3296
  %v3361 = vunpack.c.l.b16 %v3297
  %v3362 = vunpack.c.l.b16 %v3298
  %v3363 = vunpack.c.l.b16 %v3299
  %v3364 = vunpack.c.l.b16 %v3300
  %v3365 = vunpack.c.l.b16 %v3301
  %v3366 = vunpack.c.l.b16 %v3302
  %v3367 = vpack.c.b16 %v3336, %v3335
  %v3368 = vpack.c.b16 %v3338, %v3337
  %v3369 = vpack.c.b16 %v3340, %v3339
  %v3370 = vpack.c.b16 %v3342, %v3341
  %v3371 = vpack.c.b16 %v3344, %v3343
  %v3372 = vpack.c.b16 %v3346, %v3345
  %v3373 = vpack.c.b16 %v3348, %v3347
  %v3374 = vpack.c.b16 %v3350, %v3349
  %v3375 = vpack.c.b16 %v3352, %v3351
  %v3376 = vpack.c.b16 %v3354, %v3353
  %v3377 = vpack.c.b16 %v3356, %v3355
  %v3378 = vpack.c.b16 %v3358, %v3357
  %v3379 = vpack.c.b16 %v3360, %v3359
  %v3380 = vpack.c.b16 %v3362, %v3361
  %v3381 = vpack.c.b16 %v3364, %v3363
  %v3382 = vpack.c.b16 %v3366, %v3365
  %v3384 = vsel %vm184, %v3367, 0
  %v3387 = vsel %vm184, %v3368, 0
  %v3390 = vsel %vm184, %v3369, 0
  %v3393 = vsel %vm184, %v3370, 0
  %v3396 = vsel %vm184, %v3371, 0
  %v3399 = vsel %vm184, %v3372, 0
  %v3402 = vsel %vm184, %v3373, 0
  %v3405 = vsel %vm184, %v3374, 0
  %v3408 = vsel %vm184, %v3375, 0
  %v3411 = vsel %vm184, %v3376, 0
  %v3414 = vsel %vm184, %v3377, 0
  %v3417 = vsel %vm184, %v3378, 0
  %v3420 = vsel %vm184, %v3379, 0
  %v3423 = vsel %vm184, %v3380, 0
  %v3426 = vsel %vm184, %v3381, 0
  %v3429 = vsel %vm184, %v3382, 0
  %3431 = vmatprep.subr.bf16.mxu0 0
  %3432 = vmatpush1.bf16.msra.mxu0 0
  %3433 = vmatprep.subr.bf16.mxu0 0
  %3434 = vmatpush1.bf16.msra.mxu0 0
  %3435 = vmatprep.subr.bf16.mxu0 0
  %3436 = vmatpush1.bf16.msra.mxu0 0
  %3437 = vmatprep.subr.bf16.mxu0 0
  %3438 = vmatpush1.bf16.msra.mxu0 0
  %3439 = vmatprep.subr.bf16.mxu0 0
  %3440 = vmatpush1.bf16.msra.mxu0 0
  %3441 = vmatprep.subr.bf16.mxu0 0
  %3442 = vmatpush1.bf16.msra.mxu0 0
  %3443 = vmatprep.subr.bf16.mxu0 0
  %3444 = vmatpush1.bf16.msra.mxu0 %v181
  %3445 = vmatprep.subr.bf16.mxu0 0
  %3446 = vmatpush1.bf16.msra.mxu0 %v180
  %3447 = vmatprep.subr.bf16.mxu0 0
  %3448 = vmatpush2.bf16.msra.mxu0 0
  %3449 = vmatprep.subr.bf16.mxu0 0
  %3450 = vmatpush2.bf16.msra.mxu0 0
  %3451 = vmatprep.subr.bf16.mxu0 0
  %3452 = vmatpush2.bf16.msra.mxu0 0
  %3453 = vmatprep.subr.bf16.mxu0 0
  %3454 = vmatpush2.bf16.msra.mxu0 0
  %3455 = vmatprep.subr.bf16.mxu0 0
  %3456 = vmatpush2.bf16.msra.mxu0 0
  %3457 = vmatprep.subr.bf16.mxu0 0
  %3458 = vmatpush2.bf16.msra.mxu0 0
  %3459 = vmatprep.subr.bf16.mxu0 0
  %3460 = vmatpush2.bf16.msra.mxu0 0
  %3461 = vmatprep.subr.bf16.mxu0 0
  %3462 = vmatpush2.bf16.msra.mxu0 0
  %3463 = vmatprep.mubr.bf16.mxu0 0
  %3464 = vmatmul.mubr.bf16.gmra.mxu0 %v3384
  %v3465 = vpop.f32.mrf.mxu0
  %v3466 = vadd.f32 %v43, %v3465
  %v3467 = vpop.f32.mrf.mxu0
  %v3468 = vpop.f32.mrf.mxu0
  %v3469 = vadd.f32 %v43, %v3468
  %v3470 = vpop.f32.mrf.mxu0
  %3471 = vmatprep.mubr.bf16.mxu0 0
  %3472 = vmatmul.mubr.bf16.gmra.mxu0 %v3387
  %v3473 = vpop.f32.mrf.mxu0
  %v3474 = vadd.f32 %v43, %v3473
  %v3475 = vpop.f32.mrf.mxu0
  %v3476 = vpop.f32.mrf.mxu0
  %v3477 = vadd.f32 %v43, %v3476
  %v3478 = vpop.f32.mrf.mxu0
  %3479 = vmatprep.mubr.bf16.mxu0 0
  %3480 = vmatmul.mubr.bf16.gmra.mxu0 %v3390
  %v3481 = vpop.f32.mrf.mxu0
  %v3482 = vadd.f32 %v43, %v3481
  %v3483 = vpop.f32.mrf.mxu0
  %v3484 = vpop.f32.mrf.mxu0
  %v3485 = vadd.f32 %v43, %v3484
  %v3486 = vpop.f32.mrf.mxu0
  %3487 = vmatprep.mubr.bf16.mxu0 0
  %3488 = vmatmul.mubr.bf16.gmra.mxu0 %v3393
  %v3489 = vpop.f32.mrf.mxu0
  %v3490 = vadd.f32 %v43, %v3489
  %v3491 = vpop.f32.mrf.mxu0
  %v3492 = vpop.f32.mrf.mxu0
  %v3493 = vadd.f32 %v43, %v3492
  %v3494 = vpop.f32.mrf.mxu0
  %3495 = vmatprep.mubr.bf16.mxu0 0
  %3496 = vmatmul.mubr.bf16.gmra.mxu0 %v3396
  %v3497 = vpop.f32.mrf.mxu0
  %v3498 = vadd.f32 %v43, %v3497
  %v3499 = vpop.f32.mrf.mxu0
  %v3500 = vpop.f32.mrf.mxu0
  %v3501 = vadd.f32 %v43, %v3500
  %v3502 = vpop.f32.mrf.mxu0
  %3503 = vmatprep.mubr.bf16.mxu0 0
  %3504 = vmatmul.mubr.bf16.gmra.mxu0 %v3399
  %v3505 = vpop.f32.mrf.mxu0
  %v3506 = vadd.f32 %v43, %v3505
  %v3507 = vpop.f32.mrf.mxu0
  %v3508 = vpop.f32.mrf.mxu0
  %v3509 = vadd.f32 %v43, %v3508
  %v3510 = vpop.f32.mrf.mxu0
  %3511 = vmatprep.mubr.bf16.mxu0 0
  %3512 = vmatmul.mubr.bf16.gmra.mxu0 %v3402
  %v3513 = vpop.f32.mrf.mxu0
  %v3514 = vadd.f32 %v43, %v3513
  %v3515 = vpop.f32.mrf.mxu0
  %v3516 = vpop.f32.mrf.mxu0
  %v3517 = vadd.f32 %v43, %v3516
  %v3518 = vpop.f32.mrf.mxu0
  %3519 = vmatprep.mubr.bf16.mxu0 0
  %3520 = vmatmul.mubr.bf16.gmra.mxu0 %v3405
  %v3521 = vpop.f32.mrf.mxu0
  %v3522 = vadd.f32 %v43, %v3521
  %v3523 = vpop.f32.mrf.mxu0
  %v3524 = vpop.f32.mrf.mxu0
  %v3525 = vadd.f32 %v43, %v3524
  %v3526 = vpop.f32.mrf.mxu0
  %3527 = vmatprep.mubr.bf16.mxu0 0
  %3528 = vmatmul.mubr.bf16.gmra.mxu0 %v3408
  %v3529 = vpop.f32.mrf.mxu0
  %v3530 = vadd.f32 %v43, %v3529
  %v3531 = vpop.f32.mrf.mxu0
  %v3532 = vpop.f32.mrf.mxu0
  %v3533 = vadd.f32 %v43, %v3532
  %v3534 = vpop.f32.mrf.mxu0
  %3535 = vmatprep.mubr.bf16.mxu0 0
  %3536 = vmatmul.mubr.bf16.gmra.mxu0 %v3411
  %v3537 = vpop.f32.mrf.mxu0
  %v3538 = vadd.f32 %v43, %v3537
  %v3539 = vpop.f32.mrf.mxu0
  %v3540 = vpop.f32.mrf.mxu0
  %v3541 = vadd.f32 %v43, %v3540
  %v3542 = vpop.f32.mrf.mxu0
  %3543 = vmatprep.mubr.bf16.mxu0 0
  %3544 = vmatmul.mubr.bf16.gmra.mxu0 %v3414
  %v3545 = vpop.f32.mrf.mxu0
  %v3546 = vadd.f32 %v43, %v3545
  %v3547 = vpop.f32.mrf.mxu0
  %v3548 = vpop.f32.mrf.mxu0
  %v3549 = vadd.f32 %v43, %v3548
  %v3550 = vpop.f32.mrf.mxu0
  %3551 = vmatprep.mubr.bf16.mxu0 0
  %3552 = vmatmul.mubr.bf16.gmra.mxu0 %v3417
  %v3553 = vpop.f32.mrf.mxu0
  %v3554 = vadd.f32 %v43, %v3553
  %v3555 = vpop.f32.mrf.mxu0
  %v3556 = vpop.f32.mrf.mxu0
  %v3557 = vadd.f32 %v43, %v3556
  %v3558 = vpop.f32.mrf.mxu0
  %3559 = vmatprep.mubr.bf16.mxu0 0
  %3560 = vmatmul.mubr.bf16.gmra.mxu0 %v3420
  %v3561 = vpop.f32.mrf.mxu0
  %v3562 = vadd.f32 %v43, %v3561
  %v3563 = vpop.f32.mrf.mxu0
  %v3564 = vpop.f32.mrf.mxu0
  %v3565 = vadd.f32 %v43, %v3564
  %v3566 = vpop.f32.mrf.mxu0
  %3567 = vmatprep.mubr.bf16.mxu0 0
  %3568 = vmatmul.mubr.bf16.gmra.mxu0 %v3423
  %v3569 = vpop.f32.mrf.mxu0
  %v3570 = vadd.f32 %v43, %v3569
  %v3571 = vpop.f32.mrf.mxu0
  %v3572 = vpop.f32.mrf.mxu0
  %v3573 = vadd.f32 %v43, %v3572
  %v3574 = vpop.f32.mrf.mxu0
  %3575 = vmatprep.mubr.bf16.mxu0 0
  %3576 = vmatmul.mubr.bf16.gmra.mxu0 %v3426
  %v3577 = vpop.f32.mrf.mxu0
  %v3578 = vadd.f32 %v43, %v3577
  %v3579 = vpop.f32.mrf.mxu0
  %v3580 = vpop.f32.mrf.mxu0
  %v3581 = vadd.f32 %v43, %v3580
  %v3582 = vpop.f32.mrf.mxu0
  %3583 = vmatprep.mubr.bf16.mxu0 0
  %3584 = vmatmul.mubr.bf16.gmra.mxu0 %v3429
  %v3585 = vpop.f32.mrf.mxu0
  %v3586 = vadd.f32 %v43, %v3585
  %v3587 = vpop.f32.mrf.mxu0
  %v3588 = vpop.f32.mrf.mxu0
  %v3589 = vadd.f32 %v43, %v3588
  %v3590 = vpop.f32.mrf.mxu0
  %3591 = vdwg.mxu0
  %v3592 = vmax.f32 %v3466, 0.0
  %v3593 = vmax.f32 %v3469, 0.0
  %v3594 = vmax.f32 %v3474, 0.0
  %v3595 = vmax.f32 %v3477, 0.0
  %v3596 = vmax.f32 %v3482, 0.0
  %v3597 = vmax.f32 %v3485, 0.0
  %v3598 = vmax.f32 %v3490, 0.0
  %v3599 = vmax.f32 %v3493, 0.0
  %v3600 = vmax.f32 %v3498, 0.0
  %v3601 = vmax.f32 %v3501, 0.0
  %v3602 = vmax.f32 %v3506, 0.0
  %v3603 = vmax.f32 %v3509, 0.0
  %v3604 = vmax.f32 %v3514, 0.0
  %v3605 = vmax.f32 %v3517, 0.0
  %v3606 = vmax.f32 %v3522, 0.0
  %v3607 = vmax.f32 %v3525, 0.0
  %v3608 = vmax.f32 %v3530, 0.0
  %v3609 = vmax.f32 %v3533, 0.0
  %v3610 = vmax.f32 %v3538, 0.0
  %v3611 = vmax.f32 %v3541, 0.0
  %v3612 = vmax.f32 %v3546, 0.0
  %v3613 = vmax.f32 %v3549, 0.0
  %v3614 = vmax.f32 %v3554, 0.0
  %v3615 = vmax.f32 %v3557, 0.0
  %v3616 = vmax.f32 %v3562, 0.0
  %v3617 = vmax.f32 %v3565, 0.0
  %v3618 = vmax.f32 %v3570, 0.0
  %v3619 = vmax.f32 %v3573, 0.0
  %v3620 = vmax.f32 %v3578, 0.0
  %v3621 = vmax.f32 %v3581, 0.0
  %v3622 = vmax.f32 %v3586, 0.0
  %v3623 = vmax.f32 %v3589, 0.0
  %v3624 = vpack.c.bf16 %v3593, %v3592
  %v3625 = vpack.c.bf16 %v3595, %v3594
  %v3626 = vpack.c.bf16 %v3597, %v3596
  %v3627 = vpack.c.bf16 %v3599, %v3598
  %v3628 = vpack.c.bf16 %v3601, %v3600
  %v3629 = vpack.c.bf16 %v3603, %v3602
  %v3630 = vpack.c.bf16 %v3605, %v3604
  %v3631 = vpack.c.bf16 %v3607, %v3606
  %v3632 = vpack.c.bf16 %v3609, %v3608
  %v3633 = vpack.c.bf16 %v3611, %v3610
  %v3634 = vpack.c.bf16 %v3613, %v3612
  %v3635 = vpack.c.bf16 %v3615, %v3614
  %v3636 = vpack.c.bf16 %v3617, %v3616
  %v3637 = vpack.c.bf16 %v3619, %v3618
  %v3638 = vpack.c.bf16 %v3621, %v3620
  %v3639 = vpack.c.bf16 %v3623, %v3622
  %v3641 = vsel %vm184, %v3624, 0
  %v3644 = vsel %vm184, %v3625, 0
  %v3647 = vsel %vm184, %v3626, 0
  %v3650 = vsel %vm184, %v3627, 0
  %v3653 = vsel %vm184, %v3628, 0
  %v3656 = vsel %vm184, %v3629, 0
  %v3659 = vsel %vm184, %v3630, 0
  %v3662 = vsel %vm184, %v3631, 0
  %v3665 = vsel %vm184, %v3632, 0
  %v3668 = vsel %vm184, %v3633, 0
  %v3671 = vsel %vm184, %v3634, 0
  %v3674 = vsel %vm184, %v3635, 0
  %v3677 = vsel %vm184, %v3636, 0
  %v3680 = vsel %vm184, %v3637, 0
  %v3683 = vsel %vm184, %v3638, 0
  %v3686 = vsel %vm184, %v3639, 0
  %3688 = vmatprep.subr.bf16.mxu0 0
  %3689 = vmatpush1.bf16.msra.mxu0 0
  %3690 = vmatprep.subr.bf16.mxu0 0
  %3691 = vmatpush1.bf16.msra.mxu0 0
  %3692 = vmatprep.subr.bf16.mxu0 0
  %3693 = vmatpush1.bf16.msra.mxu0 0
  %3694 = vmatprep.subr.bf16.mxu0 0
  %3695 = vmatpush1.bf16.msra.mxu0 0
  %3696 = vmatprep.subr.bf16.mxu0 0
  %3697 = vmatpush1.bf16.msra.mxu0 0
  %3698 = vmatprep.subr.bf16.mxu0 0
  %3699 = vmatpush1.bf16.msra.mxu0 0
  %3700 = vmatprep.subr.bf16.mxu0 0
  %3701 = vmatpush1.bf16.msra.mxu0 %v451
  %3702 = vmatprep.subr.bf16.mxu0 0
  %3703 = vmatpush1.bf16.msra.mxu0 %v450
  %3704 = vmatprep.subr.bf16.mxu0 0
  %3705 = vmatpush2.bf16.msra.mxu0 0
  %3706 = vmatprep.subr.bf16.mxu0 0
  %3707 = vmatpush2.bf16.msra.mxu0 0
  %3708 = vmatprep.subr.bf16.mxu0 0
  %3709 = vmatpush2.bf16.msra.mxu0 0
  %3710 = vmatprep.subr.bf16.mxu0 0
  %3711 = vmatpush2.bf16.msra.mxu0 0
  %3712 = vmatprep.subr.bf16.mxu0 0
  %3713 = vmatpush2.bf16.msra.mxu0 0
  %3714 = vmatprep.subr.bf16.mxu0 0
  %3715 = vmatpush2.bf16.msra.mxu0 0
  %3716 = vmatprep.subr.bf16.mxu0 0
  %3717 = vmatpush2.bf16.msra.mxu0 0
  %3718 = vmatprep.subr.bf16.mxu0 0
  %3719 = vmatpush2.bf16.msra.mxu0 0
  %3720 = vmatprep.mubr.bf16.mxu0 0
  %3721 = vmatmul.mubr.bf16.gmra.mxu0 %v3641
  %v3722 = vpop.f32.mrf.mxu0
  %v3723 = vadd.f32 %v47, %v3722
  %v3724 = vpop.f32.mrf.mxu0
  %v3725 = vpop.f32.mrf.mxu0
  %v3726 = vadd.f32 %v47, %v3725
  %v3727 = vpop.f32.mrf.mxu0
  %3728 = vmatprep.mubr.bf16.mxu0 0
  %3729 = vmatmul.mubr.bf16.gmra.mxu0 %v3644
  %v3730 = vpop.f32.mrf.mxu0
  %v3731 = vadd.f32 %v47, %v3730
  %v3732 = vpop.f32.mrf.mxu0
  %v3733 = vpop.f32.mrf.mxu0
  %v3734 = vadd.f32 %v47, %v3733
  %v3735 = vpop.f32.mrf.mxu0
  %3736 = vmatprep.mubr.bf16.mxu0 0
  %3737 = vmatmul.mubr.bf16.gmra.mxu0 %v3647
  %v3738 = vpop.f32.mrf.mxu0
  %v3739 = vadd.f32 %v47, %v3738
  %v3740 = vpop.f32.mrf.mxu0
  %v3741 = vpop.f32.mrf.mxu0
  %v3742 = vadd.f32 %v47, %v3741
  %v3743 = vpop.f32.mrf.mxu0
  %3744 = vmatprep.mubr.bf16.mxu0 0
  %3745 = vmatmul.mubr.bf16.gmra.mxu0 %v3650
  %v3746 = vpop.f32.mrf.mxu0
  %v3747 = vadd.f32 %v47, %v3746
  %v3748 = vpop.f32.mrf.mxu0
  %v3749 = vpop.f32.mrf.mxu0
  %v3750 = vadd.f32 %v47, %v3749
  %v3751 = vpop.f32.mrf.mxu0
  %3752 = vmatprep.mubr.bf16.mxu0 0
  %3753 = vmatmul.mubr.bf16.gmra.mxu0 %v3653
  %v3754 = vpop.f32.mrf.mxu0
  %v3755 = vadd.f32 %v47, %v3754
  %v3756 = vpop.f32.mrf.mxu0
  %v3757 = vpop.f32.mrf.mxu0
  %v3758 = vadd.f32 %v47, %v3757
  %v3759 = vpop.f32.mrf.mxu0
  %3760 = vmatprep.mubr.bf16.mxu0 0
  %3761 = vmatmul.mubr.bf16.gmra.mxu0 %v3656
  %v3762 = vpop.f32.mrf.mxu0
  %v3763 = vadd.f32 %v47, %v3762
  %v3764 = vpop.f32.mrf.mxu0
  %v3765 = vpop.f32.mrf.mxu0
  %v3766 = vadd.f32 %v47, %v3765
  %v3767 = vpop.f32.mrf.mxu0
  %3768 = vmatprep.mubr.bf16.mxu0 0
  %3769 = vmatmul.mubr.bf16.gmra.mxu0 %v3659
  %v3770 = vpop.f32.mrf.mxu0
  %v3771 = vadd.f32 %v47, %v3770
  %v3772 = vpop.f32.mrf.mxu0
  %v3773 = vpop.f32.mrf.mxu0
  %v3774 = vadd.f32 %v47, %v3773
  %v3775 = vpop.f32.mrf.mxu0
  %3776 = vmatprep.mubr.bf16.mxu0 0
  %3777 = vmatmul.mubr.bf16.gmra.mxu0 %v3662
  %v3778 = vpop.f32.mrf.mxu0
  %v3779 = vadd.f32 %v47, %v3778
  %v3780 = vpop.f32.mrf.mxu0
  %v3781 = vpop.f32.mrf.mxu0
  %v3782 = vadd.f32 %v47, %v3781
  %v3783 = vpop.f32.mrf.mxu0
  %3784 = vmatprep.mubr.bf16.mxu0 0
  %3785 = vmatmul.mubr.bf16.gmra.mxu0 %v3665
  %v3786 = vpop.f32.mrf.mxu0
  %v3787 = vadd.f32 %v47, %v3786
  %v3788 = vpop.f32.mrf.mxu0
  %v3789 = vpop.f32.mrf.mxu0
  %v3790 = vadd.f32 %v47, %v3789
  %v3791 = vpop.f32.mrf.mxu0
  %3792 = vmatprep.mubr.bf16.mxu0 0
  %3793 = vmatmul.mubr.bf16.gmra.mxu0 %v3668
  %v3794 = vpop.f32.mrf.mxu0
  %v3795 = vadd.f32 %v47, %v3794
  %v3796 = vpop.f32.mrf.mxu0
  %v3797 = vpop.f32.mrf.mxu0
  %v3798 = vadd.f32 %v47, %v3797
  %v3799 = vpop.f32.mrf.mxu0
  %3800 = vmatprep.mubr.bf16.mxu0 0
  %3801 = vmatmul.mubr.bf16.gmra.mxu0 %v3671
  %v3802 = vpop.f32.mrf.mxu0
  %v3803 = vadd.f32 %v47, %v3802
  %v3804 = vpop.f32.mrf.mxu0
  %v3805 = vpop.f32.mrf.mxu0
  %v3806 = vadd.f32 %v47, %v3805
  %v3807 = vpop.f32.mrf.mxu0
  %3808 = vmatprep.mubr.bf16.mxu0 0
  %3809 = vmatmul.mubr.bf16.gmra.mxu0 %v3674
  %v3810 = vpop.f32.mrf.mxu0
  %v3811 = vadd.f32 %v47, %v3810
  %v3812 = vpop.f32.mrf.mxu0
  %v3813 = vpop.f32.mrf.mxu0
  %v3814 = vadd.f32 %v47, %v3813
  %v3815 = vpop.f32.mrf.mxu0
  %3816 = vmatprep.mubr.bf16.mxu0 0
  %3817 = vmatmul.mubr.bf16.gmra.mxu0 %v3677
  %v3818 = vpop.f32.mrf.mxu0
  %v3819 = vadd.f32 %v47, %v3818
  %v3820 = vpop.f32.mrf.mxu0
  %v3821 = vpop.f32.mrf.mxu0
  %v3822 = vadd.f32 %v47, %v3821
  %v3823 = vpop.f32.mrf.mxu0
  %3824 = vmatprep.mubr.bf16.mxu0 0
  %3825 = vmatmul.mubr.bf16.gmra.mxu0 %v3680
  %v3826 = vpop.f32.mrf.mxu0
  %v3827 = vadd.f32 %v47, %v3826
  %v3828 = vpop.f32.mrf.mxu0
  %v3829 = vpop.f32.mrf.mxu0
  %v3830 = vadd.f32 %v47, %v3829
  %v3831 = vpop.f32.mrf.mxu0
  %3832 = vmatprep.mubr.bf16.mxu0 0
  %3833 = vmatmul.mubr.bf16.gmra.mxu0 %v3683
  %v3834 = vpop.f32.mrf.mxu0
  %v3835 = vadd.f32 %v47, %v3834
  %v3836 = vpop.f32.mrf.mxu0
  %v3837 = vpop.f32.mrf.mxu0
  %v3838 = vadd.f32 %v47, %v3837
  %v3839 = vpop.f32.mrf.mxu0
  %3840 = vmatprep.mubr.bf16.mxu0 0
  %3841 = vmatmul.mubr.bf16.gmra.mxu0 %v3686
  %v3842 = vpop.f32.mrf.mxu0
  %v3843 = vadd.f32 %v47, %v3842
  %v3844 = vpop.f32.mrf.mxu0
  %v3845 = vpop.f32.mrf.mxu0
  %v3846 = vadd.f32 %v47, %v3845
  %v3847 = vpop.f32.mrf.mxu0
  %3848 = vdwg.mxu0
  %v3849 = vmax.f32 %v3723, 0.0
  %v3850 = vmax.f32 %v3726, 0.0
  %v3851 = vmax.f32 %v3731, 0.0
  %v3852 = vmax.f32 %v3734, 0.0
  %v3853 = vmax.f32 %v3739, 0.0
  %v3854 = vmax.f32 %v3742, 0.0
  %v3855 = vmax.f32 %v3747, 0.0
  %v3856 = vmax.f32 %v3750, 0.0
  %v3857 = vmax.f32 %v3755, 0.0
  %v3858 = vmax.f32 %v3758, 0.0
  %v3859 = vmax.f32 %v3763, 0.0
  %v3860 = vmax.f32 %v3766, 0.0
  %v3861 = vmax.f32 %v3771, 0.0
  %v3862 = vmax.f32 %v3774, 0.0
  %v3863 = vmax.f32 %v3779, 0.0
  %v3864 = vmax.f32 %v3782, 0.0
  %v3865 = vmax.f32 %v3787, 0.0
  %v3866 = vmax.f32 %v3790, 0.0
  %v3867 = vmax.f32 %v3795, 0.0
  %v3868 = vmax.f32 %v3798, 0.0
  %v3869 = vmax.f32 %v3803, 0.0
  %v3870 = vmax.f32 %v3806, 0.0
  %v3871 = vmax.f32 %v3811, 0.0
  %v3872 = vmax.f32 %v3814, 0.0
  %v3873 = vmax.f32 %v3819, 0.0
  %v3874 = vmax.f32 %v3822, 0.0
  %v3875 = vmax.f32 %v3827, 0.0
  %v3876 = vmax.f32 %v3830, 0.0
  %v3877 = vmax.f32 %v3835, 0.0
  %v3878 = vmax.f32 %v3838, 0.0
  %v3879 = vmax.f32 %v3843, 0.0
  %v3880 = vmax.f32 %v3846, 0.0
  %v3881 = vpack.c.bf16 %v3850, %v3849
  %v3882 = vpack.c.bf16 %v3852, %v3851
  %v3883 = vpack.c.bf16 %v3854, %v3853
  %v3884 = vpack.c.bf16 %v3856, %v3855
  %v3885 = vpack.c.bf16 %v3858, %v3857
  %v3886 = vpack.c.bf16 %v3860, %v3859
  %v3887 = vpack.c.bf16 %v3862, %v3861
  %v3888 = vpack.c.bf16 %v3864, %v3863
  %v3889 = vpack.c.bf16 %v3866, %v3865
  %v3890 = vpack.c.bf16 %v3868, %v3867
  %v3891 = vpack.c.bf16 %v3870, %v3869
  %v3892 = vpack.c.bf16 %v3872, %v3871
  %v3893 = vpack.c.bf16 %v3874, %v3873
  %v3894 = vpack.c.bf16 %v3876, %v3875
  %v3895 = vpack.c.bf16 %v3878, %v3877
  %v3896 = vpack.c.bf16 %v3880, %v3879
  %v3898 = vsel %vm184, %v3881, 0
  %v3901 = vsel %vm184, %v3882, 0
  %v3904 = vsel %vm184, %v3883, 0
  %v3907 = vsel %vm184, %v3884, 0
  %v3910 = vsel %vm184, %v3885, 0
  %v3913 = vsel %vm184, %v3886, 0
  %v3916 = vsel %vm184, %v3887, 0
  %v3919 = vsel %vm184, %v3888, 0
  %v3922 = vsel %vm184, %v3889, 0
  %v3925 = vsel %vm184, %v3890, 0
  %v3928 = vsel %vm184, %v3891, 0
  %v3931 = vsel %vm184, %v3892, 0
  %v3934 = vsel %vm184, %v3893, 0
  %v3937 = vsel %vm184, %v3894, 0
  %v3940 = vsel %vm184, %v3895, 0
  %v3943 = vsel %vm184, %v3896, 0
  %3945 = vmatprep.subr.bf16.mxu0 0
  %3946 = vmatpush1.bf16.msra.mxu0 0
  %3947 = vmatprep.subr.bf16.mxu0 0
  %3948 = vmatpush1.bf16.msra.mxu0 0
  %3949 = vmatprep.subr.bf16.mxu0 0
  %3950 = vmatpush1.bf16.msra.mxu0 0
  %3951 = vmatprep.subr.bf16.mxu0 0
  %3952 = vmatpush1.bf16.msra.mxu0 0
  %3953 = vmatprep.subr.bf16.mxu0 0
  %3954 = vmatpush1.bf16.msra.mxu0 0
  %3955 = vmatprep.subr.bf16.mxu0 0
  %3956 = vmatpush1.bf16.msra.mxu0 0
  %3957 = vmatprep.subr.bf16.mxu0 0
  %3958 = vmatpush1.bf16.msra.mxu0 %v720
  %3959 = vmatprep.subr.bf16.mxu0 0
  %3960 = vmatpush1.bf16.msra.mxu0 %v719
  %3961 = vmatprep.subr.bf16.mxu0 0
  %3962 = vmatpush2.bf16.msra.mxu0 0
  %3963 = vmatprep.subr.bf16.mxu0 0
  %3964 = vmatpush2.bf16.msra.mxu0 0
  %3965 = vmatprep.subr.bf16.mxu0 0
  %3966 = vmatpush2.bf16.msra.mxu0 0
  %3967 = vmatprep.subr.bf16.mxu0 0
  %3968 = vmatpush2.bf16.msra.mxu0 0
  %3969 = vmatprep.subr.bf16.mxu0 0
  %3970 = vmatpush2.bf16.msra.mxu0 0
  %3971 = vmatprep.subr.bf16.mxu0 0
  %3972 = vmatpush2.bf16.msra.mxu0 0
  %3973 = vmatprep.subr.bf16.mxu0 0
  %3974 = vmatpush2.bf16.msra.mxu0 0
  %3975 = vmatprep.subr.bf16.mxu0 0
  %3976 = vmatpush2.bf16.msra.mxu0 0
  %3977 = vmatprep.mubr.bf16.mxu0 0
  %3978 = vmatmul.mubr.bf16.gmra.mxu0 %v3898
  %v3979 = vpop.f32.mrf.mxu0
  %v3980 = vadd.f32 %v51, %v3979
  %v3981 = vpop.f32.mrf.mxu0
  %v3982 = vpop.f32.mrf.mxu0
  %v3983 = vadd.f32 %v51, %v3982
  %v3984 = vpop.f32.mrf.mxu0
  %3985 = vmatprep.mubr.bf16.mxu0 0
  %3986 = vmatmul.mubr.bf16.gmra.mxu0 %v3901
  %v3987 = vpop.f32.mrf.mxu0
  %v3988 = vadd.f32 %v51, %v3987
  %v3989 = vpop.f32.mrf.mxu0
  %v3990 = vpop.f32.mrf.mxu0
  %v3991 = vadd.f32 %v51, %v3990
  %v3992 = vpop.f32.mrf.mxu0
  %3993 = vmatprep.mubr.bf16.mxu0 0
  %3994 = vmatmul.mubr.bf16.gmra.mxu0 %v3904
  %v3995 = vpop.f32.mrf.mxu0
  %v3996 = vadd.f32 %v51, %v3995
  %v3997 = vpop.f32.mrf.mxu0
  %v3998 = vpop.f32.mrf.mxu0
  %v3999 = vadd.f32 %v51, %v3998
  %v4000 = vpop.f32.mrf.mxu0
  %4001 = vmatprep.mubr.bf16.mxu0 0
  %4002 = vmatmul.mubr.bf16.gmra.mxu0 %v3907
  %v4003 = vpop.f32.mrf.mxu0
  %v4004 = vadd.f32 %v51, %v4003
  %v4005 = vpop.f32.mrf.mxu0
  %v4006 = vpop.f32.mrf.mxu0
  %v4007 = vadd.f32 %v51, %v4006
  %v4008 = vpop.f32.mrf.mxu0
  %4009 = vmatprep.mubr.bf16.mxu0 0
  %4010 = vmatmul.mubr.bf16.gmra.mxu0 %v3910
  %v4011 = vpop.f32.mrf.mxu0
  %v4012 = vadd.f32 %v51, %v4011
  %v4013 = vpop.f32.mrf.mxu0
  %v4014 = vpop.f32.mrf.mxu0
  %v4015 = vadd.f32 %v51, %v4014
  %v4016 = vpop.f32.mrf.mxu0
  %4017 = vmatprep.mubr.bf16.mxu0 0
  %4018 = vmatmul.mubr.bf16.gmra.mxu0 %v3913
  %v4019 = vpop.f32.mrf.mxu0
  %v4020 = vadd.f32 %v51, %v4019
  %v4021 = vpop.f32.mrf.mxu0
  %v4022 = vpop.f32.mrf.mxu0
  %v4023 = vadd.f32 %v51, %v4022
  %v4024 = vpop.f32.mrf.mxu0
  %4025 = vmatprep.mubr.bf16.mxu0 0
  %4026 = vmatmul.mubr.bf16.gmra.mxu0 %v3916
  %v4027 = vpop.f32.mrf.mxu0
  %v4028 = vadd.f32 %v51, %v4027
  %v4029 = vpop.f32.mrf.mxu0
  %v4030 = vpop.f32.mrf.mxu0
  %v4031 = vadd.f32 %v51, %v4030
  %v4032 = vpop.f32.mrf.mxu0
  %4033 = vmatprep.mubr.bf16.mxu0 0
  %4034 = vmatmul.mubr.bf16.gmra.mxu0 %v3919
  %v4035 = vpop.f32.mrf.mxu0
  %v4036 = vadd.f32 %v51, %v4035
  %v4037 = vpop.f32.mrf.mxu0
  %v4038 = vpop.f32.mrf.mxu0
  %v4039 = vadd.f32 %v51, %v4038
  %v4040 = vpop.f32.mrf.mxu0
  %4041 = vmatprep.mubr.bf16.mxu0 0
  %4042 = vmatmul.mubr.bf16.gmra.mxu0 %v3922
  %v4043 = vpop.f32.mrf.mxu0
  %v4044 = vadd.f32 %v51, %v4043
  %v4045 = vpop.f32.mrf.mxu0
  %v4046 = vpop.f32.mrf.mxu0
  %v4047 = vadd.f32 %v51, %v4046
  %v4048 = vpop.f32.mrf.mxu0
  %4049 = vmatprep.mubr.bf16.mxu0 0
  %4050 = vmatmul.mubr.bf16.gmra.mxu0 %v3925
  %v4051 = vpop.f32.mrf.mxu0
  %v4052 = vadd.f32 %v51, %v4051
  %v4053 = vpop.f32.mrf.mxu0
  %v4054 = vpop.f32.mrf.mxu0
  %v4055 = vadd.f32 %v51, %v4054
  %v4056 = vpop.f32.mrf.mxu0
  %4057 = vmatprep.mubr.bf16.mxu0 0
  %4058 = vmatmul.mubr.bf16.gmra.mxu0 %v3928
  %v4059 = vpop.f32.mrf.mxu0
  %v4060 = vadd.f32 %v51, %v4059
  %v4061 = vpop.f32.mrf.mxu0
  %v4062 = vpop.f32.mrf.mxu0
  %v4063 = vadd.f32 %v51, %v4062
  %v4064 = vpop.f32.mrf.mxu0
  %4065 = vmatprep.mubr.bf16.mxu0 0
  %4066 = vmatmul.mubr.bf16.gmra.mxu0 %v3931
  %v4067 = vpop.f32.mrf.mxu0
  %v4068 = vadd.f32 %v51, %v4067
  %v4069 = vpop.f32.mrf.mxu0
  %v4070 = vpop.f32.mrf.mxu0
  %v4071 = vadd.f32 %v51, %v4070
  %v4072 = vpop.f32.mrf.mxu0
  %4073 = vmatprep.mubr.bf16.mxu0 0
  %4074 = vmatmul.mubr.bf16.gmra.mxu0 %v3934
  %v4075 = vpop.f32.mrf.mxu0
  %v4076 = vadd.f32 %v51, %v4075
  %v4077 = vpop.f32.mrf.mxu0
  %v4078 = vpop.f32.mrf.mxu0
  %v4079 = vadd.f32 %v51, %v4078
  %v4080 = vpop.f32.mrf.mxu0
  %4081 = vmatprep.mubr.bf16.mxu0 0
  %4082 = vmatmul.mubr.bf16.gmra.mxu0 %v3937
  %v4083 = vpop.f32.mrf.mxu0
  %v4084 = vadd.f32 %v51, %v4083
  %v4085 = vpop.f32.mrf.mxu0
  %v4086 = vpop.f32.mrf.mxu0
  %v4087 = vadd.f32 %v51, %v4086
  %v4088 = vpop.f32.mrf.mxu0
  %4089 = vmatprep.mubr.bf16.mxu0 0
  %4090 = vmatmul.mubr.bf16.gmra.mxu0 %v3940
  %v4091 = vpop.f32.mrf.mxu0
  %v4092 = vadd.f32 %v51, %v4091
  %v4093 = vpop.f32.mrf.mxu0
  %v4094 = vpop.f32.mrf.mxu0
  %v4095 = vadd.f32 %v51, %v4094
  %v4096 = vpop.f32.mrf.mxu0
  %4097 = vmatprep.mubr.bf16.mxu0 0
  %4098 = vmatmul.mubr.bf16.gmra.mxu0 %v3943
  %v4099 = vpop.f32.mrf.mxu0
  %v4100 = vadd.f32 %v51, %v4099
  %v4101 = vpop.f32.mrf.mxu0
  %v4102 = vpop.f32.mrf.mxu0
  %v4103 = vadd.f32 %v51, %v4102
  %v4104 = vpop.f32.mrf.mxu0
  %4105 = vdwg.mxu0
  %v4106 = vmax.f32 %v3980, 0.0
  %v4107 = vmax.f32 %v3983, 0.0
  %v4108 = vmax.f32 %v3988, 0.0
  %v4109 = vmax.f32 %v3991, 0.0
  %v4110 = vmax.f32 %v3996, 0.0
  %v4111 = vmax.f32 %v3999, 0.0
  %v4112 = vmax.f32 %v4004, 0.0
  %v4113 = vmax.f32 %v4007, 0.0
  %v4114 = vmax.f32 %v4012, 0.0
  %v4115 = vmax.f32 %v4015, 0.0
  %v4116 = vmax.f32 %v4020, 0.0
  %v4117 = vmax.f32 %v4023, 0.0
  %v4118 = vmax.f32 %v4028, 0.0
  %v4119 = vmax.f32 %v4031, 0.0
  %v4120 = vmax.f32 %v4036, 0.0
  %v4121 = vmax.f32 %v4039, 0.0
  %v4122 = vmax.f32 %v4044, 0.0
  %v4123 = vmax.f32 %v4047, 0.0
  %v4124 = vmax.f32 %v4052, 0.0
  %v4125 = vmax.f32 %v4055, 0.0
  %v4126 = vmax.f32 %v4060, 0.0
  %v4127 = vmax.f32 %v4063, 0.0
  %v4128 = vmax.f32 %v4068, 0.0
  %v4129 = vmax.f32 %v4071, 0.0
  %v4130 = vmax.f32 %v4076, 0.0
  %v4131 = vmax.f32 %v4079, 0.0
  %v4132 = vmax.f32 %v4084, 0.0
  %v4133 = vmax.f32 %v4087, 0.0
  %v4134 = vmax.f32 %v4092, 0.0
  %v4135 = vmax.f32 %v4095, 0.0
  %v4136 = vmax.f32 %v4100, 0.0
  %v4137 = vmax.f32 %v4103, 0.0
  %v4138 = vpack.c.bf16 %v4107, %v4106
  %v4139 = vpack.c.bf16 %v4109, %v4108
  %v4140 = vpack.c.bf16 %v4111, %v4110
  %v4141 = vpack.c.bf16 %v4113, %v4112
  %v4142 = vpack.c.bf16 %v4115, %v4114
  %v4143 = vpack.c.bf16 %v4117, %v4116
  %v4144 = vpack.c.bf16 %v4119, %v4118
  %v4145 = vpack.c.bf16 %v4121, %v4120
  %v4146 = vpack.c.bf16 %v4123, %v4122
  %v4147 = vpack.c.bf16 %v4125, %v4124
  %v4148 = vpack.c.bf16 %v4127, %v4126
  %v4149 = vpack.c.bf16 %v4129, %v4128
  %v4150 = vpack.c.bf16 %v4131, %v4130
  %v4151 = vpack.c.bf16 %v4133, %v4132
  %v4152 = vpack.c.bf16 %v4135, %v4134
  %v4153 = vpack.c.bf16 %v4137, %v4136
  %v4155 = vsel %vm184, %v4138, 0
  %v4158 = vsel %vm184, %v4139, 0
  %v4161 = vsel %vm184, %v4140, 0
  %v4164 = vsel %vm184, %v4141, 0
  %v4167 = vsel %vm184, %v4142, 0
  %v4170 = vsel %vm184, %v4143, 0
  %v4173 = vsel %vm184, %v4144, 0
  %v4176 = vsel %vm184, %v4145, 0
  %v4179 = vsel %vm184, %v4146, 0
  %v4182 = vsel %vm184, %v4147, 0
  %v4185 = vsel %vm184, %v4148, 0
  %v4188 = vsel %vm184, %v4149, 0
  %v4191 = vsel %vm184, %v4150, 0
  %v4194 = vsel %vm184, %v4151, 0
  %v4197 = vsel %vm184, %v4152, 0
  %v4200 = vsel %vm184, %v4153, 0
  %4202 = vmatprep.subr.bf16.mxu0 0
  %4203 = vmatpush1.bf16.msra.mxu0 0
  %4204 = vmatprep.subr.bf16.mxu0 0
  %4205 = vmatpush1.bf16.msra.mxu0 0
  %4206 = vmatprep.subr.bf16.mxu0 0
  %4207 = vmatpush1.bf16.msra.mxu0 0
  %4208 = vmatprep.subr.bf16.mxu0 0
  %4209 = vmatpush1.bf16.msra.mxu0 0
  %4210 = vmatprep.subr.bf16.mxu0 0
  %4211 = vmatpush1.bf16.msra.mxu0 0
  %4212 = vmatprep.subr.bf16.mxu0 0
  %4213 = vmatpush1.bf16.msra.mxu0 0
  %4214 = vmatprep.subr.bf16.mxu0 0
  %4215 = vmatpush1.bf16.msra.mxu0 %v989
  %4216 = vmatprep.subr.bf16.mxu0 0
  %4217 = vmatpush1.bf16.msra.mxu0 %v988
  %4218 = vmatprep.subr.bf16.mxu0 0
  %4219 = vmatpush2.bf16.msra.mxu0 0
  %4220 = vmatprep.subr.bf16.mxu0 0
  %4221 = vmatpush2.bf16.msra.mxu0 0
  %4222 = vmatprep.subr.bf16.mxu0 0
  %4223 = vmatpush2.bf16.msra.mxu0 0
  %4224 = vmatprep.subr.bf16.mxu0 0
  %4225 = vmatpush2.bf16.msra.mxu0 0
  %4226 = vmatprep.subr.bf16.mxu0 0
  %4227 = vmatpush2.bf16.msra.mxu0 0
  %4228 = vmatprep.subr.bf16.mxu0 0
  %4229 = vmatpush2.bf16.msra.mxu0 0
  %4230 = vmatprep.subr.bf16.mxu0 0
  %4231 = vmatpush2.bf16.msra.mxu0 0
  %4232 = vmatprep.subr.bf16.mxu0 0
  %4233 = vmatpush2.bf16.msra.mxu0 0
  %4234 = vmatprep.mubr.bf16.mxu0 0
  %4235 = vmatmul.mubr.bf16.gmra.mxu0 %v4155
  %v4236 = vpop.f32.mrf.mxu0
  %v4237 = vadd.f32 %v55, %v4236
  %v4238 = vpop.f32.mrf.mxu0
  %v4239 = vpop.f32.mrf.mxu0
  %v4240 = vadd.f32 %v55, %v4239
  %v4241 = vpop.f32.mrf.mxu0
  %4242 = vmatprep.mubr.bf16.mxu0 0
  %4243 = vmatmul.mubr.bf16.gmra.mxu0 %v4158
  %v4244 = vpop.f32.mrf.mxu0
  %v4245 = vadd.f32 %v55, %v4244
  %v4246 = vpop.f32.mrf.mxu0
  %v4247 = vpop.f32.mrf.mxu0
  %v4248 = vadd.f32 %v55, %v4247
  %v4249 = vpop.f32.mrf.mxu0
  %4250 = vmatprep.mubr.bf16.mxu0 0
  %4251 = vmatmul.mubr.bf16.gmra.mxu0 %v4161
  %v4252 = vpop.f32.mrf.mxu0
  %v4253 = vadd.f32 %v55, %v4252
  %v4254 = vpop.f32.mrf.mxu0
  %v4255 = vpop.f32.mrf.mxu0
  %v4256 = vadd.f32 %v55, %v4255
  %v4257 = vpop.f32.mrf.mxu0
  %4258 = vmatprep.mubr.bf16.mxu0 0
  %4259 = vmatmul.mubr.bf16.gmra.mxu0 %v4164
  %v4260 = vpop.f32.mrf.mxu0
  %v4261 = vadd.f32 %v55, %v4260
  %v4262 = vpop.f32.mrf.mxu0
  %v4263 = vpop.f32.mrf.mxu0
  %v4264 = vadd.f32 %v55, %v4263
  %v4265 = vpop.f32.mrf.mxu0
  %4266 = vmatprep.mubr.bf16.mxu0 0
  %4267 = vmatmul.mubr.bf16.gmra.mxu0 %v4167
  %v4268 = vpop.f32.mrf.mxu0
  %v4269 = vadd.f32 %v55, %v4268
  %v4270 = vpop.f32.mrf.mxu0
  %v4271 = vpop.f32.mrf.mxu0
  %v4272 = vadd.f32 %v55, %v4271
  %v4273 = vpop.f32.mrf.mxu0
  %4274 = vmatprep.mubr.bf16.mxu0 0
  %4275 = vmatmul.mubr.bf16.gmra.mxu0 %v4170
  %v4276 = vpop.f32.mrf.mxu0
  %v4277 = vadd.f32 %v55, %v4276
  %v4278 = vpop.f32.mrf.mxu0
  %v4279 = vpop.f32.mrf.mxu0
  %v4280 = vadd.f32 %v55, %v4279
  %v4281 = vpop.f32.mrf.mxu0
  %4282 = vmatprep.mubr.bf16.mxu0 0
  %4283 = vmatmul.mubr.bf16.gmra.mxu0 %v4173
  %v4284 = vpop.f32.mrf.mxu0
  %v4285 = vadd.f32 %v55, %v4284
  %v4286 = vpop.f32.mrf.mxu0
  %v4287 = vpop.f32.mrf.mxu0
  %v4288 = vadd.f32 %v55, %v4287
  %v4289 = vpop.f32.mrf.mxu0
  %4290 = vmatprep.mubr.bf16.mxu0 0
  %4291 = vmatmul.mubr.bf16.gmra.mxu0 %v4176
  %v4292 = vpop.f32.mrf.mxu0
  %v4293 = vadd.f32 %v55, %v4292
  %v4294 = vpop.f32.mrf.mxu0
  %v4295 = vpop.f32.mrf.mxu0
  %v4296 = vadd.f32 %v55, %v4295
  %v4297 = vpop.f32.mrf.mxu0
  %4298 = vmatprep.mubr.bf16.mxu0 0
  %4299 = vmatmul.mubr.bf16.gmra.mxu0 %v4179
  %v4300 = vpop.f32.mrf.mxu0
  %v4301 = vadd.f32 %v55, %v4300
  %v4302 = vpop.f32.mrf.mxu0
  %v4303 = vpop.f32.mrf.mxu0
  %v4304 = vadd.f32 %v55, %v4303
  %v4305 = vpop.f32.mrf.mxu0
  %4306 = vmatprep.mubr.bf16.mxu0 0
  %4307 = vmatmul.mubr.bf16.gmra.mxu0 %v4182
  %v4308 = vpop.f32.mrf.mxu0
  %v4309 = vadd.f32 %v55, %v4308
  %v4310 = vpop.f32.mrf.mxu0
  %v4311 = vpop.f32.mrf.mxu0
  %v4312 = vadd.f32 %v55, %v4311
  %v4313 = vpop.f32.mrf.mxu0
  %4314 = vmatprep.mubr.bf16.mxu0 0
  %4315 = vmatmul.mubr.bf16.gmra.mxu0 %v4185
  %v4316 = vpop.f32.mrf.mxu0
  %v4317 = vadd.f32 %v55, %v4316
  %v4318 = vpop.f32.mrf.mxu0
  %v4319 = vpop.f32.mrf.mxu0
  %v4320 = vadd.f32 %v55, %v4319
  %v4321 = vpop.f32.mrf.mxu0
  %4322 = vmatprep.mubr.bf16.mxu0 0
  %4323 = vmatmul.mubr.bf16.gmra.mxu0 %v4188
  %v4324 = vpop.f32.mrf.mxu0
  %v4325 = vadd.f32 %v55, %v4324
  %v4326 = vpop.f32.mrf.mxu0
  %v4327 = vpop.f32.mrf.mxu0
  %v4328 = vadd.f32 %v55, %v4327
  %v4329 = vpop.f32.mrf.mxu0
  %4330 = vmatprep.mubr.bf16.mxu0 0
  %4331 = vmatmul.mubr.bf16.gmra.mxu0 %v4191
  %v4332 = vpop.f32.mrf.mxu0
  %v4333 = vadd.f32 %v55, %v4332
  %v4334 = vpop.f32.mrf.mxu0
  %v4335 = vpop.f32.mrf.mxu0
  %v4336 = vadd.f32 %v55, %v4335
  %v4337 = vpop.f32.mrf.mxu0
  %4338 = vmatprep.mubr.bf16.mxu0 0
  %4339 = vmatmul.mubr.bf16.gmra.mxu0 %v4194
  %v4340 = vpop.f32.mrf.mxu0
  %v4341 = vadd.f32 %v55, %v4340
  %v4342 = vpop.f32.mrf.mxu0
  %v4343 = vpop.f32.mrf.mxu0
  %v4344 = vadd.f32 %v55, %v4343
  %v4345 = vpop.f32.mrf.mxu0
  %4346 = vmatprep.mubr.bf16.mxu0 0
  %4347 = vmatmul.mubr.bf16.gmra.mxu0 %v4197
  %v4348 = vpop.f32.mrf.mxu0
  %v4349 = vadd.f32 %v55, %v4348
  %v4350 = vpop.f32.mrf.mxu0
  %v4351 = vpop.f32.mrf.mxu0
  %v4352 = vadd.f32 %v55, %v4351
  %v4353 = vpop.f32.mrf.mxu0
  %4354 = vmatprep.mubr.bf16.mxu0 0
  %4355 = vmatmul.mubr.bf16.gmra.mxu0 %v4200
  %v4356 = vpop.f32.mrf.mxu0
  %v4357 = vadd.f32 %v55, %v4356
  %v4358 = vpop.f32.mrf.mxu0
  %v4359 = vpop.f32.mrf.mxu0
  %v4360 = vadd.f32 %v55, %v4359
  %v4361 = vpop.f32.mrf.mxu0
  %4362 = vdwg.mxu0
  %v4363 = vmax.f32 %v4237, 0.0
  %v4364 = vmax.f32 %v4240, 0.0
  %v4365 = vmax.f32 %v4245, 0.0
  %v4366 = vmax.f32 %v4248, 0.0
  %v4367 = vmax.f32 %v4253, 0.0
  %v4368 = vmax.f32 %v4256, 0.0
  %v4369 = vmax.f32 %v4261, 0.0
  %v4370 = vmax.f32 %v4264, 0.0
  %v4371 = vmax.f32 %v4269, 0.0
  %v4372 = vmax.f32 %v4272, 0.0
  %v4373 = vmax.f32 %v4277, 0.0
  %v4374 = vmax.f32 %v4280, 0.0
  %v4375 = vmax.f32 %v4285, 0.0
  %v4376 = vmax.f32 %v4288, 0.0
  %v4377 = vmax.f32 %v4293, 0.0
  %v4378 = vmax.f32 %v4296, 0.0
  %v4379 = vmax.f32 %v4301, 0.0
  %v4380 = vmax.f32 %v4304, 0.0
  %v4381 = vmax.f32 %v4309, 0.0
  %v4382 = vmax.f32 %v4312, 0.0
  %v4383 = vmax.f32 %v4317, 0.0
  %v4384 = vmax.f32 %v4320, 0.0
  %v4385 = vmax.f32 %v4325, 0.0
  %v4386 = vmax.f32 %v4328, 0.0
  %v4387 = vmax.f32 %v4333, 0.0
  %v4388 = vmax.f32 %v4336, 0.0
  %v4389 = vmax.f32 %v4341, 0.0
  %v4390 = vmax.f32 %v4344, 0.0
  %v4391 = vmax.f32 %v4349, 0.0
  %v4392 = vmax.f32 %v4352, 0.0
  %v4393 = vmax.f32 %v4357, 0.0
  %v4394 = vmax.f32 %v4360, 0.0
  %v4395 = vpack.c.bf16 %v4364, %v4363
  %v4396 = vpack.c.bf16 %v4366, %v4365
  %v4397 = vpack.c.bf16 %v4368, %v4367
  %v4398 = vpack.c.bf16 %v4370, %v4369
  %v4399 = vpack.c.bf16 %v4372, %v4371
  %v4400 = vpack.c.bf16 %v4374, %v4373
  %v4401 = vpack.c.bf16 %v4376, %v4375
  %v4402 = vpack.c.bf16 %v4378, %v4377
  %v4403 = vpack.c.bf16 %v4380, %v4379
  %v4404 = vpack.c.bf16 %v4382, %v4381
  %v4405 = vpack.c.bf16 %v4384, %v4383
  %v4406 = vpack.c.bf16 %v4386, %v4385
  %v4407 = vpack.c.bf16 %v4388, %v4387
  %v4408 = vpack.c.bf16 %v4390, %v4389
  %v4409 = vpack.c.bf16 %v4392, %v4391
  %v4410 = vpack.c.bf16 %v4394, %v4393
  %v4412 = vsel %vm184, %v4395, 0
  %v4415 = vsel %vm184, %v4396, 0
  %v4418 = vsel %vm184, %v4397, 0
  %v4421 = vsel %vm184, %v4398, 0
  %v4424 = vsel %vm184, %v4399, 0
  %v4427 = vsel %vm184, %v4400, 0
  %v4430 = vsel %vm184, %v4401, 0
  %v4433 = vsel %vm184, %v4402, 0
  %v4436 = vsel %vm184, %v4403, 0
  %v4439 = vsel %vm184, %v4404, 0
  %v4442 = vsel %vm184, %v4405, 0
  %v4445 = vsel %vm184, %v4406, 0
  %v4448 = vsel %vm184, %v4407, 0
  %v4451 = vsel %vm184, %v4408, 0
  %v4454 = vsel %vm184, %v4409, 0
  %v4457 = vsel %vm184, %v4410, 0
  %4459 = vmatprep.subr.bf16.mxu0 0
  %4460 = vmatpush1.bf16.msra.mxu0 0
  %4461 = vmatprep.subr.bf16.mxu0 0
  %4462 = vmatpush1.bf16.msra.mxu0 0
  %4463 = vmatprep.subr.bf16.mxu0 0
  %4464 = vmatpush1.bf16.msra.mxu0 0
  %4465 = vmatprep.subr.bf16.mxu0 0
  %4466 = vmatpush1.bf16.msra.mxu0 0
  %4467 = vmatprep.subr.bf16.mxu0 0
  %4468 = vmatpush1.bf16.msra.mxu0 0
  %4469 = vmatprep.subr.bf16.mxu0 0
  %4470 = vmatpush1.bf16.msra.mxu0 0
  %4471 = vmatprep.subr.bf16.mxu0 0
  %4472 = vmatpush1.bf16.msra.mxu0 %v1258
  %4473 = vmatprep.subr.bf16.mxu0 0
  %4474 = vmatpush1.bf16.msra.mxu0 %v1257
  %4475 = vmatprep.subr.bf16.mxu0 0
  %4476 = vmatpush2.bf16.msra.mxu0 0
  %4477 = vmatprep.subr.bf16.mxu0 0
  %4478 = vmatpush2.bf16.msra.mxu0 0
  %4479 = vmatprep.subr.bf16.mxu0 0
  %4480 = vmatpush2.bf16.msra.mxu0 0
  %4481 = vmatprep.subr.bf16.mxu0 0
  %4482 = vmatpush2.bf16.msra.mxu0 0
  %4483 = vmatprep.subr.bf16.mxu0 0
  %4484 = vmatpush2.bf16.msra.mxu0 0
  %4485 = vmatprep.subr.bf16.mxu0 0
  %4486 = vmatpush2.bf16.msra.mxu0 0
  %4487 = vmatprep.subr.bf16.mxu0 0
  %4488 = vmatpush2.bf16.msra.mxu0 0
  %4489 = vmatprep.subr.bf16.mxu0 0
  %4490 = vmatpush2.bf16.msra.mxu0 0
  %4491 = vmatprep.mubr.bf16.mxu0 0
  %4492 = vmatmul.mubr.bf16.gmra.mxu0 %v4412
  %v4493 = vpop.f32.mrf.mxu0
  %v4494 = vadd.f32 %v59, %v4493
  %v4495 = vpop.f32.mrf.mxu0
  %v4496 = vpop.f32.mrf.mxu0
  %v4497 = vadd.f32 %v59, %v4496
  %v4498 = vpop.f32.mrf.mxu0
  %4499 = vmatprep.mubr.bf16.mxu0 0
  %4500 = vmatmul.mubr.bf16.gmra.mxu0 %v4415
  %v4501 = vpop.f32.mrf.mxu0
  %v4502 = vadd.f32 %v59, %v4501
  %v4503 = vpop.f32.mrf.mxu0
  %v4504 = vpop.f32.mrf.mxu0
  %v4505 = vadd.f32 %v59, %v4504
  %v4506 = vpop.f32.mrf.mxu0
  %4507 = vmatprep.mubr.bf16.mxu0 0
  %4508 = vmatmul.mubr.bf16.gmra.mxu0 %v4418
  %v4509 = vpop.f32.mrf.mxu0
  %v4510 = vadd.f32 %v59, %v4509
  %v4511 = vpop.f32.mrf.mxu0
  %v4512 = vpop.f32.mrf.mxu0
  %v4513 = vadd.f32 %v59, %v4512
  %v4514 = vpop.f32.mrf.mxu0
  %4515 = vmatprep.mubr.bf16.mxu0 0
  %4516 = vmatmul.mubr.bf16.gmra.mxu0 %v4421
  %v4517 = vpop.f32.mrf.mxu0
  %v4518 = vadd.f32 %v59, %v4517
  %v4519 = vpop.f32.mrf.mxu0
  %v4520 = vpop.f32.mrf.mxu0
  %v4521 = vadd.f32 %v59, %v4520
  %v4522 = vpop.f32.mrf.mxu0
  %4523 = vmatprep.mubr.bf16.mxu0 0
  %4524 = vmatmul.mubr.bf16.gmra.mxu0 %v4424
  %v4525 = vpop.f32.mrf.mxu0
  %v4526 = vadd.f32 %v59, %v4525
  %v4527 = vpop.f32.mrf.mxu0
  %v4528 = vpop.f32.mrf.mxu0
  %v4529 = vadd.f32 %v59, %v4528
  %v4530 = vpop.f32.mrf.mxu0
  %4531 = vmatprep.mubr.bf16.mxu0 0
  %4532 = vmatmul.mubr.bf16.gmra.mxu0 %v4427
  %v4533 = vpop.f32.mrf.mxu0
  %v4534 = vadd.f32 %v59, %v4533
  %v4535 = vpop.f32.mrf.mxu0
  %v4536 = vpop.f32.mrf.mxu0
  %v4537 = vadd.f32 %v59, %v4536
  %v4538 = vpop.f32.mrf.mxu0
  %4539 = vmatprep.mubr.bf16.mxu0 0
  %4540 = vmatmul.mubr.bf16.gmra.mxu0 %v4430
  %v4541 = vpop.f32.mrf.mxu0
  %v4542 = vadd.f32 %v59, %v4541
  %v4543 = vpop.f32.mrf.mxu0
  %v4544 = vpop.f32.mrf.mxu0
  %v4545 = vadd.f32 %v59, %v4544
  %v4546 = vpop.f32.mrf.mxu0
  %4547 = vmatprep.mubr.bf16.mxu0 0
  %4548 = vmatmul.mubr.bf16.gmra.mxu0 %v4433
  %v4549 = vpop.f32.mrf.mxu0
  %v4550 = vadd.f32 %v59, %v4549
  %v4551 = vpop.f32.mrf.mxu0
  %v4552 = vpop.f32.mrf.mxu0
  %v4553 = vadd.f32 %v59, %v4552
  %v4554 = vpop.f32.mrf.mxu0
  %4555 = vmatprep.mubr.bf16.mxu0 0
  %4556 = vmatmul.mubr.bf16.gmra.mxu0 %v4436
  %v4557 = vpop.f32.mrf.mxu0
  %v4558 = vadd.f32 %v59, %v4557
  %v4559 = vpop.f32.mrf.mxu0
  %v4560 = vpop.f32.mrf.mxu0
  %v4561 = vadd.f32 %v59, %v4560
  %v4562 = vpop.f32.mrf.mxu0
  %4563 = vmatprep.mubr.bf16.mxu0 0
  %4564 = vmatmul.mubr.bf16.gmra.mxu0 %v4439
  %v4565 = vpop.f32.mrf.mxu0
  %v4566 = vadd.f32 %v59, %v4565
  %v4567 = vpop.f32.mrf.mxu0
  %v4568 = vpop.f32.mrf.mxu0
  %v4569 = vadd.f32 %v59, %v4568
  %v4570 = vpop.f32.mrf.mxu0
  %4571 = vmatprep.mubr.bf16.mxu0 0
  %4572 = vmatmul.mubr.bf16.gmra.mxu0 %v4442
  %v4573 = vpop.f32.mrf.mxu0
  %v4574 = vadd.f32 %v59, %v4573
  %v4575 = vpop.f32.mrf.mxu0
  %v4576 = vpop.f32.mrf.mxu0
  %v4577 = vadd.f32 %v59, %v4576
  %v4578 = vpop.f32.mrf.mxu0
  %4579 = vmatprep.mubr.bf16.mxu0 0
  %4580 = vmatmul.mubr.bf16.gmra.mxu0 %v4445
  %v4581 = vpop.f32.mrf.mxu0
  %v4582 = vadd.f32 %v59, %v4581
  %v4583 = vpop.f32.mrf.mxu0
  %v4584 = vpop.f32.mrf.mxu0
  %v4585 = vadd.f32 %v59, %v4584
  %v4586 = vpop.f32.mrf.mxu0
  %4587 = vmatprep.mubr.bf16.mxu0 0
  %4588 = vmatmul.mubr.bf16.gmra.mxu0 %v4448
  %v4589 = vpop.f32.mrf.mxu0
  %v4590 = vadd.f32 %v59, %v4589
  %v4591 = vpop.f32.mrf.mxu0
  %v4592 = vpop.f32.mrf.mxu0
  %v4593 = vadd.f32 %v59, %v4592
  %v4594 = vpop.f32.mrf.mxu0
  %4595 = vmatprep.mubr.bf16.mxu0 0
  %4596 = vmatmul.mubr.bf16.gmra.mxu0 %v4451
  %v4597 = vpop.f32.mrf.mxu0
  %v4598 = vadd.f32 %v59, %v4597
  %v4599 = vpop.f32.mrf.mxu0
  %v4600 = vpop.f32.mrf.mxu0
  %v4601 = vadd.f32 %v59, %v4600
  %v4602 = vpop.f32.mrf.mxu0
  %4603 = vmatprep.mubr.bf16.mxu0 0
  %4604 = vmatmul.mubr.bf16.gmra.mxu0 %v4454
  %v4605 = vpop.f32.mrf.mxu0
  %v4606 = vadd.f32 %v59, %v4605
  %v4607 = vpop.f32.mrf.mxu0
  %v4608 = vpop.f32.mrf.mxu0
  %v4609 = vadd.f32 %v59, %v4608
  %v4610 = vpop.f32.mrf.mxu0
  %4611 = vmatprep.mubr.bf16.mxu0 0
  %4612 = vmatmul.mubr.bf16.gmra.mxu0 %v4457
  %v4613 = vpop.f32.mrf.mxu0
  %v4614 = vadd.f32 %v59, %v4613
  %v4615 = vpop.f32.mrf.mxu0
  %v4616 = vpop.f32.mrf.mxu0
  %v4617 = vadd.f32 %v59, %v4616
  %v4618 = vpop.f32.mrf.mxu0
  %4619 = vdwg.mxu0
  %v4620 = vxor.u32 %v4494, 2147483648
  %v4621 = vxor.u32 %v4497, 2147483648
  %v4622 = vxor.u32 %v4502, 2147483648
  %v4623 = vxor.u32 %v4505, 2147483648
  %v4624 = vxor.u32 %v4510, 2147483648
  %v4625 = vxor.u32 %v4513, 2147483648
  %v4626 = vxor.u32 %v4518, 2147483648
  %v4627 = vxor.u32 %v4521, 2147483648
  %v4628 = vxor.u32 %v4526, 2147483648
  %v4629 = vxor.u32 %v4529, 2147483648
  %v4630 = vxor.u32 %v4534, 2147483648
  %v4631 = vxor.u32 %v4537, 2147483648
  %v4632 = vxor.u32 %v4542, 2147483648
  %v4633 = vxor.u32 %v4545, 2147483648
  %v4634 = vxor.u32 %v4550, 2147483648
  %v4635 = vxor.u32 %v4553, 2147483648
  %v4636 = vxor.u32 %v4558, 2147483648
  %v4637 = vxor.u32 %v4561, 2147483648
  %v4638 = vxor.u32 %v4566, 2147483648
  %v4639 = vxor.u32 %v4569, 2147483648
  %v4640 = vxor.u32 %v4574, 2147483648
  %v4641 = vxor.u32 %v4577, 2147483648
  %v4642 = vxor.u32 %v4582, 2147483648
  %v4643 = vxor.u32 %v4585, 2147483648
  %v4644 = vxor.u32 %v4590, 2147483648
  %v4645 = vxor.u32 %v4593, 2147483648
  %v4646 = vxor.u32 %v4598, 2147483648
  %v4647 = vxor.u32 %v4601, 2147483648
  %v4648 = vxor.u32 %v4606, 2147483648
  %v4649 = vxor.u32 %v4609, 2147483648
  %v4650 = vxor.u32 %v4614, 2147483648
  %v4651 = vxor.u32 %v4617, 2147483648
  %v4652 = vmul.f32 %v4620, 1.442695
  %v4653 = vpow.pop %v4652
  %v4654 = vmul.f32 %v4621, 1.442695
  %v4655 = vpow.pop %v4654
  %v4656 = vmul.f32 %v4622, 1.442695
  %v4657 = vpow.pop %v4656
  %v4658 = vmul.f32 %v4623, 1.442695
  %v4659 = vpow.pop %v4658
  %v4660 = vmul.f32 %v4624, 1.442695
  %v4661 = vpow.pop %v4660
  %v4662 = vmul.f32 %v4625, 1.442695
  %v4663 = vpow.pop %v4662
  %v4664 = vmul.f32 %v4626, 1.442695
  %v4665 = vpow.pop %v4664
  %v4666 = vmul.f32 %v4627, 1.442695
  %v4667 = vpow.pop %v4666
  %v4668 = vmul.f32 %v4628, 1.442695
  %v4669 = vpow.pop %v4668
  %v4670 = vmul.f32 %v4629, 1.442695
  %v4671 = vpow.pop %v4670
  %v4672 = vmul.f32 %v4630, 1.442695
  %v4673 = vpow.pop %v4672
  %v4674 = vmul.f32 %v4631, 1.442695
  %v4675 = vpow.pop %v4674
  %v4676 = vmul.f32 %v4632, 1.442695
  %v4677 = vpow.pop %v4676
  %v4678 = vmul.f32 %v4633, 1.442695
  %v4679 = vpow.pop %v4678
  %v4680 = vmul.f32 %v4634, 1.442695
  %v4681 = vpow.pop %v4680
  %v4682 = vmul.f32 %v4635, 1.442695
  %v4683 = vpow.pop %v4682
  %v4684 = vmul.f32 %v4636, 1.442695
  %v4685 = vpow.pop %v4684
  %v4686 = vmul.f32 %v4637, 1.442695
  %v4687 = vpow.pop %v4686
  %v4688 = vmul.f32 %v4638, 1.442695
  %v4689 = vpow.pop %v4688
  %v4690 = vmul.f32 %v4639, 1.442695
  %v4691 = vpow.pop %v4690
  %v4692 = vmul.f32 %v4640, 1.442695
  %v4693 = vpow.pop %v4692
  %v4694 = vmul.f32 %v4641, 1.442695
  %v4695 = vpow.pop %v4694
  %v4696 = vmul.f32 %v4642, 1.442695
  %v4697 = vpow.pop %v4696
  %v4698 = vmul.f32 %v4643, 1.442695
  %v4699 = vpow.pop %v4698
  %v4700 = vmul.f32 %v4644, 1.442695
  %v4701 = vpow.pop %v4700
  %v4702 = vmul.f32 %v4645, 1.442695
  %v4703 = vpow.pop %v4702
  %v4704 = vmul.f32 %v4646, 1.442695
  %v4705 = vpow.pop %v4704
  %v4706 = vmul.f32 %v4647, 1.442695
  %v4707 = vpow.pop %v4706
  %v4708 = vmul.f32 %v4648, 1.442695
  %v4709 = vpow.pop %v4708
  %v4710 = vmul.f32 %v4649, 1.442695
  %v4711 = vpow.pop %v4710
  %v4712 = vmul.f32 %v4650, 1.442695
  %v4713 = vpow.pop %v4712
  %v4714 = vmul.f32 %v4651, 1.442695
  %v4715 = vpow.pop %v4714
  %v4716 = vadd.f32 %v4653, 1.0
  %v4717 = vadd.f32 %v4655, 1.0
  %v4718 = vadd.f32 %v4657, 1.0
  %v4719 = vadd.f32 %v4659, 1.0
  %v4720 = vadd.f32 %v4661, 1.0
  %v4721 = vadd.f32 %v4663, 1.0
  %v4722 = vadd.f32 %v4665, 1.0
  %v4723 = vadd.f32 %v4667, 1.0
  %v4724 = vadd.f32 %v4669, 1.0
  %v4725 = vadd.f32 %v4671, 1.0
  %v4726 = vadd.f32 %v4673, 1.0
  %v4727 = vadd.f32 %v4675, 1.0
  %v4728 = vadd.f32 %v4677, 1.0
  %v4729 = vadd.f32 %v4679, 1.0
  %v4730 = vadd.f32 %v4681, 1.0
  %v4731 = vadd.f32 %v4683, 1.0
  %v4732 = vadd.f32 %v4685, 1.0
  %v4733 = vadd.f32 %v4687, 1.0
  %v4734 = vadd.f32 %v4689, 1.0
  %v4735 = vadd.f32 %v4691, 1.0
  %v4736 = vadd.f32 %v4693, 1.0
  %v4737 = vadd.f32 %v4695, 1.0
  %v4738 = vadd.f32 %v4697, 1.0
  %v4739 = vadd.f32 %v4699, 1.0
  %v4740 = vadd.f32 %v4701, 1.0
  %v4741 = vadd.f32 %v4703, 1.0
  %v4742 = vadd.f32 %v4705, 1.0
  %v4743 = vadd.f32 %v4707, 1.0
  %v4744 = vadd.f32 %v4709, 1.0
  %v4745 = vadd.f32 %v4711, 1.0
  %v4746 = vadd.f32 %v4713, 1.0
  %v4747 = vadd.f32 %v4715, 1.0
  %v4748 = vrcp.pop %v4716
  %v4749 = vmul.f32 1.0, %v4748
  %v4750 = vrcp.pop %v4717
  %v4751 = vmul.f32 1.0, %v4750
  %v4752 = vrcp.pop %v4718
  %v4753 = vmul.f32 1.0, %v4752
  %v4754 = vrcp.pop %v4719
  %v4755 = vmul.f32 1.0, %v4754
  %v4756 = vrcp.pop %v4720
  %v4757 = vmul.f32 1.0, %v4756
  %v4758 = vrcp.pop %v4721
  %v4759 = vmul.f32 1.0, %v4758
  %v4760 = vrcp.pop %v4722
  %v4761 = vmul.f32 1.0, %v4760
  %v4762 = vrcp.pop %v4723
  %v4763 = vmul.f32 1.0, %v4762
  %v4764 = vrcp.pop %v4724
  %v4765 = vmul.f32 1.0, %v4764
  %v4766 = vrcp.pop %v4725
  %v4767 = vmul.f32 1.0, %v4766
  %v4768 = vrcp.pop %v4726
  %v4769 = vmul.f32 1.0, %v4768
  %v4770 = vrcp.pop %v4727
  %v4771 = vmul.f32 1.0, %v4770
  %v4772 = vrcp.pop %v4728
  %v4773 = vmul.f32 1.0, %v4772
  %v4774 = vrcp.pop %v4729
  %v4775 = vmul.f32 1.0, %v4774
  %v4776 = vrcp.pop %v4730
  %v4777 = vmul.f32 1.0, %v4776
  %v4778 = vrcp.pop %v4731
  %v4779 = vmul.f32 1.0, %v4778
  %v4780 = vrcp.pop %v4732
  %v4781 = vmul.f32 1.0, %v4780
  %v4782 = vrcp.pop %v4733
  %v4783 = vmul.f32 1.0, %v4782
  %v4784 = vrcp.pop %v4734
  %v4785 = vmul.f32 1.0, %v4784
  %v4786 = vrcp.pop %v4735
  %v4787 = vmul.f32 1.0, %v4786
  %v4788 = vrcp.pop %v4736
  %v4789 = vmul.f32 1.0, %v4788
  %v4790 = vrcp.pop %v4737
  %v4791 = vmul.f32 1.0, %v4790
  %v4792 = vrcp.pop %v4738
  %v4793 = vmul.f32 1.0, %v4792
  %v4794 = vrcp.pop %v4739
  %v4795 = vmul.f32 1.0, %v4794
  %v4796 = vrcp.pop %v4740
  %v4797 = vmul.f32 1.0, %v4796
  %v4798 = vrcp.pop %v4741
  %v4799 = vmul.f32 1.0, %v4798
  %v4800 = vrcp.pop %v4742
  %v4801 = vmul.f32 1.0, %v4800
  %v4802 = vrcp.pop %v4743
  %v4803 = vmul.f32 1.0, %v4802
  %v4804 = vrcp.pop %v4744
  %v4805 = vmul.f32 1.0, %v4804
  %v4806 = vrcp.pop %v4745
  %v4807 = vmul.f32 1.0, %v4806
  %v4808 = vrcp.pop %v4746
  %v4809 = vmul.f32 1.0, %v4808
  %v4810 = vrcp.pop %v4747
  %v4811 = vmul.f32 1.0, %v4810
  %s4812 = scalar_lea.vmem %s3, 512
  %4813 = vst.msk [vmem:[%s4812] sm:$0xff] %vm1662, %v4749
  %4814 = vst.msk [vmem:[%s4812 + $0x8] sm:$0xff] %vm1662, %v4751
  %4815 = vst.msk [vmem:[%s4812 + $0x10] sm:$0xff] %vm1662, %v4753
  %4816 = vst.msk [vmem:[%s4812 + $0x18] sm:$0xff] %vm1662, %v4755
  %4817 = vst.msk [vmem:[%s4812 + $0x20] sm:$0xff] %vm1662, %v4757
  %4818 = vst.msk [vmem:[%s4812 + $0x28] sm:$0xff] %vm1662, %v4759
  %4819 = vst.msk [vmem:[%s4812 + $0x30] sm:$0xff] %vm1662, %v4761
  %4820 = vst.msk [vmem:[%s4812 + $0x38] sm:$0xff] %vm1662, %v4763
  %4821 = vst.msk [vmem:[%s4812 + $0x40] sm:$0xff] %vm1662, %v4765
  %4822 = vst.msk [vmem:[%s4812 + $0x48] sm:$0xff] %vm1662, %v4767
  %4823 = vst.msk [vmem:[%s4812 + $0x50] sm:$0xff] %vm1662, %v4769
  %4824 = vst.msk [vmem:[%s4812 + $0x58] sm:$0xff] %vm1662, %v4771
  %4825 = vst.msk [vmem:[%s4812 + $0x60] sm:$0xff] %vm1662, %v4773
  %4826 = vst.msk [vmem:[%s4812 + $0x68] sm:$0xff] %vm1662, %v4775
  %4827 = vst.msk [vmem:[%s4812 + $0x70] sm:$0xff] %vm1662, %v4777
  %4828 = vst.msk [vmem:[%s4812 + $0x78] sm:$0xff] %vm1662, %v4779
  %4829 = vst.msk [vmem:[%s4812 + $0x80] sm:$0xff] %vm1662, %v4781
  %4830 = vst.msk [vmem:[%s4812 + $0x88] sm:$0xff] %vm1662, %v4783
  %4831 = vst.msk [vmem:[%s4812 + $0x90] sm:$0xff] %vm1662, %v4785
  %4832 = vst.msk [vmem:[%s4812 + $0x98] sm:$0xff] %vm1662, %v4787
  %4833 = vst.msk [vmem:[%s4812 + $0xa0] sm:$0xff] %vm1662, %v4789
  %4834 = vst.msk [vmem:[%s4812 + $0xa8] sm:$0xff] %vm1662, %v4791
  %4835 = vst.msk [vmem:[%s4812 + $0xb0] sm:$0xff] %vm1662, %v4793
  %4836 = vst.msk [vmem:[%s4812 + $0xb8] sm:$0xff] %vm1662, %v4795
  %4837 = vst.msk [vmem:[%s4812 + $0xc0] sm:$0xff] %vm1662, %v4797
  %4838 = vst.msk [vmem:[%s4812 + $0xc8] sm:$0xff] %vm1662, %v4799
  %4839 = vst.msk [vmem:[%s4812 + $0xd0] sm:$0xff] %vm1662, %v4801
  %4840 = vst.msk [vmem:[%s4812 + $0xd8] sm:$0xff] %vm1662, %v4803
  %4841 = vst.msk [vmem:[%s4812 + $0xe0] sm:$0xff] %vm1662, %v4805
  %4842 = vst.msk [vmem:[%s4812 + $0xe8] sm:$0xff] %vm1662, %v4807
  %4843 = vst.msk [vmem:[%s4812 + $0xf0] sm:$0xff] %vm1662, %v4809
  %4844 = vst.msk [vmem:[%s4812 + $0xf8] sm:$0xff] %vm1662, %v4811
  %s4845 = scalar_lea.vmem %s0, 384
  %v4846 = vld [vmem:[%s4845] sm:$0xf]
  %v4847 = vld [vmem:[%s4845 + $0x4] sm:$0xf]
  %v4848 = vld [vmem:[%s4845 + $0x8] sm:$0xf]
  %v4849 = vld [vmem:[%s4845 + $0xc] sm:$0xf]
  %v4850 = vld [vmem:[%s4845 + $0x10] sm:$0xf]
  %v4851 = vld [vmem:[%s4845 + $0x14] sm:$0xf]
  %v4852 = vld [vmem:[%s4845 + $0x18] sm:$0xf]
  %v4853 = vld [vmem:[%s4845 + $0x1c] sm:$0xf]
  %v4854 = vld [vmem:[%s4845 + $0x20] sm:$0xf]
  %v4855 = vld [vmem:[%s4845 + $0x24] sm:$0xf]
  %v4856 = vld [vmem:[%s4845 + $0x28] sm:$0xf]
  %v4857 = vld [vmem:[%s4845 + $0x2c] sm:$0xf]
  %v4858 = vld [vmem:[%s4845 + $0x30] sm:$0xf]
  %v4859 = vld [vmem:[%s4845 + $0x34] sm:$0xf]
  %v4860 = vld [vmem:[%s4845 + $0x38] sm:$0xf]
  %v4861 = vld [vmem:[%s4845 + $0x3c] sm:$0xf]
  %v4862 = vld [vmem:[%s4845 + $0x40] sm:$0xf]
  %v4863 = vld [vmem:[%s4845 + $0x44] sm:$0xf]
  %v4864 = vld [vmem:[%s4845 + $0x48] sm:$0xf]
  %v4865 = vld [vmem:[%s4845 + $0x4c] sm:$0xf]
  %v4866 = vld [vmem:[%s4845 + $0x50] sm:$0xf]
  %v4867 = vld [vmem:[%s4845 + $0x54] sm:$0xf]
  %v4868 = vld [vmem:[%s4845 + $0x58] sm:$0xf]
  %v4869 = vld [vmem:[%s4845 + $0x5c] sm:$0xf]
  %v4870 = vld [vmem:[%s4845 + $0x60] sm:$0xf]
  %v4871 = vld [vmem:[%s4845 + $0x64] sm:$0xf]
  %v4872 = vld [vmem:[%s4845 + $0x68] sm:$0xf]
  %v4873 = vld [vmem:[%s4845 + $0x6c] sm:$0xf]
  %v4874 = vld [vmem:[%s4845 + $0x70] sm:$0xf]
  %v4875 = vld [vmem:[%s4845 + $0x74] sm:$0xf]
  %v4876 = vld [vmem:[%s4845 + $0x78] sm:$0xf]
  %v4877 = vld [vmem:[%s4845 + $0x7c] sm:$0xf]
  %v4910 = vunpack.c.l.b16 %v4846
  %v4911 = vunpack.c.l.b16 %v4847
  %v4912 = vunpack.c.l.b16 %v4848
  %v4913 = vunpack.c.l.b16 %v4849
  %v4914 = vunpack.c.l.b16 %v4850
  %v4915 = vunpack.c.l.b16 %v4851
  %v4916 = vunpack.c.l.b16 %v4852
  %v4917 = vunpack.c.l.b16 %v4853
  %v4918 = vunpack.c.l.b16 %v4854
  %v4919 = vunpack.c.l.b16 %v4855
  %v4920 = vunpack.c.l.b16 %v4856
  %v4921 = vunpack.c.l.b16 %v4857
  %v4922 = vunpack.c.l.b16 %v4858
  %v4923 = vunpack.c.l.b16 %v4859
  %v4924 = vunpack.c.l.b16 %v4860
  %v4925 = vunpack.c.l.b16 %v4861
  %v4926 = vunpack.c.l.b16 %v4862
  %v4927 = vunpack.c.l.b16 %v4863
  %v4928 = vunpack.c.l.b16 %v4864
  %v4929 = vunpack.c.l.b16 %v4865
  %v4930 = vunpack.c.l.b16 %v4866
  %v4931 = vunpack.c.l.b16 %v4867
  %v4932 = vunpack.c.l.b16 %v4868
  %v4933 = vunpack.c.l.b16 %v4869
  %v4934 = vunpack.c.l.b16 %v4870
  %v4935 = vunpack.c.l.b16 %v4871
  %v4936 = vunpack.c.l.b16 %v4872
  %v4937 = vunpack.c.l.b16 %v4873
  %v4938 = vunpack.c.l.b16 %v4874
  %v4939 = vunpack.c.l.b16 %v4875
  %v4940 = vunpack.c.l.b16 %v4876
  %v4941 = vunpack.c.l.b16 %v4877
  %v4942 = vpack.c.b16 %v4911, %v4910
  %v4943 = vpack.c.b16 %v4913, %v4912
  %v4944 = vpack.c.b16 %v4915, %v4914
  %v4945 = vpack.c.b16 %v4917, %v4916
  %v4946 = vpack.c.b16 %v4919, %v4918
  %v4947 = vpack.c.b16 %v4921, %v4920
  %v4948 = vpack.c.b16 %v4923, %v4922
  %v4949 = vpack.c.b16 %v4925, %v4924
  %v4950 = vpack.c.b16 %v4927, %v4926
  %v4951 = vpack.c.b16 %v4929, %v4928
  %v4952 = vpack.c.b16 %v4931, %v4930
  %v4953 = vpack.c.b16 %v4933, %v4932
  %v4954 = vpack.c.b16 %v4935, %v4934
  %v4955 = vpack.c.b16 %v4937, %v4936
  %v4956 = vpack.c.b16 %v4939, %v4938
  %v4957 = vpack.c.b16 %v4941, %v4940
  %v4959 = vsel %vm184, %v4942, 0
  %v4962 = vsel %vm184, %v4943, 0
  %v4965 = vsel %vm184, %v4944, 0
  %v4968 = vsel %vm184, %v4945, 0
  %v4971 = vsel %vm184, %v4946, 0
  %v4974 = vsel %vm184, %v4947, 0
  %v4977 = vsel %vm184, %v4948, 0
  %v4980 = vsel %vm184, %v4949, 0
  %v4983 = vsel %vm184, %v4950, 0
  %v4986 = vsel %vm184, %v4951, 0
  %v4989 = vsel %vm184, %v4952, 0
  %v4992 = vsel %vm184, %v4953, 0
  %v4995 = vsel %vm184, %v4954, 0
  %v4998 = vsel %vm184, %v4955, 0
  %v5001 = vsel %vm184, %v4956, 0
  %v5004 = vsel %vm184, %v4957, 0
  %5006 = vmatprep.subr.bf16.mxu0 0
  %5007 = vmatpush1.bf16.msra.mxu0 0
  %5008 = vmatprep.subr.bf16.mxu0 0
  %5009 = vmatpush1.bf16.msra.mxu0 0
  %5010 = vmatprep.subr.bf16.mxu0 0
  %5011 = vmatpush1.bf16.msra.mxu0 0
  %5012 = vmatprep.subr.bf16.mxu0 0
  %5013 = vmatpush1.bf16.msra.mxu0 0
  %5014 = vmatprep.subr.bf16.mxu0 0
  %5015 = vmatpush1.bf16.msra.mxu0 0
  %5016 = vmatprep.subr.bf16.mxu0 0
  %5017 = vmatpush1.bf16.msra.mxu0 0
  %5018 = vmatprep.subr.bf16.mxu0 0
  %5019 = vmatpush1.bf16.msra.mxu0 %v181
  %5020 = vmatprep.subr.bf16.mxu0 0
  %5021 = vmatpush1.bf16.msra.mxu0 %v180
  %5022 = vmatprep.subr.bf16.mxu0 0
  %5023 = vmatpush2.bf16.msra.mxu0 0
  %5024 = vmatprep.subr.bf16.mxu0 0
  %5025 = vmatpush2.bf16.msra.mxu0 0
  %5026 = vmatprep.subr.bf16.mxu0 0
  %5027 = vmatpush2.bf16.msra.mxu0 0
  %5028 = vmatprep.subr.bf16.mxu0 0
  %5029 = vmatpush2.bf16.msra.mxu0 0
  %5030 = vmatprep.subr.bf16.mxu0 0
  %5031 = vmatpush2.bf16.msra.mxu0 0
  %5032 = vmatprep.subr.bf16.mxu0 0
  %5033 = vmatpush2.bf16.msra.mxu0 0
  %5034 = vmatprep.subr.bf16.mxu0 0
  %5035 = vmatpush2.bf16.msra.mxu0 0
  %5036 = vmatprep.subr.bf16.mxu0 0
  %5037 = vmatpush2.bf16.msra.mxu0 0
  %5038 = vmatprep.mubr.bf16.mxu0 0
  %5039 = vmatmul.mubr.bf16.gmra.mxu0 %v4959
  %v5040 = vpop.f32.mrf.mxu0
  %v5041 = vadd.f32 %v43, %v5040
  %v5042 = vpop.f32.mrf.mxu0
  %v5043 = vpop.f32.mrf.mxu0
  %v5044 = vadd.f32 %v43, %v5043
  %v5045 = vpop.f32.mrf.mxu0
  %5046 = vmatprep.mubr.bf16.mxu0 0
  %5047 = vmatmul.mubr.bf16.gmra.mxu0 %v4962
  %v5048 = vpop.f32.mrf.mxu0
  %v5049 = vadd.f32 %v43, %v5048
  %v5050 = vpop.f32.mrf.mxu0
  %v5051 = vpop.f32.mrf.mxu0
  %v5052 = vadd.f32 %v43, %v5051
  %v5053 = vpop.f32.mrf.mxu0
  %5054 = vmatprep.mubr.bf16.mxu0 0
  %5055 = vmatmul.mubr.bf16.gmra.mxu0 %v4965
  %v5056 = vpop.f32.mrf.mxu0
  %v5057 = vadd.f32 %v43, %v5056
  %v5058 = vpop.f32.mrf.mxu0
  %v5059 = vpop.f32.mrf.mxu0
  %v5060 = vadd.f32 %v43, %v5059
  %v5061 = vpop.f32.mrf.mxu0
  %5062 = vmatprep.mubr.bf16.mxu0 0
  %5063 = vmatmul.mubr.bf16.gmra.mxu0 %v4968
  %v5064 = vpop.f32.mrf.mxu0
  %v5065 = vadd.f32 %v43, %v5064
  %v5066 = vpop.f32.mrf.mxu0
  %v5067 = vpop.f32.mrf.mxu0
  %v5068 = vadd.f32 %v43, %v5067
  %v5069 = vpop.f32.mrf.mxu0
  %5070 = vmatprep.mubr.bf16.mxu0 0
  %5071 = vmatmul.mubr.bf16.gmra.mxu0 %v4971
  %v5072 = vpop.f32.mrf.mxu0
  %v5073 = vadd.f32 %v43, %v5072
  %v5074 = vpop.f32.mrf.mxu0
  %v5075 = vpop.f32.mrf.mxu0
  %v5076 = vadd.f32 %v43, %v5075
  %v5077 = vpop.f32.mrf.mxu0
  %5078 = vmatprep.mubr.bf16.mxu0 0
  %5079 = vmatmul.mubr.bf16.gmra.mxu0 %v4974
  %v5080 = vpop.f32.mrf.mxu0
  %v5081 = vadd.f32 %v43, %v5080
  %v5082 = vpop.f32.mrf.mxu0
  %v5083 = vpop.f32.mrf.mxu0
  %v5084 = vadd.f32 %v43, %v5083
  %v5085 = vpop.f32.mrf.mxu0
  %5086 = vmatprep.mubr.bf16.mxu0 0
  %5087 = vmatmul.mubr.bf16.gmra.mxu0 %v4977
  %v5088 = vpop.f32.mrf.mxu0
  %v5089 = vadd.f32 %v43, %v5088
  %v5090 = vpop.f32.mrf.mxu0
  %v5091 = vpop.f32.mrf.mxu0
  %v5092 = vadd.f32 %v43, %v5091
  %v5093 = vpop.f32.mrf.mxu0
  %5094 = vmatprep.mubr.bf16.mxu0 0
  %5095 = vmatmul.mubr.bf16.gmra.mxu0 %v4980
  %v5096 = vpop.f32.mrf.mxu0
  %v5097 = vadd.f32 %v43, %v5096
  %v5098 = vpop.f32.mrf.mxu0
  %v5099 = vpop.f32.mrf.mxu0
  %v5100 = vadd.f32 %v43, %v5099
  %v5101 = vpop.f32.mrf.mxu0
  %5102 = vmatprep.mubr.bf16.mxu0 0
  %5103 = vmatmul.mubr.bf16.gmra.mxu0 %v4983
  %v5104 = vpop.f32.mrf.mxu0
  %v5105 = vadd.f32 %v43, %v5104
  %v5106 = vpop.f32.mrf.mxu0
  %v5107 = vpop.f32.mrf.mxu0
  %v5108 = vadd.f32 %v43, %v5107
  %v5109 = vpop.f32.mrf.mxu0
  %5110 = vmatprep.mubr.bf16.mxu0 0
  %5111 = vmatmul.mubr.bf16.gmra.mxu0 %v4986
  %v5112 = vpop.f32.mrf.mxu0
  %v5113 = vadd.f32 %v43, %v5112
  %v5114 = vpop.f32.mrf.mxu0
  %v5115 = vpop.f32.mrf.mxu0
  %v5116 = vadd.f32 %v43, %v5115
  %v5117 = vpop.f32.mrf.mxu0
  %5118 = vmatprep.mubr.bf16.mxu0 0
  %5119 = vmatmul.mubr.bf16.gmra.mxu0 %v4989
  %v5120 = vpop.f32.mrf.mxu0
  %v5121 = vadd.f32 %v43, %v5120
  %v5122 = vpop.f32.mrf.mxu0
  %v5123 = vpop.f32.mrf.mxu0
  %v5124 = vadd.f32 %v43, %v5123
  %v5125 = vpop.f32.mrf.mxu0
  %5126 = vmatprep.mubr.bf16.mxu0 0
  %5127 = vmatmul.mubr.bf16.gmra.mxu0 %v4992
  %v5128 = vpop.f32.mrf.mxu0
  %v5129 = vadd.f32 %v43, %v5128
  %v5130 = vpop.f32.mrf.mxu0
  %v5131 = vpop.f32.mrf.mxu0
  %v5132 = vadd.f32 %v43, %v5131
  %v5133 = vpop.f32.mrf.mxu0
  %5134 = vmatprep.mubr.bf16.mxu0 0
  %5135 = vmatmul.mubr.bf16.gmra.mxu0 %v4995
  %v5136 = vpop.f32.mrf.mxu0
  %v5137 = vadd.f32 %v43, %v5136
  %v5138 = vpop.f32.mrf.mxu0
  %v5139 = vpop.f32.mrf.mxu0
  %v5140 = vadd.f32 %v43, %v5139
  %v5141 = vpop.f32.mrf.mxu0
  %5142 = vmatprep.mubr.bf16.mxu0 0
  %5143 = vmatmul.mubr.bf16.gmra.mxu0 %v4998
  %v5144 = vpop.f32.mrf.mxu0
  %v5145 = vadd.f32 %v43, %v5144
  %v5146 = vpop.f32.mrf.mxu0
  %v5147 = vpop.f32.mrf.mxu0
  %v5148 = vadd.f32 %v43, %v5147
  %v5149 = vpop.f32.mrf.mxu0
  %5150 = vmatprep.mubr.bf16.mxu0 0
  %5151 = vmatmul.mubr.bf16.gmra.mxu0 %v5001
  %v5152 = vpop.f32.mrf.mxu0
  %v5153 = vadd.f32 %v43, %v5152
  %v5154 = vpop.f32.mrf.mxu0
  %v5155 = vpop.f32.mrf.mxu0
  %v5156 = vadd.f32 %v43, %v5155
  %v5157 = vpop.f32.mrf.mxu0
  %5158 = vmatprep.mubr.bf16.mxu0 0
  %5159 = vmatmul.mubr.bf16.gmra.mxu0 %v5004
  %v5160 = vpop.f32.mrf.mxu0
  %v5161 = vadd.f32 %v43, %v5160
  %v5162 = vpop.f32.mrf.mxu0
  %v5163 = vpop.f32.mrf.mxu0
  %v5164 = vadd.f32 %v43, %v5163
  %v5165 = vpop.f32.mrf.mxu0
  %5166 = vdwg.mxu0
  %v5167 = vmax.f32 %v5041, 0.0
  %v5168 = vmax.f32 %v5044, 0.0
  %v5169 = vmax.f32 %v5049, 0.0
  %v5170 = vmax.f32 %v5052, 0.0
  %v5171 = vmax.f32 %v5057, 0.0
  %v5172 = vmax.f32 %v5060, 0.0
  %v5173 = vmax.f32 %v5065, 0.0
  %v5174 = vmax.f32 %v5068, 0.0
  %v5175 = vmax.f32 %v5073, 0.0
  %v5176 = vmax.f32 %v5076, 0.0
  %v5177 = vmax.f32 %v5081, 0.0
  %v5178 = vmax.f32 %v5084, 0.0
  %v5179 = vmax.f32 %v5089, 0.0
  %v5180 = vmax.f32 %v5092, 0.0
  %v5181 = vmax.f32 %v5097, 0.0
  %v5182 = vmax.f32 %v5100, 0.0
  %v5183 = vmax.f32 %v5105, 0.0
  %v5184 = vmax.f32 %v5108, 0.0
  %v5185 = vmax.f32 %v5113, 0.0
  %v5186 = vmax.f32 %v5116, 0.0
  %v5187 = vmax.f32 %v5121, 0.0
  %v5188 = vmax.f32 %v5124, 0.0
  %v5189 = vmax.f32 %v5129, 0.0
  %v5190 = vmax.f32 %v5132, 0.0
  %v5191 = vmax.f32 %v5137, 0.0
  %v5192 = vmax.f32 %v5140, 0.0
  %v5193 = vmax.f32 %v5145, 0.0
  %v5194 = vmax.f32 %v5148, 0.0
  %v5195 = vmax.f32 %v5153, 0.0
  %v5196 = vmax.f32 %v5156, 0.0
  %v5197 = vmax.f32 %v5161, 0.0
  %v5198 = vmax.f32 %v5164, 0.0
  %v5199 = vpack.c.bf16 %v5168, %v5167
  %v5200 = vpack.c.bf16 %v5170, %v5169
  %v5201 = vpack.c.bf16 %v5172, %v5171
  %v5202 = vpack.c.bf16 %v5174, %v5173
  %v5203 = vpack.c.bf16 %v5176, %v5175
  %v5204 = vpack.c.bf16 %v5178, %v5177
  %v5205 = vpack.c.bf16 %v5180, %v5179
  %v5206 = vpack.c.bf16 %v5182, %v5181
  %v5207 = vpack.c.bf16 %v5184, %v5183
  %v5208 = vpack.c.bf16 %v5186, %v5185
  %v5209 = vpack.c.bf16 %v5188, %v5187
  %v5210 = vpack.c.bf16 %v5190, %v5189
  %v5211 = vpack.c.bf16 %v5192, %v5191
  %v5212 = vpack.c.bf16 %v5194, %v5193
  %v5213 = vpack.c.bf16 %v5196, %v5195
  %v5214 = vpack.c.bf16 %v5198, %v5197
  %v5216 = vsel %vm184, %v5199, 0
  %v5219 = vsel %vm184, %v5200, 0
  %v5222 = vsel %vm184, %v5201, 0
  %v5225 = vsel %vm184, %v5202, 0
  %v5228 = vsel %vm184, %v5203, 0
  %v5231 = vsel %vm184, %v5204, 0
  %v5234 = vsel %vm184, %v5205, 0
  %v5237 = vsel %vm184, %v5206, 0
  %v5240 = vsel %vm184, %v5207, 0
  %v5243 = vsel %vm184, %v5208, 0
  %v5246 = vsel %vm184, %v5209, 0
  %v5249 = vsel %vm184, %v5210, 0
  %v5252 = vsel %vm184, %v5211, 0
  %v5255 = vsel %vm184, %v5212, 0
  %v5258 = vsel %vm184, %v5213, 0
  %v5261 = vsel %vm184, %v5214, 0
  %5263 = vmatprep.subr.bf16.mxu0 0
  %5264 = vmatpush1.bf16.msra.mxu0 0
  %5265 = vmatprep.subr.bf16.mxu0 0
  %5266 = vmatpush1.bf16.msra.mxu0 0
  %5267 = vmatprep.subr.bf16.mxu0 0
  %5268 = vmatpush1.bf16.msra.mxu0 0
  %5269 = vmatprep.subr.bf16.mxu0 0
  %5270 = vmatpush1.bf16.msra.mxu0 0
  %5271 = vmatprep.subr.bf16.mxu0 0
  %5272 = vmatpush1.bf16.msra.mxu0 0
  %5273 = vmatprep.subr.bf16.mxu0 0
  %5274 = vmatpush1.bf16.msra.mxu0 0
  %5275 = vmatprep.subr.bf16.mxu0 0
  %5276 = vmatpush1.bf16.msra.mxu0 %v451
  %5277 = vmatprep.subr.bf16.mxu0 0
  %5278 = vmatpush1.bf16.msra.mxu0 %v450
  %5279 = vmatprep.subr.bf16.mxu0 0
  %5280 = vmatpush2.bf16.msra.mxu0 0
  %5281 = vmatprep.subr.bf16.mxu0 0
  %5282 = vmatpush2.bf16.msra.mxu0 0
  %5283 = vmatprep.subr.bf16.mxu0 0
  %5284 = vmatpush2.bf16.msra.mxu0 0
  %5285 = vmatprep.subr.bf16.mxu0 0
  %5286 = vmatpush2.bf16.msra.mxu0 0
  %5287 = vmatprep.subr.bf16.mxu0 0
  %5288 = vmatpush2.bf16.msra.mxu0 0
  %5289 = vmatprep.subr.bf16.mxu0 0
  %5290 = vmatpush2.bf16.msra.mxu0 0
  %5291 = vmatprep.subr.bf16.mxu0 0
  %5292 = vmatpush2.bf16.msra.mxu0 0
  %5293 = vmatprep.subr.bf16.mxu0 0
  %5294 = vmatpush2.bf16.msra.mxu0 0
  %5295 = vmatprep.mubr.bf16.mxu0 0
  %5296 = vmatmul.mubr.bf16.gmra.mxu0 %v5216
  %v5297 = vpop.f32.mrf.mxu0
  %v5298 = vadd.f32 %v47, %v5297
  %v5299 = vpop.f32.mrf.mxu0
  %v5300 = vpop.f32.mrf.mxu0
  %v5301 = vadd.f32 %v47, %v5300
  %v5302 = vpop.f32.mrf.mxu0
  %5303 = vmatprep.mubr.bf16.mxu0 0
  %5304 = vmatmul.mubr.bf16.gmra.mxu0 %v5219
  %v5305 = vpop.f32.mrf.mxu0
  %v5306 = vadd.f32 %v47, %v5305
  %v5307 = vpop.f32.mrf.mxu0
  %v5308 = vpop.f32.mrf.mxu0
  %v5309 = vadd.f32 %v47, %v5308
  %v5310 = vpop.f32.mrf.mxu0
  %5311 = vmatprep.mubr.bf16.mxu0 0
  %5312 = vmatmul.mubr.bf16.gmra.mxu0 %v5222
  %v5313 = vpop.f32.mrf.mxu0
  %v5314 = vadd.f32 %v47, %v5313
  %v5315 = vpop.f32.mrf.mxu0
  %v5316 = vpop.f32.mrf.mxu0
  %v5317 = vadd.f32 %v47, %v5316
  %v5318 = vpop.f32.mrf.mxu0
  %5319 = vmatprep.mubr.bf16.mxu0 0
  %5320 = vmatmul.mubr.bf16.gmra.mxu0 %v5225
  %v5321 = vpop.f32.mrf.mxu0
  %v5322 = vadd.f32 %v47, %v5321
  %v5323 = vpop.f32.mrf.mxu0
  %v5324 = vpop.f32.mrf.mxu0
  %v5325 = vadd.f32 %v47, %v5324
  %v5326 = vpop.f32.mrf.mxu0
  %5327 = vmatprep.mubr.bf16.mxu0 0
  %5328 = vmatmul.mubr.bf16.gmra.mxu0 %v5228
  %v5329 = vpop.f32.mrf.mxu0
  %v5330 = vadd.f32 %v47, %v5329
  %v5331 = vpop.f32.mrf.mxu0
  %v5332 = vpop.f32.mrf.mxu0
  %v5333 = vadd.f32 %v47, %v5332
  %v5334 = vpop.f32.mrf.mxu0
  %5335 = vmatprep.mubr.bf16.mxu0 0
  %5336 = vmatmul.mubr.bf16.gmra.mxu0 %v5231
  %v5337 = vpop.f32.mrf.mxu0
  %v5338 = vadd.f32 %v47, %v5337
  %v5339 = vpop.f32.mrf.mxu0
  %v5340 = vpop.f32.mrf.mxu0
  %v5341 = vadd.f32 %v47, %v5340
  %v5342 = vpop.f32.mrf.mxu0
  %5343 = vmatprep.mubr.bf16.mxu0 0
  %5344 = vmatmul.mubr.bf16.gmra.mxu0 %v5234
  %v5345 = vpop.f32.mrf.mxu0
  %v5346 = vadd.f32 %v47, %v5345
  %v5347 = vpop.f32.mrf.mxu0
  %v5348 = vpop.f32.mrf.mxu0
  %v5349 = vadd.f32 %v47, %v5348
  %v5350 = vpop.f32.mrf.mxu0
  %5351 = vmatprep.mubr.bf16.mxu0 0
  %5352 = vmatmul.mubr.bf16.gmra.mxu0 %v5237
  %v5353 = vpop.f32.mrf.mxu0
  %v5354 = vadd.f32 %v47, %v5353
  %v5355 = vpop.f32.mrf.mxu0
  %v5356 = vpop.f32.mrf.mxu0
  %v5357 = vadd.f32 %v47, %v5356
  %v5358 = vpop.f32.mrf.mxu0
  %5359 = vmatprep.mubr.bf16.mxu0 0
  %5360 = vmatmul.mubr.bf16.gmra.mxu0 %v5240
  %v5361 = vpop.f32.mrf.mxu0
  %v5362 = vadd.f32 %v47, %v5361
  %v5363 = vpop.f32.mrf.mxu0
  %v5364 = vpop.f32.mrf.mxu0
  %v5365 = vadd.f32 %v47, %v5364
  %v5366 = vpop.f32.mrf.mxu0
  %5367 = vmatprep.mubr.bf16.mxu0 0
  %5368 = vmatmul.mubr.bf16.gmra.mxu0 %v5243
  %v5369 = vpop.f32.mrf.mxu0
  %v5370 = vadd.f32 %v47, %v5369
  %v5371 = vpop.f32.mrf.mxu0
  %v5372 = vpop.f32.mrf.mxu0
  %v5373 = vadd.f32 %v47, %v5372
  %v5374 = vpop.f32.mrf.mxu0
  %5375 = vmatprep.mubr.bf16.mxu0 0
  %5376 = vmatmul.mubr.bf16.gmra.mxu0 %v5246
  %v5377 = vpop.f32.mrf.mxu0
  %v5378 = vadd.f32 %v47, %v5377
  %v5379 = vpop.f32.mrf.mxu0
  %v5380 = vpop.f32.mrf.mxu0
  %v5381 = vadd.f32 %v47, %v5380
  %v5382 = vpop.f32.mrf.mxu0
  %5383 = vmatprep.mubr.bf16.mxu0 0
  %5384 = vmatmul.mubr.bf16.gmra.mxu0 %v5249
  %v5385 = vpop.f32.mrf.mxu0
  %v5386 = vadd.f32 %v47, %v5385
  %v5387 = vpop.f32.mrf.mxu0
  %v5388 = vpop.f32.mrf.mxu0
  %v5389 = vadd.f32 %v47, %v5388
  %v5390 = vpop.f32.mrf.mxu0
  %5391 = vmatprep.mubr.bf16.mxu0 0
  %5392 = vmatmul.mubr.bf16.gmra.mxu0 %v5252
  %v5393 = vpop.f32.mrf.mxu0
  %v5394 = vadd.f32 %v47, %v5393
  %v5395 = vpop.f32.mrf.mxu0
  %v5396 = vpop.f32.mrf.mxu0
  %v5397 = vadd.f32 %v47, %v5396
  %v5398 = vpop.f32.mrf.mxu0
  %5399 = vmatprep.mubr.bf16.mxu0 0
  %5400 = vmatmul.mubr.bf16.gmra.mxu0 %v5255
  %v5401 = vpop.f32.mrf.mxu0
  %v5402 = vadd.f32 %v47, %v5401
  %v5403 = vpop.f32.mrf.mxu0
  %v5404 = vpop.f32.mrf.mxu0
  %v5405 = vadd.f32 %v47, %v5404
  %v5406 = vpop.f32.mrf.mxu0
  %5407 = vmatprep.mubr.bf16.mxu0 0
  %5408 = vmatmul.mubr.bf16.gmra.mxu0 %v5258
  %v5409 = vpop.f32.mrf.mxu0
  %v5410 = vadd.f32 %v47, %v5409
  %v5411 = vpop.f32.mrf.mxu0
  %v5412 = vpop.f32.mrf.mxu0
  %v5413 = vadd.f32 %v47, %v5412
  %v5414 = vpop.f32.mrf.mxu0
  %5415 = vmatprep.mubr.bf16.mxu0 0
  %5416 = vmatmul.mubr.bf16.gmra.mxu0 %v5261
  %v5417 = vpop.f32.mrf.mxu0
  %v5418 = vadd.f32 %v47, %v5417
  %v5419 = vpop.f32.mrf.mxu0
  %v5420 = vpop.f32.mrf.mxu0
  %v5421 = vadd.f32 %v47, %v5420
  %v5422 = vpop.f32.mrf.mxu0
  %5423 = vdwg.mxu0
  %v5424 = vmax.f32 %v5298, 0.0
  %v5425 = vmax.f32 %v5301, 0.0
  %v5426 = vmax.f32 %v5306, 0.0
  %v5427 = vmax.f32 %v5309, 0.0
  %v5428 = vmax.f32 %v5314, 0.0
  %v5429 = vmax.f32 %v5317, 0.0
  %v5430 = vmax.f32 %v5322, 0.0
  %v5431 = vmax.f32 %v5325, 0.0
  %v5432 = vmax.f32 %v5330, 0.0
  %v5433 = vmax.f32 %v5333, 0.0
  %v5434 = vmax.f32 %v5338, 0.0
  %v5435 = vmax.f32 %v5341, 0.0
  %v5436 = vmax.f32 %v5346, 0.0
  %v5437 = vmax.f32 %v5349, 0.0
  %v5438 = vmax.f32 %v5354, 0.0
  %v5439 = vmax.f32 %v5357, 0.0
  %v5440 = vmax.f32 %v5362, 0.0
  %v5441 = vmax.f32 %v5365, 0.0
  %v5442 = vmax.f32 %v5370, 0.0
  %v5443 = vmax.f32 %v5373, 0.0
  %v5444 = vmax.f32 %v5378, 0.0
  %v5445 = vmax.f32 %v5381, 0.0
  %v5446 = vmax.f32 %v5386, 0.0
  %v5447 = vmax.f32 %v5389, 0.0
  %v5448 = vmax.f32 %v5394, 0.0
  %v5449 = vmax.f32 %v5397, 0.0
  %v5450 = vmax.f32 %v5402, 0.0
  %v5451 = vmax.f32 %v5405, 0.0
  %v5452 = vmax.f32 %v5410, 0.0
  %v5453 = vmax.f32 %v5413, 0.0
  %v5454 = vmax.f32 %v5418, 0.0
  %v5455 = vmax.f32 %v5421, 0.0
  %v5456 = vpack.c.bf16 %v5425, %v5424
  %v5457 = vpack.c.bf16 %v5427, %v5426
  %v5458 = vpack.c.bf16 %v5429, %v5428
  %v5459 = vpack.c.bf16 %v5431, %v5430
  %v5460 = vpack.c.bf16 %v5433, %v5432
  %v5461 = vpack.c.bf16 %v5435, %v5434
  %v5462 = vpack.c.bf16 %v5437, %v5436
  %v5463 = vpack.c.bf16 %v5439, %v5438
  %v5464 = vpack.c.bf16 %v5441, %v5440
  %v5465 = vpack.c.bf16 %v5443, %v5442
  %v5466 = vpack.c.bf16 %v5445, %v5444
  %v5467 = vpack.c.bf16 %v5447, %v5446
  %v5468 = vpack.c.bf16 %v5449, %v5448
  %v5469 = vpack.c.bf16 %v5451, %v5450
  %v5470 = vpack.c.bf16 %v5453, %v5452
  %v5471 = vpack.c.bf16 %v5455, %v5454
  %v5473 = vsel %vm184, %v5456, 0
  %v5476 = vsel %vm184, %v5457, 0
  %v5479 = vsel %vm184, %v5458, 0
  %v5482 = vsel %vm184, %v5459, 0
  %v5485 = vsel %vm184, %v5460, 0
  %v5488 = vsel %vm184, %v5461, 0
  %v5491 = vsel %vm184, %v5462, 0
  %v5494 = vsel %vm184, %v5463, 0
  %v5497 = vsel %vm184, %v5464, 0
  %v5500 = vsel %vm184, %v5465, 0
  %v5503 = vsel %vm184, %v5466, 0
  %v5506 = vsel %vm184, %v5467, 0
  %v5509 = vsel %vm184, %v5468, 0
  %v5512 = vsel %vm184, %v5469, 0
  %v5515 = vsel %vm184, %v5470, 0
  %v5518 = vsel %vm184, %v5471, 0
  %5520 = vmatprep.subr.bf16.mxu0 0
  %5521 = vmatpush1.bf16.msra.mxu0 0
  %5522 = vmatprep.subr.bf16.mxu0 0
  %5523 = vmatpush1.bf16.msra.mxu0 0
  %5524 = vmatprep.subr.bf16.mxu0 0
  %5525 = vmatpush1.bf16.msra.mxu0 0
  %5526 = vmatprep.subr.bf16.mxu0 0
  %5527 = vmatpush1.bf16.msra.mxu0 0
  %5528 = vmatprep.subr.bf16.mxu0 0
  %5529 = vmatpush1.bf16.msra.mxu0 0
  %5530 = vmatprep.subr.bf16.mxu0 0
  %5531 = vmatpush1.bf16.msra.mxu0 0
  %5532 = vmatprep.subr.bf16.mxu0 0
  %5533 = vmatpush1.bf16.msra.mxu0 %v720
  %5534 = vmatprep.subr.bf16.mxu0 0
  %5535 = vmatpush1.bf16.msra.mxu0 %v719
  %5536 = vmatprep.subr.bf16.mxu0 0
  %5537 = vmatpush2.bf16.msra.mxu0 0
  %5538 = vmatprep.subr.bf16.mxu0 0
  %5539 = vmatpush2.bf16.msra.mxu0 0
  %5540 = vmatprep.subr.bf16.mxu0 0
  %5541 = vmatpush2.bf16.msra.mxu0 0
  %5542 = vmatprep.subr.bf16.mxu0 0
  %5543 = vmatpush2.bf16.msra.mxu0 0
  %5544 = vmatprep.subr.bf16.mxu0 0
  %5545 = vmatpush2.bf16.msra.mxu0 0
  %5546 = vmatprep.subr.bf16.mxu0 0
  %5547 = vmatpush2.bf16.msra.mxu0 0
  %5548 = vmatprep.subr.bf16.mxu0 0
  %5549 = vmatpush2.bf16.msra.mxu0 0
  %5550 = vmatprep.subr.bf16.mxu0 0
  %5551 = vmatpush2.bf16.msra.mxu0 0
  %5552 = vmatprep.mubr.bf16.mxu0 0
  %5553 = vmatmul.mubr.bf16.gmra.mxu0 %v5473
  %v5554 = vpop.f32.mrf.mxu0
  %v5555 = vadd.f32 %v51, %v5554
  %v5556 = vpop.f32.mrf.mxu0
  %v5557 = vpop.f32.mrf.mxu0
  %v5558 = vadd.f32 %v51, %v5557
  %v5559 = vpop.f32.mrf.mxu0
  %5560 = vmatprep.mubr.bf16.mxu0 0
  %5561 = vmatmul.mubr.bf16.gmra.mxu0 %v5476
  %v5562 = vpop.f32.mrf.mxu0
  %v5563 = vadd.f32 %v51, %v5562
  %v5564 = vpop.f32.mrf.mxu0
  %v5565 = vpop.f32.mrf.mxu0
  %v5566 = vadd.f32 %v51, %v5565
  %v5567 = vpop.f32.mrf.mxu0
  %5568 = vmatprep.mubr.bf16.mxu0 0
  %5569 = vmatmul.mubr.bf16.gmra.mxu0 %v5479
  %v5570 = vpop.f32.mrf.mxu0
  %v5571 = vadd.f32 %v51, %v5570
  %v5572 = vpop.f32.mrf.mxu0
  %v5573 = vpop.f32.mrf.mxu0
  %v5574 = vadd.f32 %v51, %v5573
  %v5575 = vpop.f32.mrf.mxu0
  %5576 = vmatprep.mubr.bf16.mxu0 0
  %5577 = vmatmul.mubr.bf16.gmra.mxu0 %v5482
  %v5578 = vpop.f32.mrf.mxu0
  %v5579 = vadd.f32 %v51, %v5578
  %v5580 = vpop.f32.mrf.mxu0
  %v5581 = vpop.f32.mrf.mxu0
  %v5582 = vadd.f32 %v51, %v5581
  %v5583 = vpop.f32.mrf.mxu0
  %5584 = vmatprep.mubr.bf16.mxu0 0
  %5585 = vmatmul.mubr.bf16.gmra.mxu0 %v5485
  %v5586 = vpop.f32.mrf.mxu0
  %v5587 = vadd.f32 %v51, %v5586
  %v5588 = vpop.f32.mrf.mxu0
  %v5589 = vpop.f32.mrf.mxu0
  %v5590 = vadd.f32 %v51, %v5589
  %v5591 = vpop.f32.mrf.mxu0
  %5592 = vmatprep.mubr.bf16.mxu0 0
  %5593 = vmatmul.mubr.bf16.gmra.mxu0 %v5488
  %v5594 = vpop.f32.mrf.mxu0
  %v5595 = vadd.f32 %v51, %v5594
  %v5596 = vpop.f32.mrf.mxu0
  %v5597 = vpop.f32.mrf.mxu0
  %v5598 = vadd.f32 %v51, %v5597
  %v5599 = vpop.f32.mrf.mxu0
  %5600 = vmatprep.mubr.bf16.mxu0 0
  %5601 = vmatmul.mubr.bf16.gmra.mxu0 %v5491
  %v5602 = vpop.f32.mrf.mxu0
  %v5603 = vadd.f32 %v51, %v5602
  %v5604 = vpop.f32.mrf.mxu0
  %v5605 = vpop.f32.mrf.mxu0
  %v5606 = vadd.f32 %v51, %v5605
  %v5607 = vpop.f32.mrf.mxu0
  %5608 = vmatprep.mubr.bf16.mxu0 0
  %5609 = vmatmul.mubr.bf16.gmra.mxu0 %v5494
  %v5610 = vpop.f32.mrf.mxu0
  %v5611 = vadd.f32 %v51, %v5610
  %v5612 = vpop.f32.mrf.mxu0
  %v5613 = vpop.f32.mrf.mxu0
  %v5614 = vadd.f32 %v51, %v5613
  %v5615 = vpop.f32.mrf.mxu0
  %5616 = vmatprep.mubr.bf16.mxu0 0
  %5617 = vmatmul.mubr.bf16.gmra.mxu0 %v5497
  %v5618 = vpop.f32.mrf.mxu0
  %v5619 = vadd.f32 %v51, %v5618
  %v5620 = vpop.f32.mrf.mxu0
  %v5621 = vpop.f32.mrf.mxu0
  %v5622 = vadd.f32 %v51, %v5621
  %v5623 = vpop.f32.mrf.mxu0
  %5624 = vmatprep.mubr.bf16.mxu0 0
  %5625 = vmatmul.mubr.bf16.gmra.mxu0 %v5500
  %v5626 = vpop.f32.mrf.mxu0
  %v5627 = vadd.f32 %v51, %v5626
  %v5628 = vpop.f32.mrf.mxu0
  %v5629 = vpop.f32.mrf.mxu0
  %v5630 = vadd.f32 %v51, %v5629
  %v5631 = vpop.f32.mrf.mxu0
  %5632 = vmatprep.mubr.bf16.mxu0 0
  %5633 = vmatmul.mubr.bf16.gmra.mxu0 %v5503
  %v5634 = vpop.f32.mrf.mxu0
  %v5635 = vadd.f32 %v51, %v5634
  %v5636 = vpop.f32.mrf.mxu0
  %v5637 = vpop.f32.mrf.mxu0
  %v5638 = vadd.f32 %v51, %v5637
  %v5639 = vpop.f32.mrf.mxu0
  %5640 = vmatprep.mubr.bf16.mxu0 0
  %5641 = vmatmul.mubr.bf16.gmra.mxu0 %v5506
  %v5642 = vpop.f32.mrf.mxu0
  %v5643 = vadd.f32 %v51, %v5642
  %v5644 = vpop.f32.mrf.mxu0
  %v5645 = vpop.f32.mrf.mxu0
  %v5646 = vadd.f32 %v51, %v5645
  %v5647 = vpop.f32.mrf.mxu0
  %5648 = vmatprep.mubr.bf16.mxu0 0
  %5649 = vmatmul.mubr.bf16.gmra.mxu0 %v5509
  %v5650 = vpop.f32.mrf.mxu0
  %v5651 = vadd.f32 %v51, %v5650
  %v5652 = vpop.f32.mrf.mxu0
  %v5653 = vpop.f32.mrf.mxu0
  %v5654 = vadd.f32 %v51, %v5653
  %v5655 = vpop.f32.mrf.mxu0
  %5656 = vmatprep.mubr.bf16.mxu0 0
  %5657 = vmatmul.mubr.bf16.gmra.mxu0 %v5512
  %v5658 = vpop.f32.mrf.mxu0
  %v5659 = vadd.f32 %v51, %v5658
  %v5660 = vpop.f32.mrf.mxu0
  %v5661 = vpop.f32.mrf.mxu0
  %v5662 = vadd.f32 %v51, %v5661
  %v5663 = vpop.f32.mrf.mxu0
  %5664 = vmatprep.mubr.bf16.mxu0 0
  %5665 = vmatmul.mubr.bf16.gmra.mxu0 %v5515
  %v5666 = vpop.f32.mrf.mxu0
  %v5667 = vadd.f32 %v51, %v5666
  %v5668 = vpop.f32.mrf.mxu0
  %v5669 = vpop.f32.mrf.mxu0
  %v5670 = vadd.f32 %v51, %v5669
  %v5671 = vpop.f32.mrf.mxu0
  %5672 = vmatprep.mubr.bf16.mxu0 0
  %5673 = vmatmul.mubr.bf16.gmra.mxu0 %v5518
  %v5674 = vpop.f32.mrf.mxu0
  %v5675 = vadd.f32 %v51, %v5674
  %v5676 = vpop.f32.mrf.mxu0
  %v5677 = vpop.f32.mrf.mxu0
  %v5678 = vadd.f32 %v51, %v5677
  %v5679 = vpop.f32.mrf.mxu0
  %5680 = vdwg.mxu0
  %v5681 = vmax.f32 %v5555, 0.0
  %v5682 = vmax.f32 %v5558, 0.0
  %v5683 = vmax.f32 %v5563, 0.0
  %v5684 = vmax.f32 %v5566, 0.0
  %v5685 = vmax.f32 %v5571, 0.0
  %v5686 = vmax.f32 %v5574, 0.0
  %v5687 = vmax.f32 %v5579, 0.0
  %v5688 = vmax.f32 %v5582, 0.0
  %v5689 = vmax.f32 %v5587, 0.0
  %v5690 = vmax.f32 %v5590, 0.0
  %v5691 = vmax.f32 %v5595, 0.0
  %v5692 = vmax.f32 %v5598, 0.0
  %v5693 = vmax.f32 %v5603, 0.0
  %v5694 = vmax.f32 %v5606, 0.0
  %v5695 = vmax.f32 %v5611, 0.0
  %v5696 = vmax.f32 %v5614, 0.0
  %v5697 = vmax.f32 %v5619, 0.0
  %v5698 = vmax.f32 %v5622, 0.0
  %v5699 = vmax.f32 %v5627, 0.0
  %v5700 = vmax.f32 %v5630, 0.0
  %v5701 = vmax.f32 %v5635, 0.0
  %v5702 = vmax.f32 %v5638, 0.0
  %v5703 = vmax.f32 %v5643, 0.0
  %v5704 = vmax.f32 %v5646, 0.0
  %v5705 = vmax.f32 %v5651, 0.0
  %v5706 = vmax.f32 %v5654, 0.0
  %v5707 = vmax.f32 %v5659, 0.0
  %v5708 = vmax.f32 %v5662, 0.0
  %v5709 = vmax.f32 %v5667, 0.0
  %v5710 = vmax.f32 %v5670, 0.0
  %v5711 = vmax.f32 %v5675, 0.0
  %v5712 = vmax.f32 %v5678, 0.0
  %v5713 = vpack.c.bf16 %v5682, %v5681
  %v5714 = vpack.c.bf16 %v5684, %v5683
  %v5715 = vpack.c.bf16 %v5686, %v5685
  %v5716 = vpack.c.bf16 %v5688, %v5687
  %v5717 = vpack.c.bf16 %v5690, %v5689
  %v5718 = vpack.c.bf16 %v5692, %v5691
  %v5719 = vpack.c.bf16 %v5694, %v5693
  %v5720 = vpack.c.bf16 %v5696, %v5695
  %v5721 = vpack.c.bf16 %v5698, %v5697
  %v5722 = vpack.c.bf16 %v5700, %v5699
  %v5723 = vpack.c.bf16 %v5702, %v5701
  %v5724 = vpack.c.bf16 %v5704, %v5703
  %v5725 = vpack.c.bf16 %v5706, %v5705
  %v5726 = vpack.c.bf16 %v5708, %v5707
  %v5727 = vpack.c.bf16 %v5710, %v5709
  %v5728 = vpack.c.bf16 %v5712, %v5711
  %v5730 = vsel %vm184, %v5713, 0
  %v5733 = vsel %vm184, %v5714, 0
  %v5736 = vsel %vm184, %v5715, 0
  %v5739 = vsel %vm184, %v5716, 0
  %v5742 = vsel %vm184, %v5717, 0
  %v5745 = vsel %vm184, %v5718, 0
  %v5748 = vsel %vm184, %v5719, 0
  %v5751 = vsel %vm184, %v5720, 0
  %v5754 = vsel %vm184, %v5721, 0
  %v5757 = vsel %vm184, %v5722, 0
  %v5760 = vsel %vm184, %v5723, 0
  %v5763 = vsel %vm184, %v5724, 0
  %v5766 = vsel %vm184, %v5725, 0
  %v5769 = vsel %vm184, %v5726, 0
  %v5772 = vsel %vm184, %v5727, 0
  %v5775 = vsel %vm184, %v5728, 0
  %5777 = vmatprep.subr.bf16.mxu0 0
  %5778 = vmatpush1.bf16.msra.mxu0 0
  %5779 = vmatprep.subr.bf16.mxu0 0
  %5780 = vmatpush1.bf16.msra.mxu0 0
  %5781 = vmatprep.subr.bf16.mxu0 0
  %5782 = vmatpush1.bf16.msra.mxu0 0
  %5783 = vmatprep.subr.bf16.mxu0 0
  %5784 = vmatpush1.bf16.msra.mxu0 0
  %5785 = vmatprep.subr.bf16.mxu0 0
  %5786 = vmatpush1.bf16.msra.mxu0 0
  %5787 = vmatprep.subr.bf16.mxu0 0
  %5788 = vmatpush1.bf16.msra.mxu0 0
  %5789 = vmatprep.subr.bf16.mxu0 0
  %5790 = vmatpush1.bf16.msra.mxu0 %v989
  %5791 = vmatprep.subr.bf16.mxu0 0
  %5792 = vmatpush1.bf16.msra.mxu0 %v988
  %5793 = vmatprep.subr.bf16.mxu0 0
  %5794 = vmatpush2.bf16.msra.mxu0 0
  %5795 = vmatprep.subr.bf16.mxu0 0
  %5796 = vmatpush2.bf16.msra.mxu0 0
  %5797 = vmatprep.subr.bf16.mxu0 0
  %5798 = vmatpush2.bf16.msra.mxu0 0
  %5799 = vmatprep.subr.bf16.mxu0 0
  %5800 = vmatpush2.bf16.msra.mxu0 0
  %5801 = vmatprep.subr.bf16.mxu0 0
  %5802 = vmatpush2.bf16.msra.mxu0 0
  %5803 = vmatprep.subr.bf16.mxu0 0
  %5804 = vmatpush2.bf16.msra.mxu0 0
  %5805 = vmatprep.subr.bf16.mxu0 0
  %5806 = vmatpush2.bf16.msra.mxu0 0
  %5807 = vmatprep.subr.bf16.mxu0 0
  %5808 = vmatpush2.bf16.msra.mxu0 0
  %5809 = vmatprep.mubr.bf16.mxu0 0
  %5810 = vmatmul.mubr.bf16.gmra.mxu0 %v5730
  %v5811 = vpop.f32.mrf.mxu0
  %v5812 = vadd.f32 %v55, %v5811
  %v5813 = vpop.f32.mrf.mxu0
  %v5814 = vpop.f32.mrf.mxu0
  %v5815 = vadd.f32 %v55, %v5814
  %v5816 = vpop.f32.mrf.mxu0
  %5817 = vmatprep.mubr.bf16.mxu0 0
  %5818 = vmatmul.mubr.bf16.gmra.mxu0 %v5733
  %v5819 = vpop.f32.mrf.mxu0
  %v5820 = vadd.f32 %v55, %v5819
  %v5821 = vpop.f32.mrf.mxu0
  %v5822 = vpop.f32.mrf.mxu0
  %v5823 = vadd.f32 %v55, %v5822
  %v5824 = vpop.f32.mrf.mxu0
  %5825 = vmatprep.mubr.bf16.mxu0 0
  %5826 = vmatmul.mubr.bf16.gmra.mxu0 %v5736
  %v5827 = vpop.f32.mrf.mxu0
  %v5828 = vadd.f32 %v55, %v5827
  %v5829 = vpop.f32.mrf.mxu0
  %v5830 = vpop.f32.mrf.mxu0
  %v5831 = vadd.f32 %v55, %v5830
  %v5832 = vpop.f32.mrf.mxu0
  %5833 = vmatprep.mubr.bf16.mxu0 0
  %5834 = vmatmul.mubr.bf16.gmra.mxu0 %v5739
  %v5835 = vpop.f32.mrf.mxu0
  %v5836 = vadd.f32 %v55, %v5835
  %v5837 = vpop.f32.mrf.mxu0
  %v5838 = vpop.f32.mrf.mxu0
  %v5839 = vadd.f32 %v55, %v5838
  %v5840 = vpop.f32.mrf.mxu0
  %5841 = vmatprep.mubr.bf16.mxu0 0
  %5842 = vmatmul.mubr.bf16.gmra.mxu0 %v5742
  %v5843 = vpop.f32.mrf.mxu0
  %v5844 = vadd.f32 %v55, %v5843
  %v5845 = vpop.f32.mrf.mxu0
  %v5846 = vpop.f32.mrf.mxu0
  %v5847 = vadd.f32 %v55, %v5846
  %v5848 = vpop.f32.mrf.mxu0
  %5849 = vmatprep.mubr.bf16.mxu0 0
  %5850 = vmatmul.mubr.bf16.gmra.mxu0 %v5745
  %v5851 = vpop.f32.mrf.mxu0
  %v5852 = vadd.f32 %v55, %v5851
  %v5853 = vpop.f32.mrf.mxu0
  %v5854 = vpop.f32.mrf.mxu0
  %v5855 = vadd.f32 %v55, %v5854
  %v5856 = vpop.f32.mrf.mxu0
  %5857 = vmatprep.mubr.bf16.mxu0 0
  %5858 = vmatmul.mubr.bf16.gmra.mxu0 %v5748
  %v5859 = vpop.f32.mrf.mxu0
  %v5860 = vadd.f32 %v55, %v5859
  %v5861 = vpop.f32.mrf.mxu0
  %v5862 = vpop.f32.mrf.mxu0
  %v5863 = vadd.f32 %v55, %v5862
  %v5864 = vpop.f32.mrf.mxu0
  %5865 = vmatprep.mubr.bf16.mxu0 0
  %5866 = vmatmul.mubr.bf16.gmra.mxu0 %v5751
  %v5867 = vpop.f32.mrf.mxu0
  %v5868 = vadd.f32 %v55, %v5867
  %v5869 = vpop.f32.mrf.mxu0
  %v5870 = vpop.f32.mrf.mxu0
  %v5871 = vadd.f32 %v55, %v5870
  %v5872 = vpop.f32.mrf.mxu0
  %5873 = vmatprep.mubr.bf16.mxu0 0
  %5874 = vmatmul.mubr.bf16.gmra.mxu0 %v5754
  %v5875 = vpop.f32.mrf.mxu0
  %v5876 = vadd.f32 %v55, %v5875
  %v5877 = vpop.f32.mrf.mxu0
  %v5878 = vpop.f32.mrf.mxu0
  %v5879 = vadd.f32 %v55, %v5878
  %v5880 = vpop.f32.mrf.mxu0
  %5881 = vmatprep.mubr.bf16.mxu0 0
  %5882 = vmatmul.mubr.bf16.gmra.mxu0 %v5757
  %v5883 = vpop.f32.mrf.mxu0
  %v5884 = vadd.f32 %v55, %v5883
  %v5885 = vpop.f32.mrf.mxu0
  %v5886 = vpop.f32.mrf.mxu0
  %v5887 = vadd.f32 %v55, %v5886
  %v5888 = vpop.f32.mrf.mxu0
  %5889 = vmatprep.mubr.bf16.mxu0 0
  %5890 = vmatmul.mubr.bf16.gmra.mxu0 %v5760
  %v5891 = vpop.f32.mrf.mxu0
  %v5892 = vadd.f32 %v55, %v5891
  %v5893 = vpop.f32.mrf.mxu0
  %v5894 = vpop.f32.mrf.mxu0
  %v5895 = vadd.f32 %v55, %v5894
  %v5896 = vpop.f32.mrf.mxu0
  %5897 = vmatprep.mubr.bf16.mxu0 0
  %5898 = vmatmul.mubr.bf16.gmra.mxu0 %v5763
  %v5899 = vpop.f32.mrf.mxu0
  %v5900 = vadd.f32 %v55, %v5899
  %v5901 = vpop.f32.mrf.mxu0
  %v5902 = vpop.f32.mrf.mxu0
  %v5903 = vadd.f32 %v55, %v5902
  %v5904 = vpop.f32.mrf.mxu0
  %5905 = vmatprep.mubr.bf16.mxu0 0
  %5906 = vmatmul.mubr.bf16.gmra.mxu0 %v5766
  %v5907 = vpop.f32.mrf.mxu0
  %v5908 = vadd.f32 %v55, %v5907
  %v5909 = vpop.f32.mrf.mxu0
  %v5910 = vpop.f32.mrf.mxu0
  %v5911 = vadd.f32 %v55, %v5910
  %v5912 = vpop.f32.mrf.mxu0
  %5913 = vmatprep.mubr.bf16.mxu0 0
  %5914 = vmatmul.mubr.bf16.gmra.mxu0 %v5769
  %v5915 = vpop.f32.mrf.mxu0
  %v5916 = vadd.f32 %v55, %v5915
  %v5917 = vpop.f32.mrf.mxu0
  %v5918 = vpop.f32.mrf.mxu0
  %v5919 = vadd.f32 %v55, %v5918
  %v5920 = vpop.f32.mrf.mxu0
  %5921 = vmatprep.mubr.bf16.mxu0 0
  %5922 = vmatmul.mubr.bf16.gmra.mxu0 %v5772
  %v5923 = vpop.f32.mrf.mxu0
  %v5924 = vadd.f32 %v55, %v5923
  %v5925 = vpop.f32.mrf.mxu0
  %v5926 = vpop.f32.mrf.mxu0
  %v5927 = vadd.f32 %v55, %v5926
  %v5928 = vpop.f32.mrf.mxu0
  %5929 = vmatprep.mubr.bf16.mxu0 0
  %5930 = vmatmul.mubr.bf16.gmra.mxu0 %v5775
  %v5931 = vpop.f32.mrf.mxu0
  %v5932 = vadd.f32 %v55, %v5931
  %v5933 = vpop.f32.mrf.mxu0
  %v5934 = vpop.f32.mrf.mxu0
  %v5935 = vadd.f32 %v55, %v5934
  %v5936 = vpop.f32.mrf.mxu0
  %5937 = vdwg.mxu0
  %v5938 = vmax.f32 %v5812, 0.0
  %v5939 = vmax.f32 %v5815, 0.0
  %v5940 = vmax.f32 %v5820, 0.0
  %v5941 = vmax.f32 %v5823, 0.0
  %v5942 = vmax.f32 %v5828, 0.0
  %v5943 = vmax.f32 %v5831, 0.0
  %v5944 = vmax.f32 %v5836, 0.0
  %v5945 = vmax.f32 %v5839, 0.0
  %v5946 = vmax.f32 %v5844, 0.0
  %v5947 = vmax.f32 %v5847, 0.0
  %v5948 = vmax.f32 %v5852, 0.0
  %v5949 = vmax.f32 %v5855, 0.0
  %v5950 = vmax.f32 %v5860, 0.0
  %v5951 = vmax.f32 %v5863, 0.0
  %v5952 = vmax.f32 %v5868, 0.0
  %v5953 = vmax.f32 %v5871, 0.0
  %v5954 = vmax.f32 %v5876, 0.0
  %v5955 = vmax.f32 %v5879, 0.0
  %v5956 = vmax.f32 %v5884, 0.0
  %v5957 = vmax.f32 %v5887, 0.0
  %v5958 = vmax.f32 %v5892, 0.0
  %v5959 = vmax.f32 %v5895, 0.0
  %v5960 = vmax.f32 %v5900, 0.0
  %v5961 = vmax.f32 %v5903, 0.0
  %v5962 = vmax.f32 %v5908, 0.0
  %v5963 = vmax.f32 %v5911, 0.0
  %v5964 = vmax.f32 %v5916, 0.0
  %v5965 = vmax.f32 %v5919, 0.0
  %v5966 = vmax.f32 %v5924, 0.0
  %v5967 = vmax.f32 %v5927, 0.0
  %v5968 = vmax.f32 %v5932, 0.0
  %v5969 = vmax.f32 %v5935, 0.0
  %v5970 = vpack.c.bf16 %v5939, %v5938
  %v5971 = vpack.c.bf16 %v5941, %v5940
  %v5972 = vpack.c.bf16 %v5943, %v5942
  %v5973 = vpack.c.bf16 %v5945, %v5944
  %v5974 = vpack.c.bf16 %v5947, %v5946
  %v5975 = vpack.c.bf16 %v5949, %v5948
  %v5976 = vpack.c.bf16 %v5951, %v5950
  %v5977 = vpack.c.bf16 %v5953, %v5952
  %v5978 = vpack.c.bf16 %v5955, %v5954
  %v5979 = vpack.c.bf16 %v5957, %v5956
  %v5980 = vpack.c.bf16 %v5959, %v5958
  %v5981 = vpack.c.bf16 %v5961, %v5960
  %v5982 = vpack.c.bf16 %v5963, %v5962
  %v5983 = vpack.c.bf16 %v5965, %v5964
  %v5984 = vpack.c.bf16 %v5967, %v5966
  %v5985 = vpack.c.bf16 %v5969, %v5968
  %v5987 = vsel %vm184, %v5970, 0
  %v5990 = vsel %vm184, %v5971, 0
  %v5993 = vsel %vm184, %v5972, 0
  %v5996 = vsel %vm184, %v5973, 0
  %v5999 = vsel %vm184, %v5974, 0
  %v6002 = vsel %vm184, %v5975, 0
  %v6005 = vsel %vm184, %v5976, 0
  %v6008 = vsel %vm184, %v5977, 0
  %v6011 = vsel %vm184, %v5978, 0
  %v6014 = vsel %vm184, %v5979, 0
  %v6017 = vsel %vm184, %v5980, 0
  %v6020 = vsel %vm184, %v5981, 0
  %v6023 = vsel %vm184, %v5982, 0
  %v6026 = vsel %vm184, %v5983, 0
  %v6029 = vsel %vm184, %v5984, 0
  %v6032 = vsel %vm184, %v5985, 0
  %6034 = vmatprep.subr.bf16.mxu0 0
  %6035 = vmatpush1.bf16.msra.mxu0 0
  %6036 = vmatprep.subr.bf16.mxu0 0
  %6037 = vmatpush1.bf16.msra.mxu0 0
  %6038 = vmatprep.subr.bf16.mxu0 0
  %6039 = vmatpush1.bf16.msra.mxu0 0
  %6040 = vmatprep.subr.bf16.mxu0 0
  %6041 = vmatpush1.bf16.msra.mxu0 0
  %6042 = vmatprep.subr.bf16.mxu0 0
  %6043 = vmatpush1.bf16.msra.mxu0 0
  %6044 = vmatprep.subr.bf16.mxu0 0
  %6045 = vmatpush1.bf16.msra.mxu0 0
  %6046 = vmatprep.subr.bf16.mxu0 0
  %6047 = vmatpush1.bf16.msra.mxu0 %v1258
  %6048 = vmatprep.subr.bf16.mxu0 0
  %6049 = vmatpush1.bf16.msra.mxu0 %v1257
  %6050 = vmatprep.subr.bf16.mxu0 0
  %6051 = vmatpush2.bf16.msra.mxu0 0
  %6052 = vmatprep.subr.bf16.mxu0 0
  %6053 = vmatpush2.bf16.msra.mxu0 0
  %6054 = vmatprep.subr.bf16.mxu0 0
  %6055 = vmatpush2.bf16.msra.mxu0 0
  %6056 = vmatprep.subr.bf16.mxu0 0
  %6057 = vmatpush2.bf16.msra.mxu0 0
  %6058 = vmatprep.subr.bf16.mxu0 0
  %6059 = vmatpush2.bf16.msra.mxu0 0
  %6060 = vmatprep.subr.bf16.mxu0 0
  %6061 = vmatpush2.bf16.msra.mxu0 0
  %6062 = vmatprep.subr.bf16.mxu0 0
  %6063 = vmatpush2.bf16.msra.mxu0 0
  %6064 = vmatprep.subr.bf16.mxu0 0
  %6065 = vmatpush2.bf16.msra.mxu0 0
  %6066 = vmatprep.mubr.bf16.mxu0 0
  %6067 = vmatmul.mubr.bf16.gmra.mxu0 %v5987
  %v6068 = vpop.f32.mrf.mxu0
  %v6069 = vadd.f32 %v59, %v6068
  %v6070 = vpop.f32.mrf.mxu0
  %v6071 = vpop.f32.mrf.mxu0
  %v6072 = vadd.f32 %v59, %v6071
  %v6073 = vpop.f32.mrf.mxu0
  %6074 = vmatprep.mubr.bf16.mxu0 0
  %6075 = vmatmul.mubr.bf16.gmra.mxu0 %v5990
  %v6076 = vpop.f32.mrf.mxu0
  %v6077 = vadd.f32 %v59, %v6076
  %v6078 = vpop.f32.mrf.mxu0
  %v6079 = vpop.f32.mrf.mxu0
  %v6080 = vadd.f32 %v59, %v6079
  %v6081 = vpop.f32.mrf.mxu0
  %6082 = vmatprep.mubr.bf16.mxu0 0
  %6083 = vmatmul.mubr.bf16.gmra.mxu0 %v5993
  %v6084 = vpop.f32.mrf.mxu0
  %v6085 = vadd.f32 %v59, %v6084
  %v6086 = vpop.f32.mrf.mxu0
  %v6087 = vpop.f32.mrf.mxu0
  %v6088 = vadd.f32 %v59, %v6087
  %v6089 = vpop.f32.mrf.mxu0
  %6090 = vmatprep.mubr.bf16.mxu0 0
  %6091 = vmatmul.mubr.bf16.gmra.mxu0 %v5996
  %v6092 = vpop.f32.mrf.mxu0
  %v6093 = vadd.f32 %v59, %v6092
  %v6094 = vpop.f32.mrf.mxu0
  %v6095 = vpop.f32.mrf.mxu0
  %v6096 = vadd.f32 %v59, %v6095
  %v6097 = vpop.f32.mrf.mxu0
  %6098 = vmatprep.mubr.bf16.mxu0 0
  %6099 = vmatmul.mubr.bf16.gmra.mxu0 %v5999
  %v6100 = vpop.f32.mrf.mxu0
  %v6101 = vadd.f32 %v59, %v6100
  %v6102 = vpop.f32.mrf.mxu0
  %v6103 = vpop.f32.mrf.mxu0
  %v6104 = vadd.f32 %v59, %v6103
  %v6105 = vpop.f32.mrf.mxu0
  %6106 = vmatprep.mubr.bf16.mxu0 0
  %6107 = vmatmul.mubr.bf16.gmra.mxu0 %v6002
  %v6108 = vpop.f32.mrf.mxu0
  %v6109 = vadd.f32 %v59, %v6108
  %v6110 = vpop.f32.mrf.mxu0
  %v6111 = vpop.f32.mrf.mxu0
  %v6112 = vadd.f32 %v59, %v6111
  %v6113 = vpop.f32.mrf.mxu0
  %6114 = vmatprep.mubr.bf16.mxu0 0
  %6115 = vmatmul.mubr.bf16.gmra.mxu0 %v6005
  %v6116 = vpop.f32.mrf.mxu0
  %v6117 = vadd.f32 %v59, %v6116
  %v6118 = vpop.f32.mrf.mxu0
  %v6119 = vpop.f32.mrf.mxu0
  %v6120 = vadd.f32 %v59, %v6119
  %v6121 = vpop.f32.mrf.mxu0
  %6122 = vmatprep.mubr.bf16.mxu0 0
  %6123 = vmatmul.mubr.bf16.gmra.mxu0 %v6008
  %v6124 = vpop.f32.mrf.mxu0
  %v6125 = vadd.f32 %v59, %v6124
  %v6126 = vpop.f32.mrf.mxu0
  %v6127 = vpop.f32.mrf.mxu0
  %v6128 = vadd.f32 %v59, %v6127
  %v6129 = vpop.f32.mrf.mxu0
  %6130 = vmatprep.mubr.bf16.mxu0 0
  %6131 = vmatmul.mubr.bf16.gmra.mxu0 %v6011
  %v6132 = vpop.f32.mrf.mxu0
  %v6133 = vadd.f32 %v59, %v6132
  %v6134 = vpop.f32.mrf.mxu0
  %v6135 = vpop.f32.mrf.mxu0
  %v6136 = vadd.f32 %v59, %v6135
  %v6137 = vpop.f32.mrf.mxu0
  %6138 = vmatprep.mubr.bf16.mxu0 0
  %6139 = vmatmul.mubr.bf16.gmra.mxu0 %v6014
  %v6140 = vpop.f32.mrf.mxu0
  %v6141 = vadd.f32 %v59, %v6140
  %v6142 = vpop.f32.mrf.mxu0
  %v6143 = vpop.f32.mrf.mxu0
  %v6144 = vadd.f32 %v59, %v6143
  %v6145 = vpop.f32.mrf.mxu0
  %6146 = vmatprep.mubr.bf16.mxu0 0
  %6147 = vmatmul.mubr.bf16.gmra.mxu0 %v6017
  %v6148 = vpop.f32.mrf.mxu0
  %v6149 = vadd.f32 %v59, %v6148
  %v6150 = vpop.f32.mrf.mxu0
  %v6151 = vpop.f32.mrf.mxu0
  %v6152 = vadd.f32 %v59, %v6151
  %v6153 = vpop.f32.mrf.mxu0
  %6154 = vmatprep.mubr.bf16.mxu0 0
  %6155 = vmatmul.mubr.bf16.gmra.mxu0 %v6020
  %v6156 = vpop.f32.mrf.mxu0
  %v6157 = vadd.f32 %v59, %v6156
  %v6158 = vpop.f32.mrf.mxu0
  %v6159 = vpop.f32.mrf.mxu0
  %v6160 = vadd.f32 %v59, %v6159
  %v6161 = vpop.f32.mrf.mxu0
  %6162 = vmatprep.mubr.bf16.mxu0 0
  %6163 = vmatmul.mubr.bf16.gmra.mxu0 %v6023
  %v6164 = vpop.f32.mrf.mxu0
  %v6165 = vadd.f32 %v59, %v6164
  %v6166 = vpop.f32.mrf.mxu0
  %v6167 = vpop.f32.mrf.mxu0
  %v6168 = vadd.f32 %v59, %v6167
  %v6169 = vpop.f32.mrf.mxu0
  %6170 = vmatprep.mubr.bf16.mxu0 0
  %6171 = vmatmul.mubr.bf16.gmra.mxu0 %v6026
  %v6172 = vpop.f32.mrf.mxu0
  %v6173 = vadd.f32 %v59, %v6172
  %v6174 = vpop.f32.mrf.mxu0
  %v6175 = vpop.f32.mrf.mxu0
  %v6176 = vadd.f32 %v59, %v6175
  %v6177 = vpop.f32.mrf.mxu0
  %6178 = vmatprep.mubr.bf16.mxu0 0
  %6179 = vmatmul.mubr.bf16.gmra.mxu0 %v6029
  %v6180 = vpop.f32.mrf.mxu0
  %v6181 = vadd.f32 %v59, %v6180
  %v6182 = vpop.f32.mrf.mxu0
  %v6183 = vpop.f32.mrf.mxu0
  %v6184 = vadd.f32 %v59, %v6183
  %v6185 = vpop.f32.mrf.mxu0
  %6186 = vmatprep.mubr.bf16.mxu0 0
  %6187 = vmatmul.mubr.bf16.gmra.mxu0 %v6032
  %v6188 = vpop.f32.mrf.mxu0
  %v6189 = vadd.f32 %v59, %v6188
  %v6190 = vpop.f32.mrf.mxu0
  %v6191 = vpop.f32.mrf.mxu0
  %v6192 = vadd.f32 %v59, %v6191
  %v6193 = vpop.f32.mrf.mxu0
  %6194 = vdwg.mxu0
  %v6195 = vxor.u32 %v6069, 2147483648
  %v6196 = vxor.u32 %v6072, 2147483648
  %v6197 = vxor.u32 %v6077, 2147483648
  %v6198 = vxor.u32 %v6080, 2147483648
  %v6199 = vxor.u32 %v6085, 2147483648
  %v6200 = vxor.u32 %v6088, 2147483648
  %v6201 = vxor.u32 %v6093, 2147483648
  %v6202 = vxor.u32 %v6096, 2147483648
  %v6203 = vxor.u32 %v6101, 2147483648
  %v6204 = vxor.u32 %v6104, 2147483648
  %v6205 = vxor.u32 %v6109, 2147483648
  %v6206 = vxor.u32 %v6112, 2147483648
  %v6207 = vxor.u32 %v6117, 2147483648
  %v6208 = vxor.u32 %v6120, 2147483648
  %v6209 = vxor.u32 %v6125, 2147483648
  %v6210 = vxor.u32 %v6128, 2147483648
  %v6211 = vxor.u32 %v6133, 2147483648
  %v6212 = vxor.u32 %v6136, 2147483648
  %v6213 = vxor.u32 %v6141, 2147483648
  %v6214 = vxor.u32 %v6144, 2147483648
  %v6215 = vxor.u32 %v6149, 2147483648
  %v6216 = vxor.u32 %v6152, 2147483648
  %v6217 = vxor.u32 %v6157, 2147483648
  %v6218 = vxor.u32 %v6160, 2147483648
  %v6219 = vxor.u32 %v6165, 2147483648
  %v6220 = vxor.u32 %v6168, 2147483648
  %v6221 = vxor.u32 %v6173, 2147483648
  %v6222 = vxor.u32 %v6176, 2147483648
  %v6223 = vxor.u32 %v6181, 2147483648
  %v6224 = vxor.u32 %v6184, 2147483648
  %v6225 = vxor.u32 %v6189, 2147483648
  %v6226 = vxor.u32 %v6192, 2147483648
  %v6227 = vmul.f32 %v6195, 1.442695
  %v6228 = vpow.pop %v6227
  %v6229 = vmul.f32 %v6196, 1.442695
  %v6230 = vpow.pop %v6229
  %v6231 = vmul.f32 %v6197, 1.442695
  %v6232 = vpow.pop %v6231
  %v6233 = vmul.f32 %v6198, 1.442695
  %v6234 = vpow.pop %v6233
  %v6235 = vmul.f32 %v6199, 1.442695
  %v6236 = vpow.pop %v6235
  %v6237 = vmul.f32 %v6200, 1.442695
  %v6238 = vpow.pop %v6237
  %v6239 = vmul.f32 %v6201, 1.442695
  %v6240 = vpow.pop %v6239
  %v6241 = vmul.f32 %v6202, 1.442695
  %v6242 = vpow.pop %v6241
  %v6243 = vmul.f32 %v6203, 1.442695
  %v6244 = vpow.pop %v6243
  %v6245 = vmul.f32 %v6204, 1.442695
  %v6246 = vpow.pop %v6245
  %v6247 = vmul.f32 %v6205, 1.442695
  %v6248 = vpow.pop %v6247
  %v6249 = vmul.f32 %v6206, 1.442695
  %v6250 = vpow.pop %v6249
  %v6251 = vmul.f32 %v6207, 1.442695
  %v6252 = vpow.pop %v6251
  %v6253 = vmul.f32 %v6208, 1.442695
  %v6254 = vpow.pop %v6253
  %v6255 = vmul.f32 %v6209, 1.442695
  %v6256 = vpow.pop %v6255
  %v6257 = vmul.f32 %v6210, 1.442695
  %v6258 = vpow.pop %v6257
  %v6259 = vmul.f32 %v6211, 1.442695
  %v6260 = vpow.pop %v6259
  %v6261 = vmul.f32 %v6212, 1.442695
  %v6262 = vpow.pop %v6261
  %v6263 = vmul.f32 %v6213, 1.442695
  %v6264 = vpow.pop %v6263
  %v6265 = vmul.f32 %v6214, 1.442695
  %v6266 = vpow.pop %v6265
  %v6267 = vmul.f32 %v6215, 1.442695
  %v6268 = vpow.pop %v6267
  %v6269 = vmul.f32 %v6216, 1.442695
  %v6270 = vpow.pop %v6269
  %v6271 = vmul.f32 %v6217, 1.442695
  %v6272 = vpow.pop %v6271
  %v6273 = vmul.f32 %v6218, 1.442695
  %v6274 = vpow.pop %v6273
  %v6275 = vmul.f32 %v6219, 1.442695
  %v6276 = vpow.pop %v6275
  %v6277 = vmul.f32 %v6220, 1.442695
  %v6278 = vpow.pop %v6277
  %v6279 = vmul.f32 %v6221, 1.442695
  %v6280 = vpow.pop %v6279
  %v6281 = vmul.f32 %v6222, 1.442695
  %v6282 = vpow.pop %v6281
  %v6283 = vmul.f32 %v6223, 1.442695
  %v6284 = vpow.pop %v6283
  %v6285 = vmul.f32 %v6224, 1.442695
  %v6286 = vpow.pop %v6285
  %v6287 = vmul.f32 %v6225, 1.442695
  %v6288 = vpow.pop %v6287
  %v6289 = vmul.f32 %v6226, 1.442695
  %v6290 = vpow.pop %v6289
  %v6291 = vadd.f32 %v6228, 1.0
  %v6292 = vadd.f32 %v6230, 1.0
  %v6293 = vadd.f32 %v6232, 1.0
  %v6294 = vadd.f32 %v6234, 1.0
  %v6295 = vadd.f32 %v6236, 1.0
  %v6296 = vadd.f32 %v6238, 1.0
  %v6297 = vadd.f32 %v6240, 1.0
  %v6298 = vadd.f32 %v6242, 1.0
  %v6299 = vadd.f32 %v6244, 1.0
  %v6300 = vadd.f32 %v6246, 1.0
  %v6301 = vadd.f32 %v6248, 1.0
  %v6302 = vadd.f32 %v6250, 1.0
  %v6303 = vadd.f32 %v6252, 1.0
  %v6304 = vadd.f32 %v6254, 1.0
  %v6305 = vadd.f32 %v6256, 1.0
  %v6306 = vadd.f32 %v6258, 1.0
  %v6307 = vadd.f32 %v6260, 1.0
  %v6308 = vadd.f32 %v6262, 1.0
  %v6309 = vadd.f32 %v6264, 1.0
  %v6310 = vadd.f32 %v6266, 1.0
  %v6311 = vadd.f32 %v6268, 1.0
  %v6312 = vadd.f32 %v6270, 1.0
  %v6313 = vadd.f32 %v6272, 1.0
  %v6314 = vadd.f32 %v6274, 1.0
  %v6315 = vadd.f32 %v6276, 1.0
  %v6316 = vadd.f32 %v6278, 1.0
  %v6317 = vadd.f32 %v6280, 1.0
  %v6318 = vadd.f32 %v6282, 1.0
  %v6319 = vadd.f32 %v6284, 1.0
  %v6320 = vadd.f32 %v6286, 1.0
  %v6321 = vadd.f32 %v6288, 1.0
  %v6322 = vadd.f32 %v6290, 1.0
  %v6323 = vrcp.pop %v6291
  %v6324 = vmul.f32 1.0, %v6323
  %v6325 = vrcp.pop %v6292
  %v6326 = vmul.f32 1.0, %v6325
  %v6327 = vrcp.pop %v6293
  %v6328 = vmul.f32 1.0, %v6327
  %v6329 = vrcp.pop %v6294
  %v6330 = vmul.f32 1.0, %v6329
  %v6331 = vrcp.pop %v6295
  %v6332 = vmul.f32 1.0, %v6331
  %v6333 = vrcp.pop %v6296
  %v6334 = vmul.f32 1.0, %v6333
  %v6335 = vrcp.pop %v6297
  %v6336 = vmul.f32 1.0, %v6335
  %v6337 = vrcp.pop %v6298
  %v6338 = vmul.f32 1.0, %v6337
  %v6339 = vrcp.pop %v6299
  %v6340 = vmul.f32 1.0, %v6339
  %v6341 = vrcp.pop %v6300
  %v6342 = vmul.f32 1.0, %v6341
  %v6343 = vrcp.pop %v6301
  %v6344 = vmul.f32 1.0, %v6343
  %v6345 = vrcp.pop %v6302
  %v6346 = vmul.f32 1.0, %v6345
  %v6347 = vrcp.pop %v6303
  %v6348 = vmul.f32 1.0, %v6347
  %v6349 = vrcp.pop %v6304
  %v6350 = vmul.f32 1.0, %v6349
  %v6351 = vrcp.pop %v6305
  %v6352 = vmul.f32 1.0, %v6351
  %v6353 = vrcp.pop %v6306
  %v6354 = vmul.f32 1.0, %v6353
  %v6355 = vrcp.pop %v6307
  %v6356 = vmul.f32 1.0, %v6355
  %v6357 = vrcp.pop %v6308
  %v6358 = vmul.f32 1.0, %v6357
  %v6359 = vrcp.pop %v6309
  %v6360 = vmul.f32 1.0, %v6359
  %v6361 = vrcp.pop %v6310
  %v6362 = vmul.f32 1.0, %v6361
  %v6363 = vrcp.pop %v6311
  %v6364 = vmul.f32 1.0, %v6363
  %v6365 = vrcp.pop %v6312
  %v6366 = vmul.f32 1.0, %v6365
  %v6367 = vrcp.pop %v6313
  %v6368 = vmul.f32 1.0, %v6367
  %v6369 = vrcp.pop %v6314
  %v6370 = vmul.f32 1.0, %v6369
  %v6371 = vrcp.pop %v6315
  %v6372 = vmul.f32 1.0, %v6371
  %v6373 = vrcp.pop %v6316
  %v6374 = vmul.f32 1.0, %v6373
  %v6375 = vrcp.pop %v6317
  %v6376 = vmul.f32 1.0, %v6375
  %v6377 = vrcp.pop %v6318
  %v6378 = vmul.f32 1.0, %v6377
  %v6379 = vrcp.pop %v6319
  %v6380 = vmul.f32 1.0, %v6379
  %v6381 = vrcp.pop %v6320
  %v6382 = vmul.f32 1.0, %v6381
  %v6383 = vrcp.pop %v6321
  %v6384 = vmul.f32 1.0, %v6383
  %v6385 = vrcp.pop %v6322
  %v6386 = vmul.f32 1.0, %v6385
  %s6387 = scalar_lea.vmem %s3, 768
  %6388 = vst.msk [vmem:[%s6387] sm:$0xff] %vm1662, %v6324
  %6389 = vst.msk [vmem:[%s6387 + $0x8] sm:$0xff] %vm1662, %v6326
  %6390 = vst.msk [vmem:[%s6387 + $0x10] sm:$0xff] %vm1662, %v6328
  %6391 = vst.msk [vmem:[%s6387 + $0x18] sm:$0xff] %vm1662, %v6330
  %6392 = vst.msk [vmem:[%s6387 + $0x20] sm:$0xff] %vm1662, %v6332
  %6393 = vst.msk [vmem:[%s6387 + $0x28] sm:$0xff] %vm1662, %v6334
  %6394 = vst.msk [vmem:[%s6387 + $0x30] sm:$0xff] %vm1662, %v6336
  %6395 = vst.msk [vmem:[%s6387 + $0x38] sm:$0xff] %vm1662, %v6338
  %6396 = vst.msk [vmem:[%s6387 + $0x40] sm:$0xff] %vm1662, %v6340
  %6397 = vst.msk [vmem:[%s6387 + $0x48] sm:$0xff] %vm1662, %v6342
  %6398 = vst.msk [vmem:[%s6387 + $0x50] sm:$0xff] %vm1662, %v6344
  %6399 = vst.msk [vmem:[%s6387 + $0x58] sm:$0xff] %vm1662, %v6346
  %6400 = vst.msk [vmem:[%s6387 + $0x60] sm:$0xff] %vm1662, %v6348
  %6401 = vst.msk [vmem:[%s6387 + $0x68] sm:$0xff] %vm1662, %v6350
  %6402 = vst.msk [vmem:[%s6387 + $0x70] sm:$0xff] %vm1662, %v6352
  %6403 = vst.msk [vmem:[%s6387 + $0x78] sm:$0xff] %vm1662, %v6354
  %6404 = vst.msk [vmem:[%s6387 + $0x80] sm:$0xff] %vm1662, %v6356
  %6405 = vst.msk [vmem:[%s6387 + $0x88] sm:$0xff] %vm1662, %v6358
  %6406 = vst.msk [vmem:[%s6387 + $0x90] sm:$0xff] %vm1662, %v6360
  %6407 = vst.msk [vmem:[%s6387 + $0x98] sm:$0xff] %vm1662, %v6362
  %6408 = vst.msk [vmem:[%s6387 + $0xa0] sm:$0xff] %vm1662, %v6364
  %6409 = vst.msk [vmem:[%s6387 + $0xa8] sm:$0xff] %vm1662, %v6366
  %6410 = vst.msk [vmem:[%s6387 + $0xb0] sm:$0xff] %vm1662, %v6368
  %6411 = vst.msk [vmem:[%s6387 + $0xb8] sm:$0xff] %vm1662, %v6370
  %6412 = vst.msk [vmem:[%s6387 + $0xc0] sm:$0xff] %vm1662, %v6372
  %6413 = vst.msk [vmem:[%s6387 + $0xc8] sm:$0xff] %vm1662, %v6374
  %6414 = vst.msk [vmem:[%s6387 + $0xd0] sm:$0xff] %vm1662, %v6376
  %6415 = vst.msk [vmem:[%s6387 + $0xd8] sm:$0xff] %vm1662, %v6378
  %6416 = vst.msk [vmem:[%s6387 + $0xe0] sm:$0xff] %vm1662, %v6380
  %6417 = vst.msk [vmem:[%s6387 + $0xe8] sm:$0xff] %vm1662, %v6382
  %6418 = vst.msk [vmem:[%s6387 + $0xf0] sm:$0xff] %vm1662, %v6384
  %6419 = vst.msk [vmem:[%s6387 + $0xf8] sm:$0xff] %vm1662, %v6386
  // Predicated region
  $region14: #{tpu_custom_call.1} parent=0 // pred_check
    _
  $region15: #{tpu_custom_call.1} parent=0 // pred_check_branch
    %6421 = sbr.rel (0) target = $region17
  $region16: #{tpu_custom_call.1} parent=0 // pred_region
    _
  $region17: #{tpu_custom_call.1} parent=0 // pred_fallthru
    _
  // Predicated region
  $region18: #{tpu_custom_call.1} parent=0 // pred_check
    _
  $region19: #{tpu_custom_call.1} parent=0 // pred_check_branch
    %6423 = sbr.rel (0) target = $region21
  $region20: #{tpu_custom_call.1} parent=0 // pred_region
    _
  $region21: #{tpu_custom_call.1} parent=0 // pred_fallthru
    _

</llo_original>
